<compile_context>
chip_gen: v7x
topology: tpu7x:2x2x1
jax: 0.10.0
libtpu: 0.0.40
codegen_flags: <defaults>
</compile_context>

<pallas_src>
import numpy as np
import jax
import jax.numpy as jnp
from jax.experimental import pallas as pl
from jax.experimental.pallas import tpu as pltpu

QUBITS = 4
DIM8 = 2 ** (2 * QUBITS)   # 256
DIM4 = 2 ** QUBITS         # 16
NOUT = 2 * QUBITS          # 8
OUT_LANES = 128            # lane-dense output block


# ----------------------------------------------------------------------------
# Host-side construction of the fixed circuit unitaries (plain numpy "glue").
# ----------------------------------------------------------------------------
def _rz(t):
    return np.array([[np.exp(-1j * t / 2), 0.0], [0.0, np.exp(1j * t / 2)]], dtype=np.complex128)


def _rx(t):
    c, s = np.cos(t / 2), np.sin(t / 2)
    return np.array([[c, -1j * s], [-1j * s, c]], dtype=np.complex128)


def _crx(t):
    u = np.eye(4, dtype=np.complex128)
    u[2:, 2:] = _rx(t)
    return u


def _cnot():
    u = np.eye(4, dtype=np.complex128)
    u[2:, 2:] = np.array([[0, 1], [1, 0]], dtype=np.complex128)
    return u


def _embed(gate, wires, n):
    """Embed a 2^k x 2^k gate acting on `wires` into the full 2^n x 2^n unitary.
    Wire 0 is the most-significant bit (PennyLane convention)."""
    dim, k = 2 ** n, len(wires)
    U = np.zeros((dim, dim), dtype=np.complex128)
    for col in range(dim):
        bits = [(col >> (n - 1 - w)) & 1 for w in range(n)]
        in_sub = 0
        for w in wires:
            in_sub = (in_sub << 1) | bits[w]
        for out_sub in range(2 ** k):
            amp = gate[out_sub, in_sub]
            if amp == 0:
                continue
            nb = list(bits)
            for wi, w in enumerate(wires):
                nb[w] = (out_sub >> (k - 1 - wi)) & 1
            row = 0
            for bbit in nb:
                row = (row << 1) | bbit
            U[row, col] += amp
    return U


def _circuit_unitary(gate_list, n):
    U = np.eye(2 ** n, dtype=np.complex128)
    for g, w in gate_list:
        U = _embed(g, w, n) @ U
    return U


def _initqkv_gates(rot, crxp, offset):
    gl = []
    for i in range(QUBITS):
        w = offset + i
        gl += [(_rz(rot[3 * i]), [w]), (_rx(rot[3 * i + 1]), [w]), (_rz(rot[3 * i + 2]), [w])]
    for i in range(QUBITS):
        gl.append((_crx(crxp[i]), [offset + i, offset + (i + 1) % QUBITS]))
    for _ in range(2):
        for i in range(QUBITS):
            gl.append((_cnot(), [offset + i, offset + (i + 1) % QUBITS]))
    return gl


def _bit_table(n):
    dim = 2 ** n
    return np.array([[(b >> (n - 1 - w)) & 1 for b in range(dim)] for w in range(n)],
                    dtype=np.float64)


def _phase_vec(n):
    dim = 2 ** n
    pc = np.array([bin(b).count("1") for b in range(dim)])
    return (-1j) ** pc                       # (-i)^popcount  (AngleEmbedding phase)


def _flip_perm(n, w):
    dim = 2 ** n
    mask = 1 << (n - 1 - w)
    P = np.zeros((dim, dim), dtype=np.float64)
    idx = np.arange(dim)
    P[idx, idx ^ mask] = 1.0
    return P


def build_constants(W_pre, b_pre, U_score, V1, V2, score_gates,
                    score_dtype=jnp.bfloat16):
    """Fold all fixed circuit structure into dense matrices for the kernel.

    score_dtype: dtype of the two fat score-circuit matrices (BigT real/imag).
    bf16 is the MXU-native fast path (v6e/v7x); jnp.float32 gives the 2e-3-exact
    path.  All other constants stay f32 (elementwise math is f32 everywhere).
    """
    bits8 = _bit_table(2 * QUBITS)                       # [8, 256]
    bits4 = _bit_table(QUBITS)                           # [4, 16]
    bits8q = bits8[:QUBITS]                              # [4, 256]  q-wire bits only
    zsel = (1.0 - 2.0 * bits8[:QUBITS]).T                # [256, 4]  PauliZ eigenvalues

    # Score circuit: psi = U_score * diag(phase8) * mag8.
    A8 = U_score * _phase_vec(2 * QUBITS)[None, :]       # fold embedding phase
    P8 = [_flip_perm(2 * QUBITS, w) for w in range(QUBITS)]
    BigT = np.concatenate([A8.T] + [(P @ A8).T for P in P8], axis=1)   # [256, 1280]

    # Value circuit: phi = V1 * diag(phase4) * mag4; packed state [vr | vi].
    A4 = V1 * _phase_vec(QUBITS)[None, :]
    V1c = np.concatenate([np.ascontiguousarray(A4.T.real),
                          np.ascontiguousarray(A4.T.imag)], axis=1)    # [16, 32]

    # Fused RX flip matrices: st' = cos*st + sin*(st @ M_w), st = [vr | vi],
    # M_w = [[0, -P_w], [P_w, 0]]  (one matmul per RX step instead of two).
    rxm = np.zeros((QUBITS, 2 * DIM4, 2 * DIM4), dtype=np.float64)
    for w in range(QUBITS):
        P = _flip_perm(QUBITS, w)
        rxm[w, :DIM4, DIM4:] = -P
        rxm[w, DIM4:, :DIM4] = P

    # Folded V2 + PauliZ/PauliX measurements as quadratic forms M_j = V2^T O_j V2
    # (real since V2 and O_j are real).  expval_j = vr M_j vr^T + vi M_j vi^T.
    Ms = []
    for w in range(QUBITS):
        Ms.append(np.real(V2.conj().T @ np.diag(1.0 - 2.0 * bits4[w]) @ V2))
    for w in range(QUBITS):
        Ms.append(np.real(V2.conj().T @ _flip_perm(QUBITS, w) @ V2))
    bigm2 = np.zeros((2 * DIM4, NOUT * 2 * DIM4), dtype=np.float64)    # [32, 256]
    outsel2 = np.zeros((NOUT * 2 * DIM4, OUT_LANES), dtype=np.float64)  # [256, 128]
    for j, M in enumerate(Ms):
        bigm2[:DIM4, j * 32:j * 32 + DIM4] = M
        bigm2[DIM4:, j * 32 + DIM4:j * 32 + 2 * DIM4] = M
        outsel2[j * 32:(j + 1) * 32, j] = 1.0

    consts = [W_pre, b_pre.reshape(1, QUBITS),
              bits8q, BigT.real, BigT.imag, zsel,
              bits4, V1c, rxm,
              score_gates.reshape(1, QUBITS), bigm2, outsel2]
    out = []
    for idx, c in enumerate(consts):
        dt = score_dtype if idx in (3, 4) else jnp.float32
        out.append(jnp.asarray(np.ascontiguousarray(c), dtype=dt))
    return tuple(out)


# ----------------------------------------------------------------------------
# Pallas kernel (one batch tile per grid step).
# ----------------------------------------------------------------------------
def _qattn_kernel(x1_ref, x2_ref, w_ref, b_ref,
                  bits8q_ref, bigtr_ref, bigti_ref, zsel_ref,
                  bits4_ref, v1c_ref, rxm_ref,
                  gates_ref, bigm2_ref, outsel2_ref, out_ref):
    f32 = jnp.float32
    TB = x1_ref.shape[0]

    # pre_net (Linear in_embed -> 4), fused for x1/x2.
    x12 = jnp.concatenate([x1_ref[...], x2_ref[...]], axis=0)          # [2TB, F]
    qk = jnp.dot(x12, w_ref[...], preferred_element_type=f32) + b_ref[...]
    q = qk[:TB]                                                        # angles wires 0..3
    k = qk[TB:]                                                        # angles wires 4..7 / value

    # Hoisted trig for the AngleEmbedding factors.
    cq = jnp.cos(q * 0.5); dq = jnp.sin(q * 0.5) - cq
    ck = jnp.cos(k * 0.5); dk = jnp.sin(k * 0.5) - ck

    # k-wire magnitudes over 16 basis states (shared by score + value circuits).
    mag4 = ck[:, 0:1] + dk[:, 0:1] * bits4_ref[0:1, :]
    for w in range(1, QUBITS):
        mag4 = mag4 * (ck[:, w:w + 1] + dk[:, w:w + 1] * bits4_ref[w:w + 1, :])

    # q-wire magnitudes over 256; k part is a 16x lane tile of mag4 (dedup).
    mag8 = cq[:, 0:1] + dq[:, 0:1] * bits8q_ref[0:1, :]
    for w in range(1, QUBITS):
        mag8 = mag8 * (cq[:, w:w + 1] + dq[:, w:w + 1] * bits8q_ref[w:w + 1, :])
    mag8 = mag8 * jnp.concatenate([mag4] * (DIM8 // DIM4), axis=1)     # [TB, 256]

    # ---------------- score circuit (8 qubits, dim 256) ----------------
    # [psi | P0 psi | ... | P3 psi] in one wide matmul per complex plane.
    # Operands cast to the constant dtype (bf16 fast path), f32 accumulation.
    mm = mag8.astype(bigtr_ref.dtype)
    fr = jnp.dot(mm, bigtr_ref[...], preferred_element_type=f32)       # [TB, 1280]
    fi = jnp.dot(mm, bigti_ref[...], preferred_element_type=f32)
    pr = fr[:, :DIM8]
    pi_ = fi[:, :DIM8]
    prob = pr * pr + pi_ * pi_
    z = jnp.dot(prob, zsel_ref[...], preferred_element_type=f32)       # [TB, 4]  PauliZ
    xs = []
    for w in range(QUBITS):                                            # PauliX, blockwise
        s0 = DIM8 * (w + 1)
        ew = pr * fr[:, s0:s0 + DIM8] + pi_ * fi[:, s0:s0 + DIM8]      # Re(conj(psi) P_w psi)
        xs.append(jnp.sum(ew, axis=-1, keepdims=True))
    xv = jnp.concatenate(xs, axis=-1)                                  # [TB, 4]
    smag = jnp.sqrt(z * z + xv * xv)                                   # [TB, 4]

    # ---------------- value circuit (4 qubits, dim 16, packed [vr | vi]) ----
    st = jnp.dot(mag4, v1c_ref[...], preferred_element_type=f32)       # [TB, 32]

    # Score-conditioned RX layer (data dependent, sequential, fused flips).
    alpha = jnp.tanh(smag) * gates_ref[...]                            # [TB, 4]
    ca = jnp.cos(alpha * 0.5)
    sa = jnp.sin(alpha * 0.5)
    for w in range(QUBITS):
        fl = jnp.dot(st, rxm_ref[w], preferred_element_type=f32)       # [fli | -flr]
        st = ca[:, w:w + 1] * st + sa[:, w:w + 1] * fl

    # Folded V2 + PauliZ/PauliX expvals (quadratic forms) -> lane-dense [TB,128].
    g = jnp.dot(st, bigm2_ref[...], preferred_element_type=f32)        # [TB, 256]
    e = jnp.concatenate([st] * NOUT, axis=1) * g                       # [TB, 256]
    out_ref[...] = jnp.dot(e, outsel2_ref[...], preferred_element_type=f32)


def _round_up(x, m):
    return ((x + m - 1) // m) * m


def quantum_attention_pallas(x1, x2, consts, *, tb=512):
    """Batch-tiled Pallas forward.  Returns [B, 8] = [Z0..Z3, X0..X3].

    tb: max batch tile (multiple of 8).  The effective tile is also capped at
    ceil(B/2) (rounded up to 8) so the batch grid has >=2 steps whenever B
    allows it -> the "parallel" axis can shard across both v7x TensorCores,
    while TB<=512 keeps temporaries well inside v7x's 64 MiB VMEM.
    """
    B, F = x1.shape
    tb = max(8, (int(tb) // 8) * 8)
    target = 8 if B <= 8 else _round_up((B + 1) // 2, 8)
    TB = max(8, min(tb, target))
    Bp = _round_up(B, TB)
    if Bp != B:
        x1 = jnp.pad(x1, ((0, Bp - B), (0, 0)))
        x2 = jnp.pad(x2, ((0, Bp - B), (0, 0)))

    args = [x1, x2] + list(consts)
    in_specs = [pl.BlockSpec((TB, F), lambda i: (i, 0)),
                pl.BlockSpec((TB, F), lambda i: (i, 0))]
    # Constant index_map -> each constant is DMA'd once, not per grid step.
    in_specs += [pl.BlockSpec(c.shape, lambda i, nd=c.ndim: (0,) * nd) for c in consts]

    out = pl.pallas_call(
        _qattn_kernel,
        grid=(Bp // TB,),
        in_specs=in_specs,
        out_specs=pl.BlockSpec((TB, OUT_LANES), lambda i: (i, 0)),
        out_shape=jax.ShapeDtypeStruct((Bp, OUT_LANES), jnp.float32),
        compiler_params=pltpu.CompilerParams(
            dimension_semantics=("parallel",),
            vmem_limit_bytes=48 * 1024 * 1024),
    )(*args)
    return out[:B, :NOUT]


# ----------------------------------------------------------------------------
# Pure-numpy reference (same math, float64) for a correctness check.
# ----------------------------------------------------------------------------
def reference_forward(x1, x2, W, bvec, U_score, V1, V2, gates):
    q = x1 @ W + bvec
    k = x2 @ W + bvec
    outs = []
    for i in range(x1.shape[0]):
        psi = np.array([1.0 + 0j])
        for a in np.concatenate([q[i], k[i]]):
            psi = np.kron(psi, np.array([np.cos(a / 2), -1j * np.sin(a / 2)]))
        psi = U_score @ psi
        prob = np.abs(psi) ** 2
        idx8 = np.arange(DIM8)
        smag = []
        for w in range(QUBITS):
            mask = 1 << (2 * QUBITS - 1 - w)
            z = np.sum(prob * (1.0 - 2.0 * ((idx8 >> (2 * QUBITS - 1 - w)) & 1)))
            xval = np.real(np.sum(np.conj(psi) * psi[idx8 ^ mask]))
            smag.append(np.sqrt(z * z + xval * xval))
        phi = np.array([1.0 + 0j])
        for a in k[i]:
            phi = np.kron(phi, np.array([np.cos(a / 2), -1j * np.sin(a / 2)]))
        phi = V1 @ phi
        idx4 = np.arange(DIM4)
        for w in range(QUBITS):
            alpha = np.tanh(smag[w]) * gates[w]
            mask = 1 << (QUBITS - 1 - w)
            phi = np.cos(alpha / 2) * phi - 1j * np.sin(alpha / 2) * phi[idx4 ^ mask]
        phi = V2 @ phi
        p4 = np.abs(phi) ** 2
        vals = []
        for w in range(QUBITS):
            vals.append(np.sum(p4 * (1.0 - 2.0 * ((idx4 >> (QUBITS - 1 - w)) & 1))))
        for w in range(QUBITS):
            mask = 1 << (QUBITS - 1 - w)
            vals.append(np.real(np.sum(np.conj(phi) * phi[idx4 ^ mask])))
        outs.append(vals)
    return np.array(outs, dtype=np.float32)


# ----------------------------------------------------------------------------
if __name__ == "__main__":
    B, IN_EMBED = 2, 32

    # Deterministic parameter initialization (shapes from the module __init__).
    rng = np.random.RandomState(0)
    lim = 1.0 / np.sqrt(IN_EMBED)
    W_pre = rng.uniform(-lim, lim, size=(IN_EMBED, QUBITS)).astype(np.float64)   # pre_net.weight.T
    b_pre = rng.uniform(-lim, lim, size=(QUBITS,)).astype(np.float64)
    wq_rot = rng.uniform(-np.pi / 2, np.pi / 2, QUBITS * 6)
    wk_rot = rng.uniform(-np.pi / 2, np.pi / 2, QUBITS * 6)
    wv_rot = rng.uniform(-np.pi / 2, np.pi / 2, QUBITS * 6)
    wc_rot = rng.uniform(-np.pi / 2, np.pi / 2, QUBITS * 3)
    wq_crx = rng.randn(QUBITS * 2) * 0.1
    wk_crx = rng.randn(QUBITS * 2) * 0.1
    wv_crx = rng.randn(QUBITS * 2) * 0.1
    wc_crx = rng.randn(QUBITS * 2) * 0.1
    score_gates = np.pi * np.ones(QUBITS)
    # TODO(synk): self.norm / self.mlp / self.dropout / self.linear are defined in __init__
    # but never used in forward(); intentionally not implemented.

    # Fixed circuit unitaries.
    gl = _initqkv_gates(wq_rot, wq_crx, 0) + _initqkv_gates(wk_rot, wk_crx, QUBITS)
    for i in range(QUBITS):
        gl += [(_crx(wc_crx[i]), [i, i + QUBITS]), (_crx(wc_crx[i + QUBITS]), [i + QUBITS, i])]
    for i in range(QUBITS):
        gl += [(_cnot(), [i, i + QUBITS]), (_cnot(), [i + QUBITS, i])]
    for i in range(QUBITS):
        gl += [(_rz(wc_rot[3 * i]), [i]), (_rx(wc_rot[3 * i + 1]), [i]), (_rz(wc_rot[3 * i + 2]), [i])]
    U_score = _circuit_unitary(gl, 2 * QUBITS)
    V1 = _circuit_unitary(_initqkv_gates(wv_rot, wv_crx, 0), QUBITS)
    V2 = _circuit_unitary([(_cnot(), [i, (i + 1) % QUBITS]) for i in range(QUBITS)], QUBITS)

    consts_f32 = build_constants(W_pre, b_pre, U_score, V1, V2, score_gates,
                                 score_dtype=jnp.float32)    # exactness path
    consts_bf16 = build_constants(W_pre, b_pre, U_score, V1, V2, score_gates,
                                  score_dtype=jnp.bfloat16)  # MXU-native perf path

    # Deterministic inputs (small shapes).
    key = jax.random.PRNGKey(0)
    k1, k2, k3, k4 = jax.random.split(key, 4)
    x1 = jax.random.normal(k1, (B, IN_EMBED), dtype=jnp.float32)
    x2 = jax.random.normal(k2, (B, IN_EMBED), dtype=jnp.float32)
    ref = reference_forward(np.asarray(x1, np.float64), np.asarray(x2, np.float64),
                            W_pre, b_pre, U_score, V1, V2, score_gates)

    # 1) f32 score-matmul path: exact to 2e-3 vs the float64 reference.
    out = jax.block_until_ready(quantum_attention_pallas(x1, x2, consts_f32))
    np.testing.assert_allclose(np.asarray(out), ref, rtol=2e-3, atol=2e-3)

    # 2) bf16 score-matmul path (default perf path), multi-step batch-tiled grid
    #    with padding.  bf16 operands on the dominant matmuls add ~1e-3 absolute
    #    error in the score expvals, hence the looser atol (review note).
    B2 = 20
    x1b = jax.random.normal(k3, (B2, IN_EMBED), dtype=jnp.float32)
    x2b = jax.random.normal(k4, (B2, IN_EMBED), dtype=jnp.float32)
    ref2 = reference_forward(np.asarray(x1b, np.float64), np.asarray(x2b, np.float64),
                             W_pre, b_pre, U_score, V1, V2, score_gates)

    out2 = jax.block_until_ready(quantum_attention_pallas(x1b, x2b, consts_bf16))      # TB=16, grid=2
    np.testing.assert_allclose(np.asarray(out2), ref2, rtol=5e-3, atol=8e-3)

    out3 = jax.block_until_ready(quantum_attention_pallas(x1b, x2b, consts_bf16, tb=8))  # TB=8, grid=3
    np.testing.assert_allclose(np.asarray(out3), ref2, rtol=5e-3, atol=8e-3)

    print("KERNEL_OK")
</pallas_src>

<mosaic_0001>
module attributes {stable_mosaic.version = 11 : i64} {
  func.func @_qattn_kernel(%arg0: i32, %arg1: memref<8x32xf32, #tpu.memory_space<vmem>>, %arg2: memref<8x32xf32, #tpu.memory_space<vmem>>, %arg3: memref<32x4xf32, #tpu.memory_space<vmem>>, %arg4: memref<1x4xf32, #tpu.memory_space<vmem>>, %arg5: memref<4x256xf32, #tpu.memory_space<vmem>>, %arg6: memref<256x1280xf32, #tpu.memory_space<vmem>>, %arg7: memref<256x1280xf32, #tpu.memory_space<vmem>>, %arg8: memref<256x4xf32, #tpu.memory_space<vmem>>, %arg9: memref<4x16xf32, #tpu.memory_space<vmem>>, %arg10: memref<16x32xf32, #tpu.memory_space<vmem>>, %arg11: memref<4x32x32xf32, #tpu.memory_space<vmem>>, %arg12: memref<1x4xf32, #tpu.memory_space<vmem>>, %arg13: memref<32x256xf32, #tpu.memory_space<vmem>>, %arg14: memref<256x128xf32, #tpu.memory_space<vmem>>, %arg15: memref<8x128xf32, #tpu.memory_space<vmem>>) attributes {dimension_semantics = [#tpu.dimension_semantics<parallel>], iteration_bounds = array<i64: 1>, scalar_prefetch = 0 : i64, scratch_operands = 0 : i64, tpu.core_type = #tpu.core_type<tc>, window_params = [{transform_indices = @transform_0, window_bounds = array<i64: 8, 32>}, {transform_indices = @transform_1, window_bounds = array<i64: 8, 32>}, {pipeline_mode = #tpu.pipeline_mode<synchronous>, transform_indices = @transform_2, window_bounds = array<i64: 32, 4>}, {pipeline_mode = #tpu.pipeline_mode<synchronous>, transform_indices = @transform_3, window_bounds = array<i64: 1, 4>}, {pipeline_mode = #tpu.pipeline_mode<synchronous>, transform_indices = @transform_4, window_bounds = array<i64: 4, 256>}, {pipeline_mode = #tpu.pipeline_mode<synchronous>, transform_indices = @transform_5, window_bounds = array<i64: 256, 1280>}, {pipeline_mode = #tpu.pipeline_mode<synchronous>, transform_indices = @transform_6, window_bounds = array<i64: 256, 1280>}, {pipeline_mode = #tpu.pipeline_mode<synchronous>, transform_indices = @transform_7, window_bounds = array<i64: 256, 4>}, {pipeline_mode = #tpu.pipeline_mode<synchronous>, transform_indices = @transform_8, window_bounds = array<i64: 4, 16>}, {pipeline_mode = #tpu.pipeline_mode<synchronous>, transform_indices = @transform_9, window_bounds = array<i64: 16, 32>}, {pipeline_mode = #tpu.pipeline_mode<synchronous>, transform_indices = @transform_10, window_bounds = array<i64: 4, 32, 32>}, {pipeline_mode = #tpu.pipeline_mode<synchronous>, transform_indices = @transform_11, window_bounds = array<i64: 1, 4>}, {pipeline_mode = #tpu.pipeline_mode<synchronous>, transform_indices = @transform_12, window_bounds = array<i64: 32, 256>}, {pipeline_mode = #tpu.pipeline_mode<synchronous>, transform_indices = @transform_13, window_bounds = array<i64: 256, 128>}, {transform_indices = @transform_14, window_bounds = array<i64: 8, 128>}]} {
    %c0 = arith.constant 0 : index
    %c0_0 = arith.constant 0 : index
    %0 = vector.load %arg1[%c0, %c0_0] : memref<8x32xf32, #tpu.memory_space<vmem>>, vector<8x32xf32>
    %c0_1 = arith.constant 0 : index
    %c0_2 = arith.constant 0 : index
    %1 = vector.load %arg2[%c0_1, %c0_2] : memref<8x32xf32, #tpu.memory_space<vmem>>, vector<8x32xf32>
    %2 = tpu.concatenate %0, %1 in 0 : vector<8x32xf32>, vector<8x32xf32> -> vector<16x32xf32>
    %c0_3 = arith.constant 0 : index
    %c0_4 = arith.constant 0 : index
    %3 = vector.load %arg3[%c0_3, %c0_4] : memref<32x4xf32, #tpu.memory_space<vmem>>, vector<32x4xf32>
    %cst = arith.constant dense<0.000000e+00> : vector<16x4xf32>
    %4 = tpu.matmul %2, %3, %cst {dimension_numbers = #tpu.dot_dimension_numbers<[1], [0], [0], [1], [0, 0, 1, 1], [], []>} : vector<16x32xf32>, vector<32x4xf32>, vector<16x4xf32> -> vector<16x4xf32>
    %c0_5 = arith.constant 0 : index
    %c0_6 = arith.constant 0 : index
    %5 = vector.load %arg4[%c0_5, %c0_6] : memref<1x4xf32, #tpu.memory_space<vmem>>, vector<1x4xf32>
    %6 = vector.broadcast %5 : vector<1x4xf32> to vector<16x4xf32>
    %7 = arith.addf %4, %6 : vector<16x4xf32>
    %8 = vector.extract_strided_slice %7 {offsets = [0, 0], sizes = [8, 4], strides = [1, 1]} : vector<16x4xf32> to vector<8x4xf32>
    %9 = vector.extract_strided_slice %7 {offsets = [8, 0], sizes = [8, 4], strides = [1, 1]} : vector<16x4xf32> to vector<8x4xf32>
    %cst_7 = arith.constant 5.000000e-01 : f32
    %10 = vector.broadcast %cst_7 : f32 to vector<8x4xf32>
    %11 = arith.mulf %8, %10 : vector<8x4xf32>
    %12 = math.cos %11 : vector<8x4xf32>
    %cst_8 = arith.constant 5.000000e-01 : f32
    %13 = vector.broadcast %cst_8 : f32 to vector<8x4xf32>
    %14 = arith.mulf %8, %13 : vector<8x4xf32>
    %15 = math.sin %14 : vector<8x4xf32>
    %16 = arith.subf %15, %12 : vector<8x4xf32>
    %cst_9 = arith.constant 5.000000e-01 : f32
    %17 = vector.broadcast %cst_9 : f32 to vector<8x4xf32>
    %18 = arith.mulf %9, %17 : vector<8x4xf32>
    %19 = math.cos %18 : vector<8x4xf32>
    %cst_10 = arith.constant 5.000000e-01 : f32
    %20 = vector.broadcast %cst_10 : f32 to vector<8x4xf32>
    %21 = arith.mulf %9, %20 : vector<8x4xf32>
    %22 = math.sin %21 : vector<8x4xf32>
    %23 = arith.subf %22, %19 : vector<8x4xf32>
    %24 = vector.extract_strided_slice %19 {offsets = [0, 0], sizes = [8, 1], strides = [1, 1]} : vector<8x4xf32> to vector<8x1xf32>
    %25 = vector.extract_strided_slice %23 {offsets = [0, 0], sizes = [8, 1], strides = [1, 1]} : vector<8x4xf32> to vector<8x1xf32>
    %c0_11 = arith.constant 0 : index
    %c0_12 = arith.constant 0 : index
    %26 = vector.load %arg9[%c0_11, %c0_12] : memref<4x16xf32, #tpu.memory_space<vmem>>, vector<1x16xf32>
    %27 = vector.broadcast %25 : vector<8x1xf32> to vector<8x16xf32>
    %28 = vector.broadcast %26 : vector<1x16xf32> to vector<8x16xf32>
    %29 = arith.mulf %27, %28 : vector<8x16xf32>
    %30 = vector.broadcast %24 : vector<8x1xf32> to vector<8x16xf32>
    %31 = arith.addf %30, %29 : vector<8x16xf32>
    %32 = vector.extract_strided_slice %19 {offsets = [0, 1], sizes = [8, 1], strides = [1, 1]} : vector<8x4xf32> to vector<8x1xf32>
    %33 = vector.extract_strided_slice %23 {offsets = [0, 1], sizes = [8, 1], strides = [1, 1]} : vector<8x4xf32> to vector<8x1xf32>
    %c1 = arith.constant 1 : index
    %c0_13 = arith.constant 0 : index
    %34 = vector.load %arg9[%c1, %c0_13] : memref<4x16xf32, #tpu.memory_space<vmem>>, vector<1x16xf32>
    %35 = vector.broadcast %33 : vector<8x1xf32> to vector<8x16xf32>
    %36 = vector.broadcast %34 : vector<1x16xf32> to vector<8x16xf32>
    %37 = arith.mulf %35, %36 : vector<8x16xf32>
    %38 = vector.broadcast %32 : vector<8x1xf32> to vector<8x16xf32>
    %39 = arith.addf %38, %37 : vector<8x16xf32>
    %40 = arith.mulf %31, %39 : vector<8x16xf32>
    %41 = vector.extract_strided_slice %19 {offsets = [0, 2], sizes = [8, 1], strides = [1, 1]} : vector<8x4xf32> to vector<8x1xf32>
    %42 = vector.extract_strided_slice %23 {offsets = [0, 2], sizes = [8, 1], strides = [1, 1]} : vector<8x4xf32> to vector<8x1xf32>
    %c2 = arith.constant 2 : index
    %c0_14 = arith.constant 0 : index
    %43 = vector.load %arg9[%c2, %c0_14] : memref<4x16xf32, #tpu.memory_space<vmem>>, vector<1x16xf32>
    %44 = vector.broadcast %42 : vector<8x1xf32> to vector<8x16xf32>
    %45 = vector.broadcast %43 : vector<1x16xf32> to vector<8x16xf32>
    %46 = arith.mulf %44, %45 : vector<8x16xf32>
    %47 = vector.broadcast %41 : vector<8x1xf32> to vector<8x16xf32>
    %48 = arith.addf %47, %46 : vector<8x16xf32>
    %49 = arith.mulf %40, %48 : vector<8x16xf32>
    %50 = vector.extract_strided_slice %19 {offsets = [0, 3], sizes = [8, 1], strides = [1, 1]} : vector<8x4xf32> to vector<8x1xf32>
    %51 = vector.extract_strided_slice %23 {offsets = [0, 3], sizes = [8, 1], strides = [1, 1]} : vector<8x4xf32> to vector<8x1xf32>
    %c3 = arith.constant 3 : index
    %c0_15 = arith.constant 0 : index
    %52 = vector.load %arg9[%c3, %c0_15] : memref<4x16xf32, #tpu.memory_space<vmem>>, vector<1x16xf32>
    %53 = vector.broadcast %51 : vector<8x1xf32> to vector<8x16xf32>
    %54 = vector.broadcast %52 : vector<1x16xf32> to vector<8x16xf32>
    %55 = arith.mulf %53, %54 : vector<8x16xf32>
    %56 = vector.broadcast %50 : vector<8x1xf32> to vector<8x16xf32>
    %57 = arith.addf %56, %55 : vector<8x16xf32>
    %58 = arith.mulf %49, %57 : vector<8x16xf32>
    %59 = vector.extract_strided_slice %12 {offsets = [0, 0], sizes = [8, 1], strides = [1, 1]} : vector<8x4xf32> to vector<8x1xf32>
    %60 = vector.extract_strided_slice %16 {offsets = [0, 0], sizes = [8, 1], strides = [1, 1]} : vector<8x4xf32> to vector<8x1xf32>
    %c0_16 = arith.constant 0 : index
    %c0_17 = arith.constant 0 : index
    %61 = vector.load %arg5[%c0_16, %c0_17] : memref<4x256xf32, #tpu.memory_space<vmem>>, vector<1x256xf32>
    %62 = vector.broadcast %60 : vector<8x1xf32> to vector<8x256xf32>
    %63 = vector.broadcast %61 : vector<1x256xf32> to vector<8x256xf32>
    %64 = arith.mulf %62, %63 : vector<8x256xf32>
    %65 = vector.broadcast %59 : vector<8x1xf32> to vector<8x256xf32>
    %66 = arith.addf %65, %64 : vector<8x256xf32>
    %67 = vector.extract_strided_slice %12 {offsets = [0, 1], sizes = [8, 1], strides = [1, 1]} : vector<8x4xf32> to vector<8x1xf32>
    %68 = vector.extract_strided_slice %16 {offsets = [0, 1], sizes = [8, 1], strides = [1, 1]} : vector<8x4xf32> to vector<8x1xf32>
    %c1_18 = arith.constant 1 : index
    %c0_19 = arith.constant 0 : index
    %69 = vector.load %arg5[%c1_18, %c0_19] : memref<4x256xf32, #tpu.memory_space<vmem>>, vector<1x256xf32>
    %70 = vector.broadcast %68 : vector<8x1xf32> to vector<8x256xf32>
    %71 = vector.broadcast %69 : vector<1x256xf32> to vector<8x256xf32>
    %72 = arith.mulf %70, %71 : vector<8x256xf32>
    %73 = vector.broadcast %67 : vector<8x1xf32> to vector<8x256xf32>
    %74 = arith.addf %73, %72 : vector<8x256xf32>
    %75 = arith.mulf %66, %74 : vector<8x256xf32>
    %76 = vector.extract_strided_slice %12 {offsets = [0, 2], sizes = [8, 1], strides = [1, 1]} : vector<8x4xf32> to vector<8x1xf32>
    %77 = vector.extract_strided_slice %16 {offsets = [0, 2], sizes = [8, 1], strides = [1, 1]} : vector<8x4xf32> to vector<8x1xf32>
    %c2_20 = arith.constant 2 : index
    %c0_21 = arith.constant 0 : index
    %78 = vector.load %arg5[%c2_20, %c0_21] : memref<4x256xf32, #tpu.memory_space<vmem>>, vector<1x256xf32>
    %79 = vector.broadcast %77 : vector<8x1xf32> to vector<8x256xf32>
    %80 = vector.broadcast %78 : vector<1x256xf32> to vector<8x256xf32>
    %81 = arith.mulf %79, %80 : vector<8x256xf32>
    %82 = vector.broadcast %76 : vector<8x1xf32> to vector<8x256xf32>
    %83 = arith.addf %82, %81 : vector<8x256xf32>
    %84 = arith.mulf %75, %83 : vector<8x256xf32>
    %85 = vector.extract_strided_slice %12 {offsets = [0, 3], sizes = [8, 1], strides = [1, 1]} : vector<8x4xf32> to vector<8x1xf32>
    %86 = vector.extract_strided_slice %16 {offsets = [0, 3], sizes = [8, 1], strides = [1, 1]} : vector<8x4xf32> to vector<8x1xf32>
    %c3_22 = arith.constant 3 : index
    %c0_23 = arith.constant 0 : index
    %87 = vector.load %arg5[%c3_22, %c0_23] : memref<4x256xf32, #tpu.memory_space<vmem>>, vector<1x256xf32>
    %88 = vector.broadcast %86 : vector<8x1xf32> to vector<8x256xf32>
    %89 = vector.broadcast %87 : vector<1x256xf32> to vector<8x256xf32>
    %90 = arith.mulf %88, %89 : vector<8x256xf32>
    %91 = vector.broadcast %85 : vector<8x1xf32> to vector<8x256xf32>
    %92 = arith.addf %91, %90 : vector<8x256xf32>
    %93 = arith.mulf %84, %92 : vector<8x256xf32>
    %94 = tpu.concatenate %58, %58, %58, %58, %58, %58, %58, %58, %58, %58, %58, %58, %58, %58, %58, %58 in 1 : vector<8x16xf32>, vector<8x16xf32>, vector<8x16xf32>, vector<8x16xf32>, vector<8x16xf32>, vector<8x16xf32>, vector<8x16xf32>, vector<8x16xf32>, vector<8x16xf32>, vector<8x16xf32>, vector<8x16xf32>, vector<8x16xf32>, vector<8x16xf32>, vector<8x16xf32>, vector<8x16xf32>, vector<8x16xf32> -> vector<8x256xf32>
    %95 = arith.mulf %93, %94 : vector<8x256xf32>
    %c0_24 = arith.constant 0 : index
    %c0_25 = arith.constant 0 : index
    %96 = vector.load %arg6[%c0_24, %c0_25] : memref<256x1280xf32, #tpu.memory_space<vmem>>, vector<256x1280xf32>
    %cst_26 = arith.constant dense<0.000000e+00> : vector<8x1280xf32>
    %97 = tpu.matmul %95, %96, %cst_26 {dimension_numbers = #tpu.dot_dimension_numbers<[1], [0], [0], [1], [0, 0, 1, 1], [], []>} : vector<8x256xf32>, vector<256x1280xf32>, vector<8x1280xf32> -> vector<8x1280xf32>
    %c0_27 = arith.constant 0 : index
    %c0_28 = arith.constant 0 : index
    %98 = vector.load %arg7[%c0_27, %c0_28] : memref<256x1280xf32, #tpu.memory_space<vmem>>, vector<256x1280xf32>
    %cst_29 = arith.constant dense<0.000000e+00> : vector<8x1280xf32>
    %99 = tpu.matmul %95, %98, %cst_29 {dimension_numbers = #tpu.dot_dimension_numbers<[1], [0], [0], [1], [0, 0, 1, 1], [], []>} : vector<8x256xf32>, vector<256x1280xf32>, vector<8x1280xf32> -> vector<8x1280xf32>
    %100 = vector.extract_strided_slice %97 {offsets = [0, 0], sizes = [8, 256], strides = [1, 1]} : vector<8x1280xf32> to vector<8x256xf32>
    %101 = vector.extract_strided_slice %99 {offsets = [0, 0], sizes = [8, 256], strides = [1, 1]} : vector<8x1280xf32> to vector<8x256xf32>
    %102 = arith.mulf %100, %100 : vector<8x256xf32>
    %103 = arith.mulf %101, %101 : vector<8x256xf32>
    %104 = arith.addf %102, %103 : vector<8x256xf32>
    %c0_30 = arith.constant 0 : index
    %c0_31 = arith.constant 0 : index
    %105 = vector.load %arg8[%c0_30, %c0_31] : memref<256x4xf32, #tpu.memory_space<vmem>>, vector<256x4xf32>
    %cst_32 = arith.constant dense<0.000000e+00> : vector<8x4xf32>
    %106 = tpu.matmul %104, %105, %cst_32 {dimension_numbers = #tpu.dot_dimension_numbers<[1], [0], [0], [1], [0, 0, 1, 1], [], []>} : vector<8x256xf32>, vector<256x4xf32>, vector<8x4xf32> -> vector<8x4xf32>
    %107 = vector.extract_strided_slice %97 {offsets = [0, 256], sizes = [8, 256], strides = [1, 1]} : vector<8x1280xf32> to vector<8x256xf32>
    %108 = arith.mulf %100, %107 : vector<8x256xf32>
    %109 = vector.extract_strided_slice %99 {offsets = [0, 256], sizes = [8, 256], strides = [1, 1]} : vector<8x1280xf32> to vector<8x256xf32>
    %110 = arith.mulf %101, %109 : vector<8x256xf32>
    %111 = arith.addf %108, %110 : vector<8x256xf32>
    %cst_33 = arith.constant dense<0.000000e+00> : vector<8xf32>
    %112 = vector.multi_reduction <add>, %111, %cst_33 [1] : vector<8x256xf32> to vector<8xf32>
    %113 = vector.shape_cast %112 : vector<8xf32> to vector<8x1xf32>
    %114 = vector.extract_strided_slice %97 {offsets = [0, 512], sizes = [8, 256], strides = [1, 1]} : vector<8x1280xf32> to vector<8x256xf32>
    %115 = arith.mulf %100, %114 : vector<8x256xf32>
    %116 = vector.extract_strided_slice %99 {offsets = [0, 512], sizes = [8, 256], strides = [1, 1]} : vector<8x1280xf32> to vector<8x256xf32>
    %117 = arith.mulf %101, %116 : vector<8x256xf32>
    %118 = arith.addf %115, %117 : vector<8x256xf32>
    %cst_34 = arith.constant dense<0.000000e+00> : vector<8xf32>
    %119 = vector.multi_reduction <add>, %118, %cst_34 [1] : vector<8x256xf32> to vector<8xf32>
    %120 = vector.shape_cast %119 : vector<8xf32> to vector<8x1xf32>
    %121 = vector.extract_strided_slice %97 {offsets = [0, 768], sizes = [8, 256], strides = [1, 1]} : vector<8x1280xf32> to vector<8x256xf32>
    %122 = arith.mulf %100, %121 : vector<8x256xf32>
    %123 = vector.extract_strided_slice %99 {offsets = [0, 768], sizes = [8, 256], strides = [1, 1]} : vector<8x1280xf32> to vector<8x256xf32>
    %124 = arith.mulf %101, %123 : vector<8x256xf32>
    %125 = arith.addf %122, %124 : vector<8x256xf32>
    %cst_35 = arith.constant dense<0.000000e+00> : vector<8xf32>
    %126 = vector.multi_reduction <add>, %125, %cst_35 [1] : vector<8x256xf32> to vector<8xf32>
    %127 = vector.shape_cast %126 : vector<8xf32> to vector<8x1xf32>
    %128 = vector.extract_strided_slice %97 {offsets = [0, 1024], sizes = [8, 256], strides = [1, 1]} : vector<8x1280xf32> to vector<8x256xf32>
    %129 = arith.mulf %100, %128 : vector<8x256xf32>
    %130 = vector.extract_strided_slice %99 {offsets = [0, 1024], sizes = [8, 256], strides = [1, 1]} : vector<8x1280xf32> to vector<8x256xf32>
    %131 = arith.mulf %101, %130 : vector<8x256xf32>
    %132 = arith.addf %129, %131 : vector<8x256xf32>
    %cst_36 = arith.constant dense<0.000000e+00> : vector<8xf32>
    %133 = vector.multi_reduction <add>, %132, %cst_36 [1] : vector<8x256xf32> to vector<8xf32>
    %134 = vector.shape_cast %133 : vector<8xf32> to vector<8x1xf32>
    %135 = tpu.concatenate %113, %120, %127, %134 in 1 : vector<8x1xf32>, vector<8x1xf32>, vector<8x1xf32>, vector<8x1xf32> -> vector<8x4xf32>
    %136 = arith.mulf %106, %106 : vector<8x4xf32>
    %137 = arith.mulf %135, %135 : vector<8x4xf32>
    %138 = arith.addf %136, %137 : vector<8x4xf32>
    %139 = math.sqrt %138 : vector<8x4xf32>
    %c0_37 = arith.constant 0 : index
    %c0_38 = arith.constant 0 : index
    %140 = vector.load %arg10[%c0_37, %c0_38] : memref<16x32xf32, #tpu.memory_space<vmem>>, vector<16x32xf32>
    %cst_39 = arith.constant dense<0.000000e+00> : vector<8x32xf32>
    %141 = tpu.matmul %58, %140, %cst_39 {dimension_numbers = #tpu.dot_dimension_numbers<[1], [0], [0], [1], [0, 0, 1, 1], [], []>} : vector<8x16xf32>, vector<16x32xf32>, vector<8x32xf32> -> vector<8x32xf32>
    %142 = math.tanh %139 : vector<8x4xf32>
    %c0_40 = arith.constant 0 : index
    %c0_41 = arith.constant 0 : index
    %143 = vector.load %arg12[%c0_40, %c0_41] : memref<1x4xf32, #tpu.memory_space<vmem>>, vector<1x4xf32>
    %144 = vector.broadcast %143 : vector<1x4xf32> to vector<8x4xf32>
    %145 = arith.mulf %142, %144 : vector<8x4xf32>
    %cst_42 = arith.constant 5.000000e-01 : f32
    %146 = vector.broadcast %cst_42 : f32 to vector<8x4xf32>
    %147 = arith.mulf %145, %146 : vector<8x4xf32>
    %148 = math.cos %147 : vector<8x4xf32>
    %cst_43 = arith.constant 5.000000e-01 : f32
    %149 = vector.broadcast %cst_43 : f32 to vector<8x4xf32>
    %150 = arith.mulf %145, %149 : vector<8x4xf32>
    %151 = math.sin %150 : vector<8x4xf32>
    %c0_44 = arith.constant 0 : index
    %c0_45 = arith.constant 0 : index
    %c0_46 = arith.constant 0 : index
    %152 = vector.load %arg11[%c0_44, %c0_45, %c0_46] : memref<4x32x32xf32, #tpu.memory_space<vmem>>, vector<1x32x32xf32>
    %153 = vector.shape_cast %152 : vector<1x32x32xf32> to vector<32x32xf32>
    %cst_47 = arith.constant dense<0.000000e+00> : vector<8x32xf32>
    %154 = tpu.matmul %141, %153, %cst_47 {dimension_numbers = #tpu.dot_dimension_numbers<[1], [0], [0], [1], [0, 0, 1, 1], [], []>} : vector<8x32xf32>, vector<32x32xf32>, vector<8x32xf32> -> vector<8x32xf32>
    %155 = vector.extract_strided_slice %148 {offsets = [0, 0], sizes = [8, 1], strides = [1, 1]} : vector<8x4xf32> to vector<8x1xf32>
    %156 = vector.broadcast %155 : vector<8x1xf32> to vector<8x32xf32>
    %157 = arith.mulf %156, %141 : vector<8x32xf32>
    %158 = vector.extract_strided_slice %151 {offsets = [0, 0], sizes = [8, 1], strides = [1, 1]} : vector<8x4xf32> to vector<8x1xf32>
    %159 = vector.broadcast %158 : vector<8x1xf32> to vector<8x32xf32>
    %160 = arith.mulf %159, %154 : vector<8x32xf32>
    %161 = arith.addf %157, %160 : vector<8x32xf32>
    %c1_48 = arith.constant 1 : index
    %c0_49 = arith.constant 0 : index
    %c0_50 = arith.constant 0 : index
    %162 = vector.load %arg11[%c1_48, %c0_49, %c0_50] : memref<4x32x32xf32, #tpu.memory_space<vmem>>, vector<1x32x32xf32>
    %163 = vector.shape_cast %162 : vector<1x32x32xf32> to vector<32x32xf32>
    %cst_51 = arith.constant dense<0.000000e+00> : vector<8x32xf32>
    %164 = tpu.matmul %161, %163, %cst_51 {dimension_numbers = #tpu.dot_dimension_numbers<[1], [0], [0], [1], [0, 0, 1, 1], [], []>} : vector<8x32xf32>, vector<32x32xf32>, vector<8x32xf32> -> vector<8x32xf32>
    %165 = vector.extract_strided_slice %148 {offsets = [0, 1], sizes = [8, 1], strides = [1, 1]} : vector<8x4xf32> to vector<8x1xf32>
    %166 = vector.broadcast %165 : vector<8x1xf32> to vector<8x32xf32>
    %167 = arith.mulf %166, %161 : vector<8x32xf32>
    %168 = vector.extract_strided_slice %151 {offsets = [0, 1], sizes = [8, 1], strides = [1, 1]} : vector<8x4xf32> to vector<8x1xf32>
    %169 = vector.broadcast %168 : vector<8x1xf32> to vector<8x32xf32>
    %170 = arith.mulf %169, %164 : vector<8x32xf32>
    %171 = arith.addf %167, %170 : vector<8x32xf32>
    %c2_52 = arith.constant 2 : index
    %c0_53 = arith.constant 0 : index
    %c0_54 = arith.constant 0 : index
    %172 = vector.load %arg11[%c2_52, %c0_53, %c0_54] : memref<4x32x32xf32, #tpu.memory_space<vmem>>, vector<1x32x32xf32>
    %173 = vector.shape_cast %172 : vector<1x32x32xf32> to vector<32x32xf32>
    %cst_55 = arith.constant dense<0.000000e+00> : vector<8x32xf32>
    %174 = tpu.matmul %171, %173, %cst_55 {dimension_numbers = #tpu.dot_dimension_numbers<[1], [0], [0], [1], [0, 0, 1, 1], [], []>} : vector<8x32xf32>, vector<32x32xf32>, vector<8x32xf32> -> vector<8x32xf32>
    %175 = vector.extract_strided_slice %148 {offsets = [0, 2], sizes = [8, 1], strides = [1, 1]} : vector<8x4xf32> to vector<8x1xf32>
    %176 = vector.broadcast %175 : vector<8x1xf32> to vector<8x32xf32>
    %177 = arith.mulf %176, %171 : vector<8x32xf32>
    %178 = vector.extract_strided_slice %151 {offsets = [0, 2], sizes = [8, 1], strides = [1, 1]} : vector<8x4xf32> to vector<8x1xf32>
    %179 = vector.broadcast %178 : vector<8x1xf32> to vector<8x32xf32>
    %180 = arith.mulf %179, %174 : vector<8x32xf32>
    %181 = arith.addf %177, %180 : vector<8x32xf32>
    %c3_56 = arith.constant 3 : index
    %c0_57 = arith.constant 0 : index
    %c0_58 = arith.constant 0 : index
    %182 = vector.load %arg11[%c3_56, %c0_57, %c0_58] : memref<4x32x32xf32, #tpu.memory_space<vmem>>, vector<1x32x32xf32>
    %183 = vector.shape_cast %182 : vector<1x32x32xf32> to vector<32x32xf32>
    %cst_59 = arith.constant dense<0.000000e+00> : vector<8x32xf32>
    %184 = tpu.matmul %181, %183, %cst_59 {dimension_numbers = #tpu.dot_dimension_numbers<[1], [0], [0], [1], [0, 0, 1, 1], [], []>} : vector<8x32xf32>, vector<32x32xf32>, vector<8x32xf32> -> vector<8x32xf32>
    %185 = vector.extract_strided_slice %148 {offsets = [0, 3], sizes = [8, 1], strides = [1, 1]} : vector<8x4xf32> to vector<8x1xf32>
    %186 = vector.broadcast %185 : vector<8x1xf32> to vector<8x32xf32>
    %187 = arith.mulf %186, %181 : vector<8x32xf32>
    %188 = vector.extract_strided_slice %151 {offsets = [0, 3], sizes = [8, 1], strides = [1, 1]} : vector<8x4xf32> to vector<8x1xf32>
    %189 = vector.broadcast %188 : vector<8x1xf32> to vector<8x32xf32>
    %190 = arith.mulf %189, %184 : vector<8x32xf32>
    %191 = arith.addf %187, %190 : vector<8x32xf32>
    %c0_60 = arith.constant 0 : index
    %c0_61 = arith.constant 0 : index
    %192 = vector.load %arg13[%c0_60, %c0_61] : memref<32x256xf32, #tpu.memory_space<vmem>>, vector<32x256xf32>
    %cst_62 = arith.constant dense<0.000000e+00> : vector<8x256xf32>
    %193 = tpu.matmul %191, %192, %cst_62 {dimension_numbers = #tpu.dot_dimension_numbers<[1], [0], [0], [1], [0, 0, 1, 1], [], []>} : vector<8x32xf32>, vector<32x256xf32>, vector<8x256xf32> -> vector<8x256xf32>
    %194 = tpu.concatenate %191, %191, %191, %191, %191, %191, %191, %191 in 1 : vector<8x32xf32>, vector<8x32xf32>, vector<8x32xf32>, vector<8x32xf32>, vector<8x32xf32>, vector<8x32xf32>, vector<8x32xf32>, vector<8x32xf32> -> vector<8x256xf32>
    %195 = arith.mulf %194, %193 : vector<8x256xf32>
    %c0_63 = arith.constant 0 : index
    %c0_64 = arith.constant 0 : index
    %196 = vector.load %arg14[%c0_63, %c0_64] : memref<256x128xf32, #tpu.memory_space<vmem>>, vector<256x128xf32>
    %cst_65 = arith.constant dense<0.000000e+00> : vector<8x128xf32>
    %197 = tpu.matmul %195, %196, %cst_65 {dimension_numbers = #tpu.dot_dimension_numbers<[1], [0], [0], [1], [0, 0, 1, 1], [], []>} : vector<8x256xf32>, vector<256x128xf32>, vector<8x128xf32> -> vector<8x128xf32>
    %c0_66 = arith.constant 0 : index
    %c0_67 = arith.constant 0 : index
    %198 = vector.load %arg15[%c0_66, %c0_67] : memref<8x128xf32, #tpu.memory_space<vmem>>, vector<8x128xf32>
    tpu.vector_store %arg15[%c0_66, %c0_67], %197 {strides = array<i32>} : memref<8x128xf32, #tpu.memory_space<vmem>>, vector<8x128xf32>,
    return
  }
  func.func @transform_0(%arg0: i32) -> (i32, i32) {
    %c0_i32 = arith.constant 0 : i32
    %c0_i32_0 = arith.constant 0 : i32
    return %arg0, %c0_i32 : i32, i32
  }
  func.func @transform_1(%arg0: i32) -> (i32, i32) {
    %c0_i32 = arith.constant 0 : i32
    %c0_i32_0 = arith.constant 0 : i32
    return %arg0, %c0_i32 : i32, i32
  }
  func.func @transform_2(%arg0: i32) -> (i32, i32) {
    %c0_i32 = arith.constant 0 : i32
    %c0_i32_0 = arith.constant 0 : i32
    %c0_i32_1 = arith.constant 0 : i32
    return %c0_i32, %c0_i32_0 : i32, i32
  }
  func.func @transform_3(%arg0: i32) -> (i32, i32) {
    %c0_i32 = arith.constant 0 : i32
    %c0_i32_0 = arith.constant 0 : i32
    %c0_i32_1 = arith.constant 0 : i32
    return %c0_i32, %c0_i32_0 : i32, i32
  }
  func.func @transform_4(%arg0: i32) -> (i32, i32) {
    %c0_i32 = arith.constant 0 : i32
    %c0_i32_0 = arith.constant 0 : i32
    %c0_i32_1 = arith.constant 0 : i32
    return %c0_i32, %c0_i32_0 : i32, i32
  }
  func.func @transform_5(%arg0: i32) -> (i32, i32) {
    %c0_i32 = arith.constant 0 : i32
    %c0_i32_0 = arith.constant 0 : i32
    %c0_i32_1 = arith.constant 0 : i32
    return %c0_i32, %c0_i32_0 : i32, i32
  }
  func.func @transform_6(%arg0: i32) -> (i32, i32) {
    %c0_i32 = arith.constant 0 : i32
    %c0_i32_0 = arith.constant 0 : i32
    %c0_i32_1 = arith.constant 0 : i32
    return %c0_i32, %c0_i32_0 : i32, i32
  }
  func.func @transform_7(%arg0: i32) -> (i32, i32) {
    %c0_i32 = arith.constant 0 : i32
    %c0_i32_0 = arith.constant 0 : i32
    %c0_i32_1 = arith.constant 0 : i32
    return %c0_i32, %c0_i32_0 : i32, i32
  }
  func.func @transform_8(%arg0: i32) -> (i32, i32) {
    %c0_i32 = arith.constant 0 : i32
    %c0_i32_0 = arith.constant 0 : i32
    %c0_i32_1 = arith.constant 0 : i32
    return %c0_i32, %c0_i32_0 : i32, i32
  }
  func.func @transform_9(%arg0: i32) -> (i32, i32) {
    %c0_i32 = arith.constant 0 : i32
    %c0_i32_0 = arith.constant 0 : i32
    %c0_i32_1 = arith.constant 0 : i32
    return %c0_i32, %c0_i32_0 : i32, i32
  }
  func.func @transform_10(%arg0: i32) -> (i32, i32, i32) {
    %c0_i32 = arith.constant 0 : i32
    %c0_i32_0 = arith.constant 0 : i32
    %c0_i32_1 = arith.constant 0 : i32
    %c0_i32_2 = arith.constant 0 : i32
    return %c0_i32, %c0_i32_0, %c0_i32_1 : i32, i32, i32
  }
  func.func @transform_11(%arg0: i32) -> (i32, i32) {
    %c0_i32 = arith.constant 0 : i32
    %c0_i32_0 = arith.constant 0 : i32
    %c0_i32_1 = arith.constant 0 : i32
    return %c0_i32, %c0_i32_0 : i32, i32
  }
  func.func @transform_12(%arg0: i32) -> (i32, i32) {
    %c0_i32 = arith.constant 0 : i32
    %c0_i32_0 = arith.constant 0 : i32
    %c0_i32_1 = arith.constant 0 : i32
    return %c0_i32, %c0_i32_0 : i32, i32
  }
  func.func @transform_13(%arg0: i32) -> (i32, i32) {
    %c0_i32 = arith.constant 0 : i32
    %c0_i32_0 = arith.constant 0 : i32
    %c0_i32_1 = arith.constant 0 : i32
    return %c0_i32, %c0_i32_0 : i32, i32
  }
  func.func @transform_14(%arg0: i32) -> (i32, i32) {
    %c0_i32 = arith.constant 0 : i32
    %c0_i32_0 = arith.constant 0 : i32
    return %arg0, %c0_i32 : i32, i32
  }
}

</mosaic_0001>

<llo_original>
// kernel: tpu_custom_call.1
$region0: #{tpu_custom_call.1}
  #allocation0 [shape = 'u32[]', space=smem, size = 0x4, offset = 0x4, fixed_abs, tag = 'smem constant byte address 0x4 - core index']
  #allocation1 [shape = 'u32[144,128]{1,0:T(1,128)}', space=vmem, size = 0x12000, scoped, tag = 'internal scratch']
  %s0 = inlined_call_operand.hbm [shape: f32[8,32], index: 0, kind: input, shape index: {}]
  %s1 = inlined_call_operand.hbm [shape: f32[8,32], index: 1, kind: input, shape index: {}]
  %s2 = inlined_call_operand.vmem [shape: f32[32,4], index: 2, kind: input, shape index: {}]
  %s3 = inlined_call_operand.hbm [shape: f32[1,4], index: 3, kind: input, shape index: {}]
  %s4 = inlined_call_operand.hbm [shape: f32[4,256], index: 4, kind: input, shape index: {}]
  %s5 = inlined_call_operand.hbm [shape: f32[256,1280], index: 5, kind: input, shape index: {}]
  %s6 = inlined_call_operand.hbm [shape: f32[256,1280], index: 6, kind: input, shape index: {}]
  %s7 = inlined_call_operand.vmem [shape: f32[256,4], index: 7, kind: input, shape index: {}]
  %s8 = inlined_call_operand.hbm [shape: f32[4,16], index: 8, kind: input, shape index: {}]
  %s9 = inlined_call_operand.hbm [shape: f32[16,32], index: 9, kind: input, shape index: {}]
  %s10 = inlined_call_operand.hbm [shape: f32[4,32,32], index: 10, kind: input, shape index: {}]
  %s11 = inlined_call_operand.hbm [shape: f32[1,4], index: 11, kind: input, shape index: {}]
  %s12 = inlined_call_operand.hbm [shape: f32[32,256], index: 12, kind: input, shape index: {}]
  %s13 = inlined_call_operand.hbm [shape: f32[256,128], index: 13, kind: input, shape index: {}]
  %s14 = inlined_call_operand.hbm [shape: f32[8,128], index: 14, kind: output, shape index: {}]
  %s15 = sld [smem:[#allocation0]]
  $region114: #{tpu_custom_call.1} parent=0
    _
  %s17 = ssub.s32 1, %s15
  %s18 = scalar_select 0, %s17, %s15
  $region1: #{tpu_custom_call.1} parent=0
    #allocation2 [shape = 'u8[4096]{0}', space=vmem, size = 0x1000, scoped, tag = 'input window, operand 0, single buffered']
    #allocation3 [shape = 's32[1]{0}', space=sflag, size = 0x4, scoped, tag = 'scoped memory for tpu_custom_call.1']
    #allocation4 [shape = 's32[1]{0}', space=sflag, size = 0x4, scoped, tag = 'scoped memory for tpu_custom_call.1']
    #allocation5 [shape = 'u8[4096]{0}', space=vmem, size = 0x1000, scoped, tag = 'input window, operand 1, single buffered']
    #allocation6 [shape = 's32[1]{0}', space=sflag, size = 0x4, scoped, tag = 'scoped memory for tpu_custom_call.1']
    #allocation7 [shape = 'u8[512]{0}', space=vmem, size = 0x400, scoped, tag = 'input window, operand 3, single buffered']
    #allocation8 [shape = 'u8[4096]{0}', space=vmem, size = 0x1000, scoped, tag = 'input window, operand 4, single buffered']
    #allocation9 [shape = 's32[1]{0}', space=sflag, size = 0x4, scoped, tag = 'scoped memory for tpu_custom_call.1']
    #allocation10 [shape = 'u8[1310720]{0}', space=vmem, size = 0x140000, scoped, tag = 'input window, operand 5, single buffered']
    #allocation11 [shape = 'u8[1310720]{0}', space=vmem, size = 0x140000, scoped, tag = 'input window, operand 6, single buffered']
    #allocation12 [shape = 's32[1]{0}', space=sflag, size = 0x4, scoped, tag = 'scoped memory for tpu_custom_call.1']
    #allocation13 [shape = 'u8[2048]{0}', space=vmem, size = 0x800, scoped, tag = 'input window, operand 8, single buffered']
    #allocation14 [shape = 'u8[8192]{0}', space=vmem, size = 0x2000, scoped, tag = 'input window, operand 9, single buffered']
    #allocation15 [shape = 's32[1]{0}', space=sflag, size = 0x4, scoped, tag = 'scoped memory for tpu_custom_call.1']
    #allocation16 [shape = 'u8[65536]{0}', space=vmem, size = 0x10000, scoped, tag = 'input window, operand 10, single buffered']
    #allocation17 [shape = 'u8[512]{0}', space=vmem, size = 0x400, scoped, tag = 'input window, operand 11, single buffered']
    #allocation18 [shape = 's32[1]{0}', space=sflag, size = 0x4, scoped, tag = 'scoped memory for tpu_custom_call.1']
    #allocation19 [shape = 'u8[32768]{0}', space=vmem, size = 0x8000, scoped, tag = 'input window, operand 12, single buffered']
    #allocation20 [shape = 'u8[131072]{0}', space=vmem, size = 0x20000, scoped, tag = 'input window, operand 13, single buffered']
    #allocation21 [shape = 's32[1]{0}', space=sflag, size = 0x4, scoped, tag = 'scoped memory for tpu_custom_call.1']
    #allocation22 [shape = 'u8[4096]{0}', space=vmem, size = 0x1000, scoped, tag = 'output window, operand 0, single buffered']
    %19 = vsyncpa [#allocation3], 0
    %20 = vsyncpa [#allocation6], 0
    %21 = vsyncpa [#allocation9], 0
    %22 = vsyncpa [#allocation12], 0
    %23 = vsyncpa [#allocation15], 0
    %24 = vsyncpa [#allocation18], 0
    %25 = vsyncpa [#allocation21], 0
    %26 = vsyncpa [#allocation4], 0
    // Predicated region
    $region2: #{tpu_custom_call.1} parent=1 // pred_check
      _
    $region3: #{tpu_custom_call.1} parent=1 // pred_check_branch
      %28 = sbr.rel (0) target = $region5
    $region4: #{tpu_custom_call.1} parent=1 // pred_region
      %s30 = ssub.s32 128, 128
      %31 = vsyncadd [#allocation3], %s30
      %s33 = sshll.u32 [#allocation2], 4
      %s34 = int_to_ptr.vmem [resolvable:$true] %s33
      %36 = dma.hbm_to_vmem [thread:$0]  %s0, 128, %s34, [#allocation3]
    $region5: #{tpu_custom_call.1} parent=1 // pred_fallthru
      _
    // Predicated region
    $region6: #{tpu_custom_call.1} parent=1 // pred_check
      _
    $region7: #{tpu_custom_call.1} parent=1 // pred_check_branch
      %38 = sbr.rel (0) target = $region9
    $region8: #{tpu_custom_call.1} parent=1 // pred_region
      %s40 = ssub.s32 128, 128
      %41 = vsyncadd [#allocation6], %s40
      %s43 = sshll.u32 [#allocation5], 4
      %s44 = int_to_ptr.vmem [resolvable:$true] %s43
      %46 = dma.hbm_to_vmem [thread:$0]  %s1, 128, %s44, [#allocation6]
    $region9: #{tpu_custom_call.1} parent=1 // pred_fallthru
      _
    // Predicated region
    $region10: #{tpu_custom_call.1} parent=1 // pred_check
      _
    $region11: #{tpu_custom_call.1} parent=1 // pred_check_branch
      %48 = sbr.rel (0) target = $region13
    $region12: #{tpu_custom_call.1} parent=1 // pred_region
      _
    $region13: #{tpu_custom_call.1} parent=1 // pred_fallthru
      _
    // Predicated region
    $region14: #{tpu_custom_call.1} parent=1 // pred_check
      _
    $region15: #{tpu_custom_call.1} parent=1 // pred_check_branch
      %50 = sbr.rel (0) target = $region17
    $region16: #{tpu_custom_call.1} parent=1 // pred_region
      %s52 = ssub.s32 16, 16
      %53 = vsyncadd [#allocation6], %s52
      %s55 = sshll.u32 [#allocation7], 4
      %s56 = int_to_ptr.vmem [resolvable:$true] %s55
      %58 = dma.hbm_to_vmem [thread:$0]  %s3, 16, %s56, [#allocation6]
    $region17: #{tpu_custom_call.1} parent=1 // pred_fallthru
      _
    // Predicated region
    $region18: #{tpu_custom_call.1} parent=1 // pred_check
      _
    $region19: #{tpu_custom_call.1} parent=1 // pred_check_branch
      %60 = sbr.rel (0) target = $region21
    $region20: #{tpu_custom_call.1} parent=1 // pred_region
      %s62 = ssub.s32 128, 128
      %63 = vsyncadd [#allocation9], %s62
      %s65 = sshll.u32 [#allocation8], 4
      %s66 = int_to_ptr.vmem [resolvable:$true] %s65
      %68 = dma.hbm_to_vmem [thread:$0]  %s4, 128, %s66, [#allocation9]
    $region21: #{tpu_custom_call.1} parent=1 // pred_fallthru
      _
    // Predicated region
    $region22: #{tpu_custom_call.1} parent=1 // pred_check
      _
    $region23: #{tpu_custom_call.1} parent=1 // pred_check_branch
      %70 = sbr.rel (0) target = $region25
    $region24: #{tpu_custom_call.1} parent=1 // pred_region
      %s72 = ssub.s32 40960, 40960
      %73 = vsyncadd [#allocation9], %s72
      %s74 = sshll.u32 [#allocation10], 4
      %s75 = int_to_ptr.vmem [resolvable:$true] %s74
      %80 = dma.hbm_to_vmem [thread:$0]  %s5, 40960, %s75, [#allocation9], 1280, 1280, 80
    $region25: #{tpu_custom_call.1} parent=1 // pred_fallthru
      _
    // Predicated region
    $region26: #{tpu_custom_call.1} parent=1 // pred_check
      _
    $region27: #{tpu_custom_call.1} parent=1 // pred_check_branch
      %82 = sbr.rel (0) target = $region29
    $region28: #{tpu_custom_call.1} parent=1 // pred_region
      %s84 = ssub.s32 40960, 40960
      %85 = vsyncadd [#allocation12], %s84
      %s86 = sshll.u32 [#allocation11], 4
      %s87 = int_to_ptr.vmem [resolvable:$true] %s86
      %92 = dma.hbm_to_vmem [thread:$0]  %s6, 40960, %s87, [#allocation12], 1280, 1280, 80
    $region29: #{tpu_custom_call.1} parent=1 // pred_fallthru
      _
    // Predicated region
    $region30: #{tpu_custom_call.1} parent=1 // pred_check
      _
    $region31: #{tpu_custom_call.1} parent=1 // pred_check_branch
      %94 = sbr.rel (0) target = $region33
    $region32: #{tpu_custom_call.1} parent=1 // pred_region
      _
    $region33: #{tpu_custom_call.1} parent=1 // pred_fallthru
      _
    // Predicated region
    $region34: #{tpu_custom_call.1} parent=1 // pred_check
      _
    $region35: #{tpu_custom_call.1} parent=1 // pred_check_branch
      %96 = sbr.rel (0) target = $region37
    $region36: #{tpu_custom_call.1} parent=1 // pred_region
      %s98 = ssub.s32 64, 64
      %99 = vsyncadd [#allocation12], %s98
      %s101 = sshll.u32 [#allocation13], 4
      %s102 = int_to_ptr.vmem [resolvable:$true] %s101
      %104 = dma.hbm_to_vmem [thread:$0]  %s8, 64, %s102, [#allocation12]
    $region37: #{tpu_custom_call.1} parent=1 // pred_fallthru
      _
    // Predicated region
    $region38: #{tpu_custom_call.1} parent=1 // pred_check
      _
    $region39: #{tpu_custom_call.1} parent=1 // pred_check_branch
      %106 = sbr.rel (0) target = $region41
    $region40: #{tpu_custom_call.1} parent=1 // pred_region
      %s108 = ssub.s32 256, 256
      %109 = vsyncadd [#allocation15], %s108
      %s110 = sshll.u32 [#allocation14], 4
      %s111 = int_to_ptr.vmem [resolvable:$true] %s110
      %116 = dma.hbm_to_vmem [thread:$0]  %s9, 256, %s111, [#allocation15], 128, 128, 8
    $region41: #{tpu_custom_call.1} parent=1 // pred_fallthru
      _
    // Predicated region
    $region42: #{tpu_custom_call.1} parent=1 // pred_check
      _
    $region43: #{tpu_custom_call.1} parent=1 // pred_check_branch
      %118 = sbr.rel (0) target = $region45
    $region44: #{tpu_custom_call.1} parent=1 // pred_region
      %s120 = ssub.s32 2048, 2048
      %121 = vsyncadd [#allocation15], %s120
      %s122 = sshll.u32 [#allocation16], 4
      %s123 = int_to_ptr.vmem [resolvable:$true] %s122
      %128 = dma.hbm_to_vmem [thread:$0]  %s10, 2048, %s123, [#allocation15], 128, 128, 8
    $region45: #{tpu_custom_call.1} parent=1 // pred_fallthru
      _
    // Predicated region
    $region46: #{tpu_custom_call.1} parent=1 // pred_check
      _
    $region47: #{tpu_custom_call.1} parent=1 // pred_check_branch
      %130 = sbr.rel (0) target = $region49
    $region48: #{tpu_custom_call.1} parent=1 // pred_region
      %s132 = ssub.s32 16, 16
      %133 = vsyncadd [#allocation18], %s132
      %s135 = sshll.u32 [#allocation17], 4
      %s136 = int_to_ptr.vmem [resolvable:$true] %s135
      %138 = dma.hbm_to_vmem [thread:$0]  %s11, 16, %s136, [#allocation18]
    $region49: #{tpu_custom_call.1} parent=1 // pred_fallthru
      _
    // Predicated region
    $region50: #{tpu_custom_call.1} parent=1 // pred_check
      _
    $region51: #{tpu_custom_call.1} parent=1 // pred_check_branch
      %140 = sbr.rel (0) target = $region53
    $region52: #{tpu_custom_call.1} parent=1 // pred_region
      %s142 = ssub.s32 1024, 1024
      %143 = vsyncadd [#allocation18], %s142
      %s144 = sshll.u32 [#allocation19], 4
      %s145 = int_to_ptr.vmem [resolvable:$true] %s144
      %150 = dma.hbm_to_vmem [thread:$0]  %s12, 1024, %s145, [#allocation18], 256, 256, 16
    $region53: #{tpu_custom_call.1} parent=1 // pred_fallthru
      _
    // Predicated region
    $region54: #{tpu_custom_call.1} parent=1 // pred_check
      _
    $region55: #{tpu_custom_call.1} parent=1 // pred_check_branch
      %152 = sbr.rel (0) target = $region57
    $region56: #{tpu_custom_call.1} parent=1 // pred_region
      %s154 = ssub.s32 4096, 4096
      %155 = vsyncadd [#allocation21], %s154
      %s156 = sshll.u32 [#allocation20], 4
      %s157 = int_to_ptr.vmem [resolvable:$true] %s156
      %162 = dma.hbm_to_vmem [thread:$0]  %s13, 4096, %s157, [#allocation21], 128, 128, 8
    $region57: #{tpu_custom_call.1} parent=1 // pred_fallthru
      _
    // Predicated region
    $region58: #{tpu_custom_call.1} parent=1 // pred_check
      _
    $region59: #{tpu_custom_call.1} parent=1 // pred_check_branch
      %164 = sbr.rel (0) target = $region61
    $region60: #{tpu_custom_call.1} parent=1 // pred_region
      %165 = dma.done [#allocation3], 128
    $region61: #{tpu_custom_call.1} parent=1 // pred_fallthru
      _
    // Predicated region
    $region62: #{tpu_custom_call.1} parent=1 // pred_check
      _
    $region63: #{tpu_custom_call.1} parent=1 // pred_check_branch
      %167 = sbr.rel (0) target = $region65
    $region64: #{tpu_custom_call.1} parent=1 // pred_region
      %168 = dma.done [#allocation6], 128
    $region65: #{tpu_custom_call.1} parent=1 // pred_fallthru
      _
    // Predicated region
    $region66: #{tpu_custom_call.1} parent=1 // pred_check
      _
    $region67: #{tpu_custom_call.1} parent=1 // pred_check_branch
      %170 = sbr.rel (0) target = $region69
    $region68: #{tpu_custom_call.1} parent=1 // pred_region
      %171 = dma.done [#allocation6], 16
    $region69: #{tpu_custom_call.1} parent=1 // pred_fallthru
      _
    // Predicated region
    $region70: #{tpu_custom_call.1} parent=1 // pred_check
      _
    $region71: #{tpu_custom_call.1} parent=1 // pred_check_branch
      %173 = sbr.rel (0) target = $region73
    $region72: #{tpu_custom_call.1} parent=1 // pred_region
      %174 = dma.done [#allocation9], 128
    $region73: #{tpu_custom_call.1} parent=1 // pred_fallthru
      _
    // Predicated region
    $region74: #{tpu_custom_call.1} parent=1 // pred_check
      _
    $region75: #{tpu_custom_call.1} parent=1 // pred_check_branch
      %176 = sbr.rel (0) target = $region77
    $region76: #{tpu_custom_call.1} parent=1 // pred_region
      %177 = dma.done [#allocation9], 40960
    $region77: #{tpu_custom_call.1} parent=1 // pred_fallthru
      _
    // Predicated region
    $region78: #{tpu_custom_call.1} parent=1 // pred_check
      _
    $region79: #{tpu_custom_call.1} parent=1 // pred_check_branch
      %179 = sbr.rel (0) target = $region81
    $region80: #{tpu_custom_call.1} parent=1 // pred_region
      %180 = dma.done [#allocation12], 40960
    $region81: #{tpu_custom_call.1} parent=1 // pred_fallthru
      _
    // Predicated region
    $region82: #{tpu_custom_call.1} parent=1 // pred_check
      _
    $region83: #{tpu_custom_call.1} parent=1 // pred_check_branch
      %182 = sbr.rel (0) target = $region85
    $region84: #{tpu_custom_call.1} parent=1 // pred_region
      %183 = dma.done [#allocation12], 64
    $region85: #{tpu_custom_call.1} parent=1 // pred_fallthru
      _
    // Predicated region
    $region86: #{tpu_custom_call.1} parent=1 // pred_check
      _
    $region87: #{tpu_custom_call.1} parent=1 // pred_check_branch
      %185 = sbr.rel (0) target = $region89
    $region88: #{tpu_custom_call.1} parent=1 // pred_region
      %186 = dma.done [#allocation15], 256
    $region89: #{tpu_custom_call.1} parent=1 // pred_fallthru
      _
    // Predicated region
    $region90: #{tpu_custom_call.1} parent=1 // pred_check
      _
    $region91: #{tpu_custom_call.1} parent=1 // pred_check_branch
      %188 = sbr.rel (0) target = $region93
    $region92: #{tpu_custom_call.1} parent=1 // pred_region
      %189 = dma.done [#allocation15], 2048
    $region93: #{tpu_custom_call.1} parent=1 // pred_fallthru
      _
    // Predicated region
    $region94: #{tpu_custom_call.1} parent=1 // pred_check
      _
    $region95: #{tpu_custom_call.1} parent=1 // pred_check_branch
      %191 = sbr.rel (0) target = $region97
    $region96: #{tpu_custom_call.1} parent=1 // pred_region
      %192 = dma.done [#allocation18], 16
    $region97: #{tpu_custom_call.1} parent=1 // pred_fallthru
      _
    // Predicated region
    $region98: #{tpu_custom_call.1} parent=1 // pred_check
      _
    $region99: #{tpu_custom_call.1} parent=1 // pred_check_branch
      %194 = sbr.rel (0) target = $region101
    $region100: #{tpu_custom_call.1} parent=1 // pred_region
      %195 = dma.done [#allocation18], 1024
    $region101: #{tpu_custom_call.1} parent=1 // pred_fallthru
      _
    // Predicated region
    $region102: #{tpu_custom_call.1} parent=1 // pred_check
      _
    $region103: #{tpu_custom_call.1} parent=1 // pred_check_branch
      %197 = sbr.rel (0) target = $region105
    $region104: #{tpu_custom_call.1} parent=1 // pred_region
      %198 = dma.done [#allocation21], 4096
    $region105: #{tpu_custom_call.1} parent=1 // pred_fallthru
      _
    %v199 = vld [vmem:[#allocation2] sm:$0xff]
    %v200 = vld [vmem:[#allocation5] sm:$0xff]
    %v201 = vld [vmem:[%s2] sm:$0xff]
    %v202 = vld [vmem:[%s2 + $0x8] sm:$0xff]
    %v203 = vld [vmem:[%s2 + $0x10] sm:$0xff]
    %v204 = vld [vmem:[%s2 + $0x18] sm:$0xff]
    %v205 = vld [vmem:[#allocation7] sm:$0x1]
    %v207 = vlaneseq
    %v208 = vshrl.u32 %v207, 7
    %v209 = vsub.s32 0, %v208
    %v210 = vrot.slane %v205, %v209
    %vm212 = vcmask 261120
    %v214 = vsel %vm212, %v199, 0
    %v217 = vsel %vm212, %v200, 0
    %219 = vmatprep.subr.mxu0 0.0
    %220 = vmatpush1.msra.mxu0 %v201
    %221 = vmatprep.subr.mxu0 0.0
    %222 = vmatpush1.msra.mxu0 %v202
    %223 = vmatprep.subr.mxu0 0.0
    %224 = vmatpush1.msra.mxu0 %v203
    %225 = vmatprep.subr.mxu0 0.0
    %226 = vmatpush1.msra.mxu0 %v204
    %227 = vmatprep.subr.mxu0 0.0
    %228 = vmatpush1.msra.mxu0 0.0
    %229 = vmatprep.subr.mxu0 0.0
    %230 = vmatpush1.msra.mxu0 0.0
    %231 = vmatprep.subr.mxu0 0.0
    %232 = vmatpush1.msra.mxu0 0.0
    %233 = vmatprep.subr.mxu0 0.0
    %234 = vmatpush1.msra.mxu0 0.0
    %235 = vmatprep.subr.mxu0 0.0
    %236 = vmatpush1.msra.mxu0 0.0
    %237 = vmatprep.subr.mxu0 0.0
    %238 = vmatpush1.msra.mxu0 0.0
    %239 = vmatprep.subr.mxu0 0.0
    %240 = vmatpush1.msra.mxu0 0.0
    %241 = vmatprep.subr.mxu0 0.0
    %242 = vmatpush1.msra.mxu0 0.0
    %243 = vmatprep.subr.mxu0 0.0
    %244 = vmatpush1.msra.mxu0 0.0
    %245 = vmatprep.subr.mxu0 0.0
    %246 = vmatpush1.msra.mxu0 0.0
    %247 = vmatprep.subr.mxu0 0.0
    %248 = vmatpush1.msra.mxu0 0.0
    %249 = vmatprep.subr.mxu0 0.0
    %250 = vmatpush1.msra.mxu0 0.0
    %251 = vmatprep.subr.mxu0 0.0
    %252 = vmatpush1.msra.mxu0 0.0
    %253 = vmatprep.subr.mxu0 0.0
    %254 = vmatpush1.msra.mxu0 0.0
    %255 = vmatprep.subr.mxu0 0.0
    %256 = vmatpush1.msra.mxu0 0.0
    %257 = vmatprep.subr.mxu0 0.0
    %258 = vmatpush1.msra.mxu0 0.0
    %259 = vmatprep.subr.mxu0 0.0
    %260 = vmatpush1.msra.mxu0 0.0
    %261 = vmatprep.subr.mxu0 0.0
    %262 = vmatpush1.msra.mxu0 0.0
    %263 = vmatprep.subr.mxu0 0.0
    %264 = vmatpush1.msra.mxu0 0.0
    %265 = vmatprep.subr.mxu0 0.0
    %266 = vmatpush1.msra.mxu0 0.0
    %267 = vmatprep.subr.mxu0 0.0
    %268 = vmatpush1.msra.mxu0 0.0
    %269 = vmatprep.subr.mxu0 0.0
    %270 = vmatpush1.msra.mxu0 0.0
    %271 = vmatprep.subr.mxu0 0.0
    %272 = vmatpush1.msra.mxu0 0.0
    %273 = vmatprep.subr.mxu0 0.0
    %274 = vmatpush1.msra.mxu0 0.0
    %275 = vmatprep.subr.mxu0 0.0
    %276 = vmatpush1.msra.mxu0 0.0
    %277 = vmatprep.subr.mxu0 0.0
    %278 = vmatpush1.msra.mxu0 0.0
    %279 = vmatprep.subr.mxu0 0.0
    %280 = vmatpush1.msra.mxu0 0.0
    %281 = vmatprep.subr.mxu0 0.0
    %282 = vmatpush1.msra.mxu0 0.0
    %283 = vmatprep.mubr.f32.mxu0 0.0
    %284 = vmatmul.mubr.f32.gmra.mrb[0].mxu0 %v214
    %v285 = vpop.f32.mrb[0].mxu0
    %v286 = vadd.f32 %v210, %v285
    %v287 = vpop.f32.mrb[0].mxu0
    %288 = vmatprep.mubr.f32.mxu0 0.0
    %289 = vmatmul.mubr.f32.gmra.mrb[0].mxu0 %v217
    %v290 = vpop.f32.mrb[0].mxu0
    %v291 = vadd.f32 %v210, %v290
    %v292 = vpop.f32.mrb[0].mxu0
    %293 = vdwg.mxu0
    %v294 = vmul.f32 %v286, 0.5
    %v295 = vand.u32 2147483647, %v294
    %vm296 = vcmp.le.f32.partialorder %v295, 0.7853982
    %vm297 = vcmp.lt.s32.totalorder %v294, 0
    %v298 = vand.u32 %v294, 2139095040
    %v299 = vshrl.u32 %v298, 23
    %v300 = vsub.s32 %v299, 127
    %v301 = vand.u32 2147483647, %v294
    %v302 = vand.u32 %v301, 8388607
    %v303 = vor.u32 %v302, 8388608
    %v304 = vsub.s32 0, %v303
    %v305 = vadd.s32 %v300, 1
    %vm306 = vcmp.gt.s32.totalorder %v305, 0
    %v307 = vsel %vm306, %v305, 0
    %v308 = vshrl.u32 %v307, 5
    %v309 = vand.u32 %v307, 31
    %v310 = vsub.s32 32, %v309
    %v311 = vshrl.u32 683565275, %v310
    %v312 = vshll.u32 683565275, %v309
    %v313 = vshrl.u32 2475754826, %v310
    %v314 = vor.u32 %v312, %v313
    %v315 = vshll.u32 2475754826, %v309
    %v316 = vshrl.u32 2131351028, %v310
    %v317 = vor.u32 %v315, %v316
    %v318 = vshll.u32 2131351028, %v309
    %v319 = vshrl.u32 2102212464, %v310
    %v320 = vor.u32 %v318, %v319
    %v321 = vshll.u32 2102212464, %v309
    %v322 = vshrl.u32 920167782, %v310
    %v323 = vor.u32 %v321, %v322
    %v324 = vshll.u32 920167782, %v309
    %v325 = vshrl.u32 1326507024, %v310
    %v326 = vor.u32 %v324, %v325
    %vm327 = vcmp.lt.s32.totalorder %v308, 1
    %vm328 = vcmp.lt.s32.totalorder %v308, 2
    %vm329 = vcmp.lt.s32.totalorder %v308, 3
    %vm330 = vcmp.lt.s32.totalorder %v308, 4
    %v331 = vsel %vm327, %v311, %v314
    %v332 = vsel %vm330, %v320, 2102212464
    %v333 = vsel %vm329, %v317, %v332
    %v334 = vsel %vm328, %v331, %v333
    %v335 = vsel %vm327, %v314, %v317
    %v336 = vsel %vm330, %v323, 920167782
    %v337 = vsel %vm329, %v320, %v336
    %v338 = vsel %vm328, %v335, %v337
    %v339 = vsel %vm327, %v317, %v320
    %v340 = vsel %vm330, %v326, 1326507024
    %v341 = vsel %vm329, %v323, %v340
    %v342 = vsel %vm328, %v339, %v341
    %v343 = vshll.u32 %v303, 8
    %v344 = vmul.u32.u64.compose %v343, %v342
    %v345 = vextract.low.u32 %v344
    %v346 = vextract.high.u32 %v344
    %v347 = vmul.u32.u64.compose %v343, %v338
    %v348 = vextract.low.u32 %v347
    %v349 = vextract.high.u32 %v347
    %v350 = vmul.u32 %v343, %v334
    %v351 = vadd.s32 %v346, %v348
    %vm352 = vc.u32 %v346, %v348
    %v353 = vadd.s32 %v349, 1
    %v354 = vsel %vm352, %v353, %v349
    %v355 = vadd.s32 %v350, %v354
    %v356 = vadd.s32 %v355, 536870912
    %v357 = vshrl.u32 %v356, 30
    %v358 = vshll.u32 %v357, 30
    %v359 = vsub.s32 %v355, %v358
    %vm360 = vcmp.lt.s32.totalorder %v359, 0
    %v361 = vsub.s32 0, %v359
    %v362 = vsel %vm360, %v361, %v359
    %v363 = vclz %v362
    %v364 = vsub.s32 %v363, 2
    %vm365 = vcmp.gt.s32.totalorder 0, %v364
    %v366 = vsel %vm365, 0, %v364
    %v367 = vsub.s32 32, %v366
    %v368 = vshll.u32 %v359, %v366
    %v369 = vshrl.u32 %v351, %v367
    %v370 = vor.u32 %v368, %v369
    %v371 = vsub.s32 4294967266, %v366
    %v372 = vadd.s32 %v371, 127
    %v373 = vshll.u32 %v372, 23
    %v374 = vor.u32 4788187, %v373
    %v375 = vand.u32 2147483647, %v374
    %v377 = vcvt.s32.f32 %v370
    %v378 = vmul.f32 %v377, %v375
    %v379 = vxor.u32 %v378, 2147483648
    %v380 = vsel %vm297, %v379, %v378
    %v381 = vsub.s32 4, %v357
    %v382 = vsel %vm297, %v381, %v357
    %v383 = vsel %vm296, %v294, %v380
    %v384 = vsel %vm296, 0, %v382
    %v385 = vcosq.f32.pop %v383
    %v386 = vsinq.f32.pop %v383
    %vm387 = vweird.f32 %v294
    %v388 = vand.u32 %v384, 3
    %vm389 = vcmp.lt.s32.totalorder %v388, 2
    %vm390 = vcmp.eq.s32.totalorder %v388, 0
    %v391 = vxor.u32 %v386, 2147483648
    %v392 = vsel %vm390, %v385, %v391
    %vm393 = vcmp.eq.s32.totalorder %v388, 2
    %v394 = vxor.u32 %v385, 2147483648
    %v395 = vsel %vm393, %v394, %v386
    %v396 = vsel %vm389, %v392, %v395
    %v397 = vsel %vm387, nan, %v396
    %v398 = vand.u32 2147483647, %v294
    %vm399 = vcmp.le.f32.partialorder %v398, 0.7853982
    %vm400 = vcmp.lt.s32.totalorder %v294, 0
    %v401 = vand.u32 %v294, 2139095040
    %v402 = vshrl.u32 %v401, 23
    %v403 = vsub.s32 %v402, 127
    %v404 = vand.u32 2147483647, %v294
    %v405 = vand.u32 %v404, 8388607
    %v406 = vor.u32 %v405, 8388608
    %v407 = vsub.s32 0, %v406
    %v408 = vadd.s32 %v403, 1
    %vm409 = vcmp.gt.s32.totalorder %v408, 0
    %v410 = vsel %vm409, %v408, 0
    %v411 = vshrl.u32 %v410, 5
    %v412 = vand.u32 %v410, 31
    %v413 = vsub.s32 32, %v412
    %v414 = vshrl.u32 683565275, %v413
    %v415 = vshll.u32 683565275, %v412
    %v416 = vshrl.u32 2475754826, %v413
    %v417 = vor.u32 %v415, %v416
    %v418 = vshll.u32 2475754826, %v412
    %v419 = vshrl.u32 2131351028, %v413
    %v420 = vor.u32 %v418, %v419
    %v421 = vshll.u32 2131351028, %v412
    %v422 = vshrl.u32 2102212464, %v413
    %v423 = vor.u32 %v421, %v422
    %v424 = vshll.u32 2102212464, %v412
    %v425 = vshrl.u32 920167782, %v413
    %v426 = vor.u32 %v424, %v425
    %v427 = vshll.u32 920167782, %v412
    %v428 = vshrl.u32 1326507024, %v413
    %v429 = vor.u32 %v427, %v428
    %vm430 = vcmp.lt.s32.totalorder %v411, 1
    %vm431 = vcmp.lt.s32.totalorder %v411, 2
    %vm432 = vcmp.lt.s32.totalorder %v411, 3
    %vm433 = vcmp.lt.s32.totalorder %v411, 4
    %v434 = vsel %vm430, %v414, %v417
    %v435 = vsel %vm433, %v423, 2102212464
    %v436 = vsel %vm432, %v420, %v435
    %v437 = vsel %vm431, %v434, %v436
    %v438 = vsel %vm430, %v417, %v420
    %v439 = vsel %vm433, %v426, 920167782
    %v440 = vsel %vm432, %v423, %v439
    %v441 = vsel %vm431, %v438, %v440
    %v442 = vsel %vm430, %v420, %v423
    %v443 = vsel %vm433, %v429, 1326507024
    %v444 = vsel %vm432, %v426, %v443
    %v445 = vsel %vm431, %v442, %v444
    %v446 = vshll.u32 %v406, 8
    %v447 = vmul.u32.u64.compose %v446, %v445
    %v448 = vextract.low.u32 %v447
    %v449 = vextract.high.u32 %v447
    %v450 = vmul.u32.u64.compose %v446, %v441
    %v451 = vextract.low.u32 %v450
    %v452 = vextract.high.u32 %v450
    %v453 = vmul.u32 %v446, %v437
    %v454 = vadd.s32 %v449, %v451
    %vm455 = vc.u32 %v449, %v451
    %v456 = vadd.s32 %v452, 1
    %v457 = vsel %vm455, %v456, %v452
    %v458 = vadd.s32 %v453, %v457
    %v459 = vadd.s32 %v458, 536870912
    %v460 = vshrl.u32 %v459, 30
    %v461 = vshll.u32 %v460, 30
    %v462 = vsub.s32 %v458, %v461
    %vm463 = vcmp.lt.s32.totalorder %v462, 0
    %v464 = vsub.s32 0, %v462
    %v465 = vsel %vm463, %v464, %v462
    %v466 = vclz %v465
    %v467 = vsub.s32 %v466, 2
    %vm468 = vcmp.gt.s32.totalorder 0, %v467
    %v469 = vsel %vm468, 0, %v467
    %v470 = vsub.s32 32, %v469
    %v471 = vshll.u32 %v462, %v469
    %v472 = vshrl.u32 %v454, %v470
    %v473 = vor.u32 %v471, %v472
    %v474 = vsub.s32 4294967266, %v469
    %v475 = vadd.s32 %v474, 127
    %v476 = vshll.u32 %v475, 23
    %v477 = vor.u32 4788187, %v476
    %v478 = vand.u32 2147483647, %v477
    %v480 = vcvt.s32.f32 %v473
    %v481 = vmul.f32 %v480, %v478
    %v482 = vxor.u32 %v481, 2147483648
    %v483 = vsel %vm400, %v482, %v481
    %v484 = vsub.s32 4, %v460
    %v485 = vsel %vm400, %v484, %v460
    %v486 = vsel %vm399, %v294, %v483
    %v487 = vsel %vm399, 0, %v485
    %v488 = vcosq.f32.pop %v486
    %v489 = vsinq.f32.pop %v486
    %vm490 = vweird.f32 %v294
    %v491 = vadd.s32 %v487, 3
    %v492 = vand.u32 %v491, 3
    %vm493 = vcmp.lt.s32.totalorder %v492, 2
    %vm494 = vcmp.eq.s32.totalorder %v492, 0
    %v495 = vxor.u32 %v489, 2147483648
    %v496 = vsel %vm494, %v488, %v495
    %vm497 = vcmp.eq.s32.totalorder %v492, 2
    %v498 = vxor.u32 %v488, 2147483648
    %v499 = vsel %vm497, %v498, %v489
    %v500 = vsel %vm493, %v496, %v499
    %v501 = vsel %vm490, nan, %v500
    %v502 = vsub.f32 %v501, %v397
    %v503 = vmul.f32 %v291, 0.5
    %v504 = vand.u32 2147483647, %v503
    %vm505 = vcmp.le.f32.partialorder %v504, 0.7853982
    %vm506 = vcmp.lt.s32.totalorder %v503, 0
    %v507 = vand.u32 %v503, 2139095040
    %v508 = vshrl.u32 %v507, 23
    %v509 = vsub.s32 %v508, 127
    %v510 = vand.u32 2147483647, %v503
    %v511 = vand.u32 %v510, 8388607
    %v512 = vor.u32 %v511, 8388608
    %v513 = vsub.s32 0, %v512
    %v514 = vadd.s32 %v509, 1
    %vm515 = vcmp.gt.s32.totalorder %v514, 0
    %v516 = vsel %vm515, %v514, 0
    %v517 = vshrl.u32 %v516, 5
    %v518 = vand.u32 %v516, 31
    %v519 = vsub.s32 32, %v518
    %v520 = vshrl.u32 683565275, %v519
    %v521 = vshll.u32 683565275, %v518
    %v522 = vshrl.u32 2475754826, %v519
    %v523 = vor.u32 %v521, %v522
    %v524 = vshll.u32 2475754826, %v518
    %v525 = vshrl.u32 2131351028, %v519
    %v526 = vor.u32 %v524, %v525
    %v527 = vshll.u32 2131351028, %v518
    %v528 = vshrl.u32 2102212464, %v519
    %v529 = vor.u32 %v527, %v528
    %v530 = vshll.u32 2102212464, %v518
    %v531 = vshrl.u32 920167782, %v519
    %v532 = vor.u32 %v530, %v531
    %v533 = vshll.u32 920167782, %v518
    %v534 = vshrl.u32 1326507024, %v519
    %v535 = vor.u32 %v533, %v534
    %vm536 = vcmp.lt.s32.totalorder %v517, 1
    %vm537 = vcmp.lt.s32.totalorder %v517, 2
    %vm538 = vcmp.lt.s32.totalorder %v517, 3
    %vm539 = vcmp.lt.s32.totalorder %v517, 4
    %v540 = vsel %vm536, %v520, %v523
    %v541 = vsel %vm539, %v529, 2102212464
    %v542 = vsel %vm538, %v526, %v541
    %v543 = vsel %vm537, %v540, %v542
    %v544 = vsel %vm536, %v523, %v526
    %v545 = vsel %vm539, %v532, 920167782
    %v546 = vsel %vm538, %v529, %v545
    %v547 = vsel %vm537, %v544, %v546
    %v548 = vsel %vm536, %v526, %v529
    %v549 = vsel %vm539, %v535, 1326507024
    %v550 = vsel %vm538, %v532, %v549
    %v551 = vsel %vm537, %v548, %v550
    %v552 = vshll.u32 %v512, 8
    %v553 = vmul.u32.u64.compose %v552, %v551
    %v554 = vextract.low.u32 %v553
    %v555 = vextract.high.u32 %v553
    %v556 = vmul.u32.u64.compose %v552, %v547
    %v557 = vextract.low.u32 %v556
    %v558 = vextract.high.u32 %v556
    %v559 = vmul.u32 %v552, %v543
    %v560 = vadd.s32 %v555, %v557
    %vm561 = vc.u32 %v555, %v557
    %v562 = vadd.s32 %v558, 1
    %v563 = vsel %vm561, %v562, %v558
    %v564 = vadd.s32 %v559, %v563
    %v565 = vadd.s32 %v564, 536870912
    %v566 = vshrl.u32 %v565, 30
    %v567 = vshll.u32 %v566, 30
    %v568 = vsub.s32 %v564, %v567
    %vm569 = vcmp.lt.s32.totalorder %v568, 0
    %v570 = vsub.s32 0, %v568
    %v571 = vsel %vm569, %v570, %v568
    %v572 = vclz %v571
    %v573 = vsub.s32 %v572, 2
    %vm574 = vcmp.gt.s32.totalorder 0, %v573
    %v575 = vsel %vm574, 0, %v573
    %v576 = vsub.s32 32, %v575
    %v577 = vshll.u32 %v568, %v575
    %v578 = vshrl.u32 %v560, %v576
    %v579 = vor.u32 %v577, %v578
    %v580 = vsub.s32 4294967266, %v575
    %v581 = vadd.s32 %v580, 127
    %v582 = vshll.u32 %v581, 23
    %v583 = vor.u32 4788187, %v582
    %v584 = vand.u32 2147483647, %v583
    %v586 = vcvt.s32.f32 %v579
    %v587 = vmul.f32 %v586, %v584
    %v588 = vxor.u32 %v587, 2147483648
    %v589 = vsel %vm506, %v588, %v587
    %v590 = vsub.s32 4, %v566
    %v591 = vsel %vm506, %v590, %v566
    %v592 = vsel %vm505, %v503, %v589
    %v593 = vsel %vm505, 0, %v591
    %v594 = vcosq.f32.pop %v592
    %v595 = vsinq.f32.pop %v592
    %vm596 = vweird.f32 %v503
    %v597 = vand.u32 %v593, 3
    %vm598 = vcmp.lt.s32.totalorder %v597, 2
    %vm599 = vcmp.eq.s32.totalorder %v597, 0
    %v600 = vxor.u32 %v595, 2147483648
    %v601 = vsel %vm599, %v594, %v600
    %vm602 = vcmp.eq.s32.totalorder %v597, 2
    %v603 = vxor.u32 %v594, 2147483648
    %v604 = vsel %vm602, %v603, %v595
    %v605 = vsel %vm598, %v601, %v604
    %v606 = vsel %vm596, nan, %v605
    %v607 = vand.u32 2147483647, %v503
    %vm608 = vcmp.le.f32.partialorder %v607, 0.7853982
    %vm609 = vcmp.lt.s32.totalorder %v503, 0
    %v610 = vand.u32 %v503, 2139095040
    %v611 = vshrl.u32 %v610, 23
    %v612 = vsub.s32 %v611, 127
    %v613 = vand.u32 2147483647, %v503
    %v614 = vand.u32 %v613, 8388607
    %v615 = vor.u32 %v614, 8388608
    %v616 = vsub.s32 0, %v615
    %v617 = vadd.s32 %v612, 1
    %vm618 = vcmp.gt.s32.totalorder %v617, 0
    %v619 = vsel %vm618, %v617, 0
    %v620 = vshrl.u32 %v619, 5
    %v621 = vand.u32 %v619, 31
    %v622 = vsub.s32 32, %v621
    %v623 = vshrl.u32 683565275, %v622
    %v624 = vshll.u32 683565275, %v621
    %v625 = vshrl.u32 2475754826, %v622
    %v626 = vor.u32 %v624, %v625
    %v627 = vshll.u32 2475754826, %v621
    %v628 = vshrl.u32 2131351028, %v622
    %v629 = vor.u32 %v627, %v628
    %v630 = vshll.u32 2131351028, %v621
    %v631 = vshrl.u32 2102212464, %v622
    %v632 = vor.u32 %v630, %v631
    %v633 = vshll.u32 2102212464, %v621
    %v634 = vshrl.u32 920167782, %v622
    %v635 = vor.u32 %v633, %v634
    %v636 = vshll.u32 920167782, %v621
    %v637 = vshrl.u32 1326507024, %v622
    %v638 = vor.u32 %v636, %v637
    %vm639 = vcmp.lt.s32.totalorder %v620, 1
    %vm640 = vcmp.lt.s32.totalorder %v620, 2
    %vm641 = vcmp.lt.s32.totalorder %v620, 3
    %vm642 = vcmp.lt.s32.totalorder %v620, 4
    %v643 = vsel %vm639, %v623, %v626
    %v644 = vsel %vm642, %v632, 2102212464
    %v645 = vsel %vm641, %v629, %v644
    %v646 = vsel %vm640, %v643, %v645
    %v647 = vsel %vm639, %v626, %v629
    %v648 = vsel %vm642, %v635, 920167782
    %v649 = vsel %vm641, %v632, %v648
    %v650 = vsel %vm640, %v647, %v649
    %v651 = vsel %vm639, %v629, %v632
    %v652 = vsel %vm642, %v638, 1326507024
    %v653 = vsel %vm641, %v635, %v652
    %v654 = vsel %vm640, %v651, %v653
    %v655 = vshll.u32 %v615, 8
    %v656 = vmul.u32.u64.compose %v655, %v654
    %v657 = vextract.low.u32 %v656
    %v658 = vextract.high.u32 %v656
    %v659 = vmul.u32.u64.compose %v655, %v650
    %v660 = vextract.low.u32 %v659
    %v661 = vextract.high.u32 %v659
    %v662 = vmul.u32 %v655, %v646
    %v663 = vadd.s32 %v658, %v660
    %vm664 = vc.u32 %v658, %v660
    %v665 = vadd.s32 %v661, 1
    %v666 = vsel %vm664, %v665, %v661
    %v667 = vadd.s32 %v662, %v666
    %v668 = vadd.s32 %v667, 536870912
    %v669 = vshrl.u32 %v668, 30
    %v670 = vshll.u32 %v669, 30
    %v671 = vsub.s32 %v667, %v670
    %vm672 = vcmp.lt.s32.totalorder %v671, 0
    %v673 = vsub.s32 0, %v671
    %v674 = vsel %vm672, %v673, %v671
    %v675 = vclz %v674
    %v676 = vsub.s32 %v675, 2
    %vm677 = vcmp.gt.s32.totalorder 0, %v676
    %v678 = vsel %vm677, 0, %v676
    %v679 = vsub.s32 32, %v678
    %v680 = vshll.u32 %v671, %v678
    %v681 = vshrl.u32 %v663, %v679
    %v682 = vor.u32 %v680, %v681
    %v683 = vsub.s32 4294967266, %v678
    %v684 = vadd.s32 %v683, 127
    %v685 = vshll.u32 %v684, 23
    %v686 = vor.u32 4788187, %v685
    %v687 = vand.u32 2147483647, %v686
    %v689 = vcvt.s32.f32 %v682
    %v690 = vmul.f32 %v689, %v687
    %v691 = vxor.u32 %v690, 2147483648
    %v692 = vsel %vm609, %v691, %v690
    %v693 = vsub.s32 4, %v669
    %v694 = vsel %vm609, %v693, %v669
    %v695 = vsel %vm608, %v503, %v692
    %v696 = vsel %vm608, 0, %v694
    %v697 = vcosq.f32.pop %v695
    %v698 = vsinq.f32.pop %v695
    %vm699 = vweird.f32 %v503
    %v700 = vadd.s32 %v696, 3
    %v701 = vand.u32 %v700, 3
    %vm702 = vcmp.lt.s32.totalorder %v701, 2
    %vm703 = vcmp.eq.s32.totalorder %v701, 0
    %v704 = vxor.u32 %v698, 2147483648
    %v705 = vsel %vm703, %v697, %v704
    %vm706 = vcmp.eq.s32.totalorder %v701, 2
    %v707 = vxor.u32 %v697, 2147483648
    %v708 = vsel %vm706, %v707, %v698
    %v709 = vsel %vm702, %v705, %v708
    %v710 = vsel %vm699, nan, %v709
    %v711 = vsub.f32 %v710, %v606
    %v712 = vld [vmem:[#allocation13] sm:$0x1]
    %714 = vset.pattern.permute.xlu0 0
    %715 = vperm.xlu0 %714, %v711
    %v716 = vpop.permute.xlu0 %715
    %v718 = vlaneseq
    %v719 = vshrl.u32 %v718, 7
    %v720 = vsub.s32 0, %v719
    %v721 = vrot.slane %v712, %v720
    %v722 = vmul.f32 %v716, %v721
    %724 = vset.pattern.permute.xlu0 0
    %725 = vperm.xlu0 %724, %v606
    %v726 = vpop.permute.xlu0 %725
    %v728 = vadd.f32 %v726, %v722
    %v729 = vld [vmem:[#allocation13 + $0x1] sm:$0x1]
    %730 = vset.pattern.permute.xlu0 1
    %731 = vperm.xlu0 %730, %v711
    %v732 = vpop.permute.xlu0 %731
    %v734 = vlaneseq
    %v735 = vshrl.u32 %v734, 7
    %v736 = vsub.s32 0, %v735
    %v737 = vrot.slane %v729, %v736
    %v738 = vmul.f32 %v732, %v737
    %739 = vset.pattern.permute.xlu0 1
    %740 = vperm.xlu0 %739, %v606
    %v741 = vpop.permute.xlu0 %740
    %v743 = vadd.f32 %v741, %v738
    %v744 = vmul.f32 %v728, %v743
    %v745 = vld [vmem:[#allocation13 + $0x2] sm:$0x1]
    %746 = vset.pattern.permute.xlu0 2
    %747 = vperm.xlu0 %746, %v711
    %v748 = vpop.permute.xlu0 %747
    %v750 = vlaneseq
    %v751 = vshrl.u32 %v750, 7
    %v752 = vsub.s32 0, %v751
    %v753 = vrot.slane %v745, %v752
    %v754 = vmul.f32 %v748, %v753
    %755 = vset.pattern.permute.xlu0 2
    %756 = vperm.xlu0 %755, %v606
    %v757 = vpop.permute.xlu0 %756
    %v759 = vadd.f32 %v757, %v754
    %v760 = vmul.f32 %v744, %v759
    %v761 = vld [vmem:[#allocation13 + $0x3] sm:$0x1]
    %762 = vset.pattern.permute.xlu0 3
    %763 = vperm.xlu0 %762, %v711
    %v764 = vpop.permute.xlu0 %763
    %v766 = vlaneseq
    %v767 = vshrl.u32 %v766, 7
    %v768 = vsub.s32 0, %v767
    %v769 = vrot.slane %v761, %v768
    %v770 = vmul.f32 %v764, %v769
    %771 = vset.pattern.permute.xlu0 3
    %772 = vperm.xlu0 %771, %v606
    %v773 = vpop.permute.xlu0 %772
    %v775 = vadd.f32 %v773, %v770
    %v776 = vmul.f32 %v760, %v775
    %v777 = vld [vmem:[#allocation8] ss:$4 sm:$0x3]
    %779 = vset.pattern.permute.xlu0 0
    %780 = vperm.xlu0 %779, %v502
    %v781 = vpop.permute.xlu0 %780
    %v784 = vlaneseq
    %v785 = vshrl.u32 %v784, 7
    %v786 = vsub.s32 0, %v785
    %v787 = vrot.slane %v777, %v786
    %v788 = vlaneseq
    %v789 = vshrl.u32 %v788, 7
    %v790 = vsub.s32 1, %v789
    %v791 = vrot.slane %v777, %v790
    %v794 = vmul.f32 %v781, %v787
    %v795 = vmul.f32 %v781, %v791
    %797 = vset.pattern.permute.xlu0 0
    %798 = vperm.xlu0 %797, %v397
    %v799 = vpop.permute.xlu0 %798
    %v801 = vadd.f32 %v799, %v794
    %v802 = vadd.f32 %v799, %v795
    %s803 = scalar_lea.vmem [#allocation8], 1
    %v804 = vld [vmem:[%s803] ss:$4 sm:$0x3]
    %805 = vset.pattern.permute.xlu0 1
    %806 = vperm.xlu0 %805, %v502
    %v807 = vpop.permute.xlu0 %806
    %v810 = vlaneseq
    %v811 = vshrl.u32 %v810, 7
    %v812 = vsub.s32 0, %v811
    %v813 = vrot.slane %v804, %v812
    %v814 = vlaneseq
    %v815 = vshrl.u32 %v814, 7
    %v816 = vsub.s32 1, %v815
    %v817 = vrot.slane %v804, %v816
    %v820 = vmul.f32 %v807, %v813
    %v821 = vmul.f32 %v807, %v817
    %822 = vset.pattern.permute.xlu0 1
    %823 = vperm.xlu0 %822, %v397
    %v824 = vpop.permute.xlu0 %823
    %v826 = vadd.f32 %v824, %v820
    %v827 = vadd.f32 %v824, %v821
    %v828 = vmul.f32 %v801, %v826
    %v829 = vmul.f32 %v802, %v827
    %s830 = scalar_lea.vmem [#allocation8], 2
    %v831 = vld [vmem:[%s830] ss:$4 sm:$0x3]
    %832 = vset.pattern.permute.xlu0 2
    %833 = vperm.xlu0 %832, %v502
    %v834 = vpop.permute.xlu0 %833
    %v837 = vlaneseq
    %v838 = vshrl.u32 %v837, 7
    %v839 = vsub.s32 0, %v838
    %v840 = vrot.slane %v831, %v839
    %v841 = vlaneseq
    %v842 = vshrl.u32 %v841, 7
    %v843 = vsub.s32 1, %v842
    %v844 = vrot.slane %v831, %v843
    %v847 = vmul.f32 %v834, %v840
    %v848 = vmul.f32 %v834, %v844
    %849 = vset.pattern.permute.xlu0 2
    %850 = vperm.xlu0 %849, %v397
    %v851 = vpop.permute.xlu0 %850
    %v853 = vadd.f32 %v851, %v847
    %v854 = vadd.f32 %v851, %v848
    %v855 = vmul.f32 %v828, %v853
    %v856 = vmul.f32 %v829, %v854
    %s857 = scalar_lea.vmem [#allocation8], 3
    %v858 = vld [vmem:[%s857] ss:$4 sm:$0x3]
    %859 = vset.pattern.permute.xlu0 3
    %860 = vperm.xlu0 %859, %v502
    %v861 = vpop.permute.xlu0 %860
    %v864 = vlaneseq
    %v865 = vshrl.u32 %v864, 7
    %v866 = vsub.s32 0, %v865
    %v867 = vrot.slane %v858, %v866
    %v868 = vlaneseq
    %v869 = vshrl.u32 %v868, 7
    %v870 = vsub.s32 1, %v869
    %v871 = vrot.slane %v858, %v870
    %v874 = vmul.f32 %v861, %v867
    %v875 = vmul.f32 %v861, %v871
    %876 = vset.pattern.permute.xlu0 3
    %877 = vperm.xlu0 %876, %v397
    %v878 = vpop.permute.xlu0 %877
    %v880 = vadd.f32 %v878, %v874
    %v881 = vadd.f32 %v878, %v875
    %v882 = vmul.f32 %v855, %v880
    %v883 = vmul.f32 %v856, %v881
    %885 = vrot.lane.b32.xlu0 %v776, 16
    %v886 = vpop.permute.xlu0 %885
    %888 = vrot.lane.b32.xlu0 %v776, 32
    %v889 = vpop.permute.xlu0 %888
    %891 = vrot.lane.b32.xlu0 %v776, 48
    %v892 = vpop.permute.xlu0 %891
    %894 = vrot.lane.b32.xlu0 %v776, 64
    %v895 = vpop.permute.xlu0 %894
    %897 = vrot.lane.b32.xlu0 %v776, 80
    %v898 = vpop.permute.xlu0 %897
    %900 = vrot.lane.b32.xlu0 %v776, 96
    %v901 = vpop.permute.xlu0 %900
    %903 = vrot.lane.b32.xlu0 %v776, 112
    %v904 = vpop.permute.xlu0 %903
    %vm906 = vcmask 130048
    %v907 = vsel %vm906, %v776, %v886
    %v908 = vsel %vm212, %v907, %v889
    %vm909 = vcmask 392192
    %v910 = vsel %vm909, %v908, %v892
    %vm911 = vcmask 523264
    %v912 = vsel %vm911, %v910, %v895
    %vm913 = vcmask 654336
    %v914 = vsel %vm913, %v912, %v898
    %vm915 = vcmask 785408
    %v916 = vsel %vm915, %v914, %v901
    %vm917 = vcmask 916480
    %v918 = vsel %vm917, %v916, %v904
    %v919 = vmul.f32 %v882, %v918
    %v920 = vmul.f32 %v883, %v918
    %v921 = vld [vmem:[#allocation10] sm:$0xff]
    %v922 = vld [vmem:[#allocation10 + $0x8] sm:$0xff]
    %v923 = vld [vmem:[#allocation10 + $0x10] sm:$0xff]
    %v924 = vld [vmem:[#allocation10 + $0x18] sm:$0xff]
    %v925 = vld [vmem:[#allocation10 + $0x20] sm:$0xff]
    %v926 = vld [vmem:[#allocation10 + $0x28] sm:$0xff]
    %v927 = vld [vmem:[#allocation10 + $0x30] sm:$0xff]
    %v928 = vld [vmem:[#allocation10 + $0x38] sm:$0xff]
    %v929 = vld [vmem:[#allocation10 + $0x40] sm:$0xff]
    %v930 = vld [vmem:[#allocation10 + $0x48] sm:$0xff]
    %v931 = vld [vmem:[#allocation10 + $0x50] sm:$0xff]
    %v932 = vld [vmem:[#allocation10 + $0x58] sm:$0xff]
    %v933 = vld [vmem:[#allocation10 + $0x60] sm:$0xff]
    %v934 = vld [vmem:[#allocation10 + $0x68] sm:$0xff]
    %v935 = vld [vmem:[#allocation10 + $0x70] sm:$0xff]
    %v936 = vld [vmem:[#allocation10 + $0x78] sm:$0xff]
    %v937 = vld [vmem:[#allocation10 + $0x80] sm:$0xff]
    %v938 = vld [vmem:[#allocation10 + $0x88] sm:$0xff]
    %v939 = vld [vmem:[#allocation10 + $0x90] sm:$0xff]
    %v940 = vld [vmem:[#allocation10 + $0x98] sm:$0xff]
    %v941 = vld [vmem:[#allocation10 + $0xa0] sm:$0xff]
    %v942 = vld [vmem:[#allocation10 + $0xa8] sm:$0xff]
    %v943 = vld [vmem:[#allocation10 + $0xb0] sm:$0xff]
    %v944 = vld [vmem:[#allocation10 + $0xb8] sm:$0xff]
    %v945 = vld [vmem:[#allocation10 + $0xc0] sm:$0xff]
    %v946 = vld [vmem:[#allocation10 + $0xc8] sm:$0xff]
    %v947 = vld [vmem:[#allocation10 + $0xd0] sm:$0xff]
    %v948 = vld [vmem:[#allocation10 + $0xd8] sm:$0xff]
    %v949 = vld [vmem:[#allocation10 + $0xe0] sm:$0xff]
    %v950 = vld [vmem:[#allocation10 + $0xe8] sm:$0xff]
    %v951 = vld [vmem:[#allocation10 + $0xf0] sm:$0xff]
    %v952 = vld [vmem:[#allocation10 + $0xf8] sm:$0xff]
    %v953 = vld [vmem:[#allocation10 + $0x100] sm:$0xff]
    %v954 = vld [vmem:[#allocation10 + $0x108] sm:$0xff]
    %v955 = vld [vmem:[#allocation10 + $0x110] sm:$0xff]
    %v956 = vld [vmem:[#allocation10 + $0x118] sm:$0xff]
    %v957 = vld [vmem:[#allocation10 + $0x120] sm:$0xff]
    %v958 = vld [vmem:[#allocation10 + $0x128] sm:$0xff]
    %v959 = vld [vmem:[#allocation10 + $0x130] sm:$0xff]
    %v960 = vld [vmem:[#allocation10 + $0x138] sm:$0xff]
    %v961 = vld [vmem:[#allocation10 + $0x140] sm:$0xff]
    %v962 = vld [vmem:[#allocation10 + $0x148] sm:$0xff]
    %v963 = vld [vmem:[#allocation10 + $0x150] sm:$0xff]
    %v964 = vld [vmem:[#allocation10 + $0x158] sm:$0xff]
    %v965 = vld [vmem:[#allocation10 + $0x160] sm:$0xff]
    %v966 = vld [vmem:[#allocation10 + $0x168] sm:$0xff]
    %v967 = vld [vmem:[#allocation10 + $0x170] sm:$0xff]
    %v968 = vld [vmem:[#allocation10 + $0x178] sm:$0xff]
    %v969 = vld [vmem:[#allocation10 + $0x180] sm:$0xff]
    %v970 = vld [vmem:[#allocation10 + $0x188] sm:$0xff]
    %v971 = vld [vmem:[#allocation10 + $0x190] sm:$0xff]
    %v972 = vld [vmem:[#allocation10 + $0x198] sm:$0xff]
    %v973 = vld [vmem:[#allocation10 + $0x1a0] sm:$0xff]
    %v974 = vld [vmem:[#allocation10 + $0x1a8] sm:$0xff]
    %v975 = vld [vmem:[#allocation10 + $0x1b0] sm:$0xff]
    %v976 = vld [vmem:[#allocation10 + $0x1b8] sm:$0xff]
    %v977 = vld [vmem:[#allocation10 + $0x1c0] sm:$0xff]
    %v978 = vld [vmem:[#allocation10 + $0x1c8] sm:$0xff]
    %v979 = vld [vmem:[#allocation10 + $0x1d0] sm:$0xff]
    %v980 = vld [vmem:[#allocation10 + $0x1d8] sm:$0xff]
    %v981 = vld [vmem:[#allocation10 + $0x1e0] sm:$0xff]
    %v982 = vld [vmem:[#allocation10 + $0x1e8] sm:$0xff]
    %v983 = vld [vmem:[#allocation10 + $0x1f0] sm:$0xff]
    %v984 = vld [vmem:[#allocation10 + $0x1f8] sm:$0xff]
    %v985 = vld [vmem:[#allocation10 + $0x200] sm:$0xff]
    %v986 = vld [vmem:[#allocation10 + $0x208] sm:$0xff]
    %v987 = vld [vmem:[#allocation10 + $0x210] sm:$0xff]
    %v988 = vld [vmem:[#allocation10 + $0x218] sm:$0xff]
    %v989 = vld [vmem:[#allocation10 + $0x220] sm:$0xff]
    %v990 = vld [vmem:[#allocation10 + $0x228] sm:$0xff]
    %v991 = vld [vmem:[#allocation10 + $0x230] sm:$0xff]
    %v992 = vld [vmem:[#allocation10 + $0x238] sm:$0xff]
    %v993 = vld [vmem:[#allocation10 + $0x240] sm:$0xff]
    %v994 = vld [vmem:[#allocation10 + $0x248] sm:$0xff]
    %v995 = vld [vmem:[#allocation10 + $0x250] sm:$0xff]
    %v996 = vld [vmem:[#allocation10 + $0x258] sm:$0xff]
    %v997 = vld [vmem:[#allocation10 + $0x260] sm:$0xff]
    %v998 = vld [vmem:[#allocation10 + $0x268] sm:$0xff]
    %v999 = vld [vmem:[#allocation10 + $0x270] sm:$0xff]
    %v1000 = vld [vmem:[#allocation10 + $0x278] sm:$0xff]
    %v1001 = vld [vmem:[#allocation10 + $0x280] sm:$0xff]
    %v1002 = vld [vmem:[#allocation10 + $0x288] sm:$0xff]
    %v1003 = vld [vmem:[#allocation10 + $0x290] sm:$0xff]
    %v1004 = vld [vmem:[#allocation10 + $0x298] sm:$0xff]
    %v1005 = vld [vmem:[#allocation10 + $0x2a0] sm:$0xff]
    %v1006 = vld [vmem:[#allocation10 + $0x2a8] sm:$0xff]
    %v1007 = vld [vmem:[#allocation10 + $0x2b0] sm:$0xff]
    %v1008 = vld [vmem:[#allocation10 + $0x2b8] sm:$0xff]
    %v1009 = vld [vmem:[#allocation10 + $0x2c0] sm:$0xff]
    %v1010 = vld [vmem:[#allocation10 + $0x2c8] sm:$0xff]
    %v1011 = vld [vmem:[#allocation10 + $0x2d0] sm:$0xff]
    %v1012 = vld [vmem:[#allocation10 + $0x2d8] sm:$0xff]
    %v1013 = vld [vmem:[#allocation10 + $0x2e0] sm:$0xff]
    %v1014 = vld [vmem:[#allocation10 + $0x2e8] sm:$0xff]
    %v1015 = vld [vmem:[#allocation10 + $0x2f0] sm:$0xff]
    %v1016 = vld [vmem:[#allocation10 + $0x2f8] sm:$0xff]
    %v1017 = vld [vmem:[#allocation10 + $0x300] sm:$0xff]
    %v1018 = vld [vmem:[#allocation10 + $0x308] sm:$0xff]
    %v1019 = vld [vmem:[#allocation10 + $0x310] sm:$0xff]
    %v1020 = vld [vmem:[#allocation10 + $0x318] sm:$0xff]
    %v1021 = vld [vmem:[#allocation10 + $0x320] sm:$0xff]
    %v1022 = vld [vmem:[#allocation10 + $0x328] sm:$0xff]
    %v1023 = vld [vmem:[#allocation10 + $0x330] sm:$0xff]
    %v1024 = vld [vmem:[#allocation10 + $0x338] sm:$0xff]
    %v1025 = vld [vmem:[#allocation10 + $0x340] sm:$0xff]
    %v1026 = vld [vmem:[#allocation10 + $0x348] sm:$0xff]
    %v1027 = vld [vmem:[#allocation10 + $0x350] sm:$0xff]
    %v1028 = vld [vmem:[#allocation10 + $0x358] sm:$0xff]
    %v1029 = vld [vmem:[#allocation10 + $0x360] sm:$0xff]
    %v1030 = vld [vmem:[#allocation10 + $0x368] sm:$0xff]
    %v1031 = vld [vmem:[#allocation10 + $0x370] sm:$0xff]
    %v1032 = vld [vmem:[#allocation10 + $0x378] sm:$0xff]
    %v1033 = vld [vmem:[#allocation10 + $0x380] sm:$0xff]
    %v1034 = vld [vmem:[#allocation10 + $0x388] sm:$0xff]
    %v1035 = vld [vmem:[#allocation10 + $0x390] sm:$0xff]
    %v1036 = vld [vmem:[#allocation10 + $0x398] sm:$0xff]
    %v1037 = vld [vmem:[#allocation10 + $0x3a0] sm:$0xff]
    %v1038 = vld [vmem:[#allocation10 + $0x3a8] sm:$0xff]
    %v1039 = vld [vmem:[#allocation10 + $0x3b0] sm:$0xff]
    %v1040 = vld [vmem:[#allocation10 + $0x3b8] sm:$0xff]
    %v1041 = vld [vmem:[#allocation10 + $0x3c0] sm:$0xff]
    %v1042 = vld [vmem:[#allocation10 + $0x3c8] sm:$0xff]
    %v1043 = vld [vmem:[#allocation10 + $0x3d0] sm:$0xff]
    %v1044 = vld [vmem:[#allocation10 + $0x3d8] sm:$0xff]
    %v1045 = vld [vmem:[#allocation10 + $0x3e0] sm:$0xff]
    %v1046 = vld [vmem:[#allocation10 + $0x3e8] sm:$0xff]
    %v1047 = vld [vmem:[#allocation10 + $0x3f0] sm:$0xff]
    %v1048 = vld [vmem:[#allocation10 + $0x3f8] sm:$0xff]
    %v1049 = vld [vmem:[#allocation10 + $0x400] sm:$0xff]
    %v1050 = vld [vmem:[#allocation10 + $0x408] sm:$0xff]
    %v1051 = vld [vmem:[#allocation10 + $0x410] sm:$0xff]
    %v1052 = vld [vmem:[#allocation10 + $0x418] sm:$0xff]
    %v1053 = vld [vmem:[#allocation10 + $0x420] sm:$0xff]
    %v1054 = vld [vmem:[#allocation10 + $0x428] sm:$0xff]
    %v1055 = vld [vmem:[#allocation10 + $0x430] sm:$0xff]
    %v1056 = vld [vmem:[#allocation10 + $0x438] sm:$0xff]
    %v1057 = vld [vmem:[#allocation10 + $0x440] sm:$0xff]
    %v1058 = vld [vmem:[#allocation10 + $0x448] sm:$0xff]
    %v1059 = vld [vmem:[#allocation10 + $0x450] sm:$0xff]
    %v1060 = vld [vmem:[#allocation10 + $0x458] sm:$0xff]
    %v1061 = vld [vmem:[#allocation10 + $0x460] sm:$0xff]
    %v1062 = vld [vmem:[#allocation10 + $0x468] sm:$0xff]
    %v1063 = vld [vmem:[#allocation10 + $0x470] sm:$0xff]
    %v1064 = vld [vmem:[#allocation10 + $0x478] sm:$0xff]
    %v1065 = vld [vmem:[#allocation10 + $0x480] sm:$0xff]
    %v1066 = vld [vmem:[#allocation10 + $0x488] sm:$0xff]
    %v1067 = vld [vmem:[#allocation10 + $0x490] sm:$0xff]
    %v1068 = vld [vmem:[#allocation10 + $0x498] sm:$0xff]
    %v1069 = vld [vmem:[#allocation10 + $0x4a0] sm:$0xff]
    %v1070 = vld [vmem:[#allocation10 + $0x4a8] sm:$0xff]
    %v1071 = vld [vmem:[#allocation10 + $0x4b0] sm:$0xff]
    %v1072 = vld [vmem:[#allocation10 + $0x4b8] sm:$0xff]
    %v1073 = vld [vmem:[#allocation10 + $0x4c0] sm:$0xff]
    %v1074 = vld [vmem:[#allocation10 + $0x4c8] sm:$0xff]
    %v1075 = vld [vmem:[#allocation10 + $0x4d0] sm:$0xff]
    %v1076 = vld [vmem:[#allocation10 + $0x4d8] sm:$0xff]
    %v1077 = vld [vmem:[#allocation10 + $0x4e0] sm:$0xff]
    %v1078 = vld [vmem:[#allocation10 + $0x4e8] sm:$0xff]
    %v1079 = vld [vmem:[#allocation10 + $0x4f0] sm:$0xff]
    %v1080 = vld [vmem:[#allocation10 + $0x4f8] sm:$0xff]
    %v1081 = vld [vmem:[#allocation10 + $0x500] sm:$0xff]
    %v1082 = vld [vmem:[#allocation10 + $0x508] sm:$0xff]
    %v1083 = vld [vmem:[#allocation10 + $0x510] sm:$0xff]
    %v1084 = vld [vmem:[#allocation10 + $0x518] sm:$0xff]
    %v1085 = vld [vmem:[#allocation10 + $0x520] sm:$0xff]
    %v1086 = vld [vmem:[#allocation10 + $0x528] sm:$0xff]
    %v1087 = vld [vmem:[#allocation10 + $0x530] sm:$0xff]
    %v1088 = vld [vmem:[#allocation10 + $0x538] sm:$0xff]
    %v1089 = vld [vmem:[#allocation10 + $0x540] sm:$0xff]
    %v1090 = vld [vmem:[#allocation10 + $0x548] sm:$0xff]
    %v1091 = vld [vmem:[#allocation10 + $0x550] sm:$0xff]
    %v1092 = vld [vmem:[#allocation10 + $0x558] sm:$0xff]
    %v1093 = vld [vmem:[#allocation10 + $0x560] sm:$0xff]
    %v1094 = vld [vmem:[#allocation10 + $0x568] sm:$0xff]
    %v1095 = vld [vmem:[#allocation10 + $0x570] sm:$0xff]
    %v1096 = vld [vmem:[#allocation10 + $0x578] sm:$0xff]
    %v1097 = vld [vmem:[#allocation10 + $0x580] sm:$0xff]
    %v1098 = vld [vmem:[#allocation10 + $0x588] sm:$0xff]
    %v1099 = vld [vmem:[#allocation10 + $0x590] sm:$0xff]
    %v1100 = vld [vmem:[#allocation10 + $0x598] sm:$0xff]
    %v1101 = vld [vmem:[#allocation10 + $0x5a0] sm:$0xff]
    %v1102 = vld [vmem:[#allocation10 + $0x5a8] sm:$0xff]
    %v1103 = vld [vmem:[#allocation10 + $0x5b0] sm:$0xff]
    %v1104 = vld [vmem:[#allocation10 + $0x5b8] sm:$0xff]
    %v1105 = vld [vmem:[#allocation10 + $0x5c0] sm:$0xff]
    %v1106 = vld [vmem:[#allocation10 + $0x5c8] sm:$0xff]
    %v1107 = vld [vmem:[#allocation10 + $0x5d0] sm:$0xff]
    %v1108 = vld [vmem:[#allocation10 + $0x5d8] sm:$0xff]
    %v1109 = vld [vmem:[#allocation10 + $0x5e0] sm:$0xff]
    %v1110 = vld [vmem:[#allocation10 + $0x5e8] sm:$0xff]
    %v1111 = vld [vmem:[#allocation10 + $0x5f0] sm:$0xff]
    %v1112 = vld [vmem:[#allocation10 + $0x5f8] sm:$0xff]
    %v1113 = vld [vmem:[#allocation10 + $0x600] sm:$0xff]
    %v1114 = vld [vmem:[#allocation10 + $0x608] sm:$0xff]
    %v1115 = vld [vmem:[#allocation10 + $0x610] sm:$0xff]
    %v1116 = vld [vmem:[#allocation10 + $0x618] sm:$0xff]
    %v1117 = vld [vmem:[#allocation10 + $0x620] sm:$0xff]
    %v1118 = vld [vmem:[#allocation10 + $0x628] sm:$0xff]
    %v1119 = vld [vmem:[#allocation10 + $0x630] sm:$0xff]
    %v1120 = vld [vmem:[#allocation10 + $0x638] sm:$0xff]
    %v1121 = vld [vmem:[#allocation10 + $0x640] sm:$0xff]
    %v1122 = vld [vmem:[#allocation10 + $0x648] sm:$0xff]
    %v1123 = vld [vmem:[#allocation10 + $0x650] sm:$0xff]
    %v1124 = vld [vmem:[#allocation10 + $0x658] sm:$0xff]
    %v1125 = vld [vmem:[#allocation10 + $0x660] sm:$0xff]
    %v1126 = vld [vmem:[#allocation10 + $0x668] sm:$0xff]
    %v1127 = vld [vmem:[#allocation10 + $0x670] sm:$0xff]
    %v1128 = vld [vmem:[#allocation10 + $0x678] sm:$0xff]
    %v1129 = vld [vmem:[#allocation10 + $0x680] sm:$0xff]
    %v1130 = vld [vmem:[#allocation10 + $0x688] sm:$0xff]
    %v1131 = vld [vmem:[#allocation10 + $0x690] sm:$0xff]
    %v1132 = vld [vmem:[#allocation10 + $0x698] sm:$0xff]
    %v1133 = vld [vmem:[#allocation10 + $0x6a0] sm:$0xff]
    %v1134 = vld [vmem:[#allocation10 + $0x6a8] sm:$0xff]
    %v1135 = vld [vmem:[#allocation10 + $0x6b0] sm:$0xff]
    %v1136 = vld [vmem:[#allocation10 + $0x6b8] sm:$0xff]
    %v1137 = vld [vmem:[#allocation10 + $0x6c0] sm:$0xff]
    %v1138 = vld [vmem:[#allocation10 + $0x6c8] sm:$0xff]
    %v1139 = vld [vmem:[#allocation10 + $0x6d0] sm:$0xff]
    %v1140 = vld [vmem:[#allocation10 + $0x6d8] sm:$0xff]
    %v1141 = vld [vmem:[#allocation10 + $0x6e0] sm:$0xff]
    %v1142 = vld [vmem:[#allocation10 + $0x6e8] sm:$0xff]
    %v1143 = vld [vmem:[#allocation10 + $0x6f0] sm:$0xff]
    %v1144 = vld [vmem:[#allocation10 + $0x6f8] sm:$0xff]
    %v1145 = vld [vmem:[#allocation10 + $0x700] sm:$0xff]
    %v1146 = vld [vmem:[#allocation10 + $0x708] sm:$0xff]
    %v1147 = vld [vmem:[#allocation10 + $0x710] sm:$0xff]
    %v1148 = vld [vmem:[#allocation10 + $0x718] sm:$0xff]
    %v1149 = vld [vmem:[#allocation10 + $0x720] sm:$0xff]
    %v1150 = vld [vmem:[#allocation10 + $0x728] sm:$0xff]
    %v1151 = vld [vmem:[#allocation10 + $0x730] sm:$0xff]
    %v1152 = vld [vmem:[#allocation10 + $0x738] sm:$0xff]
    %v1153 = vld [vmem:[#allocation10 + $0x740] sm:$0xff]
    %v1154 = vld [vmem:[#allocation10 + $0x748] sm:$0xff]
    %v1155 = vld [vmem:[#allocation10 + $0x750] sm:$0xff]
    %v1156 = vld [vmem:[#allocation10 + $0x758] sm:$0xff]
    %v1157 = vld [vmem:[#allocation10 + $0x760] sm:$0xff]
    %v1158 = vld [vmem:[#allocation10 + $0x768] sm:$0xff]
    %v1159 = vld [vmem:[#allocation10 + $0x770] sm:$0xff]
    %v1160 = vld [vmem:[#allocation10 + $0x778] sm:$0xff]
    %v1161 = vld [vmem:[#allocation10 + $0x780] sm:$0xff]
    %v1162 = vld [vmem:[#allocation10 + $0x788] sm:$0xff]
    %v1163 = vld [vmem:[#allocation10 + $0x790] sm:$0xff]
    %v1164 = vld [vmem:[#allocation10 + $0x798] sm:$0xff]
    %v1165 = vld [vmem:[#allocation10 + $0x7a0] sm:$0xff]
    %v1166 = vld [vmem:[#allocation10 + $0x7a8] sm:$0xff]
    %v1167 = vld [vmem:[#allocation10 + $0x7b0] sm:$0xff]
    %v1168 = vld [vmem:[#allocation10 + $0x7b8] sm:$0xff]
    %v1169 = vld [vmem:[#allocation10 + $0x7c0] sm:$0xff]
    %v1170 = vld [vmem:[#allocation10 + $0x7c8] sm:$0xff]
    %v1171 = vld [vmem:[#allocation10 + $0x7d0] sm:$0xff]
    %v1172 = vld [vmem:[#allocation10 + $0x7d8] sm:$0xff]
    %v1173 = vld [vmem:[#allocation10 + $0x7e0] sm:$0xff]
    %v1174 = vld [vmem:[#allocation10 + $0x7e8] sm:$0xff]
    %v1175 = vld [vmem:[#allocation10 + $0x7f0] sm:$0xff]
    %v1176 = vld [vmem:[#allocation10 + $0x7f8] sm:$0xff]
    %v1177 = vld [vmem:[#allocation10 + $0x800] sm:$0xff]
    %v1178 = vld [vmem:[#allocation10 + $0x808] sm:$0xff]
    %v1179 = vld [vmem:[#allocation10 + $0x810] sm:$0xff]
    %v1180 = vld [vmem:[#allocation10 + $0x818] sm:$0xff]
    %v1181 = vld [vmem:[#allocation10 + $0x820] sm:$0xff]
    %v1182 = vld [vmem:[#allocation10 + $0x828] sm:$0xff]
    %v1183 = vld [vmem:[#allocation10 + $0x830] sm:$0xff]
    %v1184 = vld [vmem:[#allocation10 + $0x838] sm:$0xff]
    %v1185 = vld [vmem:[#allocation10 + $0x840] sm:$0xff]
    %v1186 = vld [vmem:[#allocation10 + $0x848] sm:$0xff]
    %v1187 = vld [vmem:[#allocation10 + $0x850] sm:$0xff]
    %v1188 = vld [vmem:[#allocation10 + $0x858] sm:$0xff]
    %v1189 = vld [vmem:[#allocation10 + $0x860] sm:$0xff]
    %v1190 = vld [vmem:[#allocation10 + $0x868] sm:$0xff]
    %v1191 = vld [vmem:[#allocation10 + $0x870] sm:$0xff]
    %v1192 = vld [vmem:[#allocation10 + $0x878] sm:$0xff]
    %v1193 = vld [vmem:[#allocation10 + $0x880] sm:$0xff]
    %v1194 = vld [vmem:[#allocation10 + $0x888] sm:$0xff]
    %v1195 = vld [vmem:[#allocation10 + $0x890] sm:$0xff]
    %v1196 = vld [vmem:[#allocation10 + $0x898] sm:$0xff]
    %v1197 = vld [vmem:[#allocation10 + $0x8a0] sm:$0xff]
    %v1198 = vld [vmem:[#allocation10 + $0x8a8] sm:$0xff]
    %v1199 = vld [vmem:[#allocation10 + $0x8b0] sm:$0xff]
    %v1200 = vld [vmem:[#allocation10 + $0x8b8] sm:$0xff]
    %v1201 = vld [vmem:[#allocation10 + $0x8c0] sm:$0xff]
    %v1202 = vld [vmem:[#allocation10 + $0x8c8] sm:$0xff]
    %v1203 = vld [vmem:[#allocation10 + $0x8d0] sm:$0xff]
    %v1204 = vld [vmem:[#allocation10 + $0x8d8] sm:$0xff]
    %v1205 = vld [vmem:[#allocation10 + $0x8e0] sm:$0xff]
    %v1206 = vld [vmem:[#allocation10 + $0x8e8] sm:$0xff]
    %v1207 = vld [vmem:[#allocation10 + $0x8f0] sm:$0xff]
    %v1208 = vld [vmem:[#allocation10 + $0x8f8] sm:$0xff]
    %v1209 = vld [vmem:[#allocation10 + $0x900] sm:$0xff]
    %v1210 = vld [vmem:[#allocation10 + $0x908] sm:$0xff]
    %v1211 = vld [vmem:[#allocation10 + $0x910] sm:$0xff]
    %v1212 = vld [vmem:[#allocation10 + $0x918] sm:$0xff]
    %v1213 = vld [vmem:[#allocation10 + $0x920] sm:$0xff]
    %v1214 = vld [vmem:[#allocation10 + $0x928] sm:$0xff]
    %v1215 = vld [vmem:[#allocation10 + $0x930] sm:$0xff]
    %v1216 = vld [vmem:[#allocation10 + $0x938] sm:$0xff]
    %v1217 = vld [vmem:[#allocation10 + $0x940] sm:$0xff]
    %v1218 = vld [vmem:[#allocation10 + $0x948] sm:$0xff]
    %v1219 = vld [vmem:[#allocation10 + $0x950] sm:$0xff]
    %v1220 = vld [vmem:[#allocation10 + $0x958] sm:$0xff]
    %v1221 = vld [vmem:[#allocation10 + $0x960] sm:$0xff]
    %v1222 = vld [vmem:[#allocation10 + $0x968] sm:$0xff]
    %v1223 = vld [vmem:[#allocation10 + $0x970] sm:$0xff]
    %v1224 = vld [vmem:[#allocation10 + $0x978] sm:$0xff]
    %v1225 = vld [vmem:[#allocation10 + $0x980] sm:$0xff]
    %v1226 = vld [vmem:[#allocation10 + $0x988] sm:$0xff]
    %v1227 = vld [vmem:[#allocation10 + $0x990] sm:$0xff]
    %v1228 = vld [vmem:[#allocation10 + $0x998] sm:$0xff]
    %v1229 = vld [vmem:[#allocation10 + $0x9a0] sm:$0xff]
    %v1230 = vld [vmem:[#allocation10 + $0x9a8] sm:$0xff]
    %v1231 = vld [vmem:[#allocation10 + $0x9b0] sm:$0xff]
    %v1232 = vld [vmem:[#allocation10 + $0x9b8] sm:$0xff]
    %v1233 = vld [vmem:[#allocation10 + $0x9c0] sm:$0xff]
    %v1234 = vld [vmem:[#allocation10 + $0x9c8] sm:$0xff]
    %v1235 = vld [vmem:[#allocation10 + $0x9d0] sm:$0xff]
    %v1236 = vld [vmem:[#allocation10 + $0x9d8] sm:$0xff]
    %v1237 = vld [vmem:[#allocation10 + $0x9e0] sm:$0xff]
    %v1238 = vld [vmem:[#allocation10 + $0x9e8] sm:$0xff]
    %v1239 = vld [vmem:[#allocation10 + $0x9f0] sm:$0xff]
    %v1240 = vld [vmem:[#allocation10 + $0x9f8] sm:$0xff]
    %1241 = vmatprep.subr.mxu0 %v922
    %1242 = vmatpush1.msra.mxu0 %v921
    %1243 = vmatprep.subr.mxu0 %v932
    %1244 = vmatpush1.msra.mxu0 %v931
    %1245 = vmatprep.subr.mxu0 %v942
    %1246 = vmatpush1.msra.mxu0 %v941
    %1247 = vmatprep.subr.mxu0 %v952
    %1248 = vmatpush1.msra.mxu0 %v951
    %1249 = vmatprep.subr.mxu0 %v962
    %1250 = vmatpush1.msra.mxu0 %v961
    %1251 = vmatprep.subr.mxu0 %v972
    %1252 = vmatpush1.msra.mxu0 %v971
    %1253 = vmatprep.subr.mxu0 %v982
    %1254 = vmatpush1.msra.mxu0 %v981
    %1255 = vmatprep.subr.mxu0 %v992
    %1256 = vmatpush1.msra.mxu0 %v991
    %1257 = vmatprep.subr.mxu0 %v1002
    %1258 = vmatpush1.msra.mxu0 %v1001
    %1259 = vmatprep.subr.mxu0 %v1012
    %1260 = vmatpush1.msra.mxu0 %v1011
    %1261 = vmatprep.subr.mxu0 %v1022
    %1262 = vmatpush1.msra.mxu0 %v1021
    %1263 = vmatprep.subr.mxu0 %v1032
    %1264 = vmatpush1.msra.mxu0 %v1031
    %1265 = vmatprep.subr.mxu0 %v1042
    %1266 = vmatpush1.msra.mxu0 %v1041
    %1267 = vmatprep.subr.mxu0 %v1052
    %1268 = vmatpush1.msra.mxu0 %v1051
    %1269 = vmatprep.subr.mxu0 %v1062
    %1270 = vmatpush1.msra.mxu0 %v1061
    %1271 = vmatprep.subr.mxu0 %v1072
    %1272 = vmatpush1.msra.mxu0 %v1071
    %1273 = vmatprep.subr.mxu0 %v1082
    %1274 = vmatpush1.msra.mxu0 %v1081
    %1275 = vmatprep.subr.mxu0 %v1092
    %1276 = vmatpush1.msra.mxu0 %v1091
    %1277 = vmatprep.subr.mxu0 %v1102
    %1278 = vmatpush1.msra.mxu0 %v1101
    %1279 = vmatprep.subr.mxu0 %v1112
    %1280 = vmatpush1.msra.mxu0 %v1111
    %1281 = vmatprep.subr.mxu0 %v1122
    %1282 = vmatpush1.msra.mxu0 %v1121
    %1283 = vmatprep.subr.mxu0 %v1132
    %1284 = vmatpush1.msra.mxu0 %v1131
    %1285 = vmatprep.subr.mxu0 %v1142
    %1286 = vmatpush1.msra.mxu0 %v1141
    %1287 = vmatprep.subr.mxu0 %v1152
    %1288 = vmatpush1.msra.mxu0 %v1151
    %1289 = vmatprep.subr.mxu0 %v1162
    %1290 = vmatpush1.msra.mxu0 %v1161
    %1291 = vmatprep.subr.mxu0 %v1172
    %1292 = vmatpush1.msra.mxu0 %v1171
    %1293 = vmatprep.subr.mxu0 %v1182
    %1294 = vmatpush1.msra.mxu0 %v1181
    %1295 = vmatprep.subr.mxu0 %v1192
    %1296 = vmatpush1.msra.mxu0 %v1191
    %1297 = vmatprep.subr.mxu0 %v1202
    %1298 = vmatpush1.msra.mxu0 %v1201
    %1299 = vmatprep.subr.mxu0 %v1212
    %1300 = vmatpush1.msra.mxu0 %v1211
    %1301 = vmatprep.subr.mxu0 %v1222
    %1302 = vmatpush1.msra.mxu0 %v1221
    %1303 = vmatprep.subr.mxu0 %v1232
    %1304 = vmatpush1.msra.mxu0 %v1231
    %1305 = vmatprep.mubr.f32.mxu0 %v920
    %1306 = vmatmul.mubr.f32.gmra.mrb[0].mxu0 %v919
    %v1307 = vpop.f32.mrb[0].mxu0
    %v1308 = vadd.f32 0.0, %v1307
    %v1309 = vpop.f32.mrb[0].mxu0
    %v1310 = vadd.f32 0.0, %v1309
    %1311 = vdwg.mxu0
    %1312 = vmatprep.subr.mxu0 %v924
    %1313 = vmatpush1.msra.mxu0 %v923
    %1314 = vmatprep.subr.mxu0 %v934
    %1315 = vmatpush1.msra.mxu0 %v933
    %1316 = vmatprep.subr.mxu0 %v944
    %1317 = vmatpush1.msra.mxu0 %v943
    %1318 = vmatprep.subr.mxu0 %v954
    %1319 = vmatpush1.msra.mxu0 %v953
    %1320 = vmatprep.subr.mxu0 %v964
    %1321 = vmatpush1.msra.mxu0 %v963
    %1322 = vmatprep.subr.mxu0 %v974
    %1323 = vmatpush1.msra.mxu0 %v973
    %1324 = vmatprep.subr.mxu0 %v984
    %1325 = vmatpush1.msra.mxu0 %v983
    %1326 = vmatprep.subr.mxu0 %v994
    %1327 = vmatpush1.msra.mxu0 %v993
    %1328 = vmatprep.subr.mxu0 %v1004
    %1329 = vmatpush1.msra.mxu0 %v1003
    %1330 = vmatprep.subr.mxu0 %v1014
    %1331 = vmatpush1.msra.mxu0 %v1013
    %1332 = vmatprep.subr.mxu0 %v1024
    %1333 = vmatpush1.msra.mxu0 %v1023
    %1334 = vmatprep.subr.mxu0 %v1034
    %1335 = vmatpush1.msra.mxu0 %v1033
    %1336 = vmatprep.subr.mxu0 %v1044
    %1337 = vmatpush1.msra.mxu0 %v1043
    %1338 = vmatprep.subr.mxu0 %v1054
    %1339 = vmatpush1.msra.mxu0 %v1053
    %1340 = vmatprep.subr.mxu0 %v1064
    %1341 = vmatpush1.msra.mxu0 %v1063
    %1342 = vmatprep.subr.mxu0 %v1074
    %1343 = vmatpush1.msra.mxu0 %v1073
    %1344 = vmatprep.subr.mxu0 %v1084
    %1345 = vmatpush1.msra.mxu0 %v1083
    %1346 = vmatprep.subr.mxu0 %v1094
    %1347 = vmatpush1.msra.mxu0 %v1093
    %1348 = vmatprep.subr.mxu0 %v1104
    %1349 = vmatpush1.msra.mxu0 %v1103
    %1350 = vmatprep.subr.mxu0 %v1114
    %1351 = vmatpush1.msra.mxu0 %v1113
    %1352 = vmatprep.subr.mxu0 %v1124
    %1353 = vmatpush1.msra.mxu0 %v1123
    %1354 = vmatprep.subr.mxu0 %v1134
    %1355 = vmatpush1.msra.mxu0 %v1133
    %1356 = vmatprep.subr.mxu0 %v1144
    %1357 = vmatpush1.msra.mxu0 %v1143
    %1358 = vmatprep.subr.mxu0 %v1154
    %1359 = vmatpush1.msra.mxu0 %v1153
    %1360 = vmatprep.subr.mxu0 %v1164
    %1361 = vmatpush1.msra.mxu0 %v1163
    %1362 = vmatprep.subr.mxu0 %v1174
    %1363 = vmatpush1.msra.mxu0 %v1173
    %1364 = vmatprep.subr.mxu0 %v1184
    %1365 = vmatpush1.msra.mxu0 %v1183
    %1366 = vmatprep.subr.mxu0 %v1194
    %1367 = vmatpush1.msra.mxu0 %v1193
    %1368 = vmatprep.subr.mxu0 %v1204
    %1369 = vmatpush1.msra.mxu0 %v1203
    %1370 = vmatprep.subr.mxu0 %v1214
    %1371 = vmatpush1.msra.mxu0 %v1213
    %1372 = vmatprep.subr.mxu0 %v1224
    %1373 = vmatpush1.msra.mxu0 %v1223
    %1374 = vmatprep.subr.mxu0 %v1234
    %1375 = vmatpush1.msra.mxu0 %v1233
    %1376 = vmatprep.mubr.f32.mxu0 %v920
    %1377 = vmatmul.mubr.f32.gmra.mrb[0].mxu0 %v919
    %v1378 = vpop.f32.mrb[0].mxu0
    %v1379 = vadd.f32 0.0, %v1378
    %v1380 = vpop.f32.mrb[0].mxu0
    %v1381 = vadd.f32 0.0, %v1380
    %1382 = vdwg.mxu0
    %1383 = vmatprep.subr.mxu0 %v926
    %1384 = vmatpush1.msra.mxu0 %v925
    %1385 = vmatprep.subr.mxu0 %v936
    %1386 = vmatpush1.msra.mxu0 %v935
    %1387 = vmatprep.subr.mxu0 %v946
    %1388 = vmatpush1.msra.mxu0 %v945
    %1389 = vmatprep.subr.mxu0 %v956
    %1390 = vmatpush1.msra.mxu0 %v955
    %1391 = vmatprep.subr.mxu0 %v966
    %1392 = vmatpush1.msra.mxu0 %v965
    %1393 = vmatprep.subr.mxu0 %v976
    %1394 = vmatpush1.msra.mxu0 %v975
    %1395 = vmatprep.subr.mxu0 %v986
    %1396 = vmatpush1.msra.mxu0 %v985
    %1397 = vmatprep.subr.mxu0 %v996
    %1398 = vmatpush1.msra.mxu0 %v995
    %1399 = vmatprep.subr.mxu0 %v1006
    %1400 = vmatpush1.msra.mxu0 %v1005
    %1401 = vmatprep.subr.mxu0 %v1016
    %1402 = vmatpush1.msra.mxu0 %v1015
    %1403 = vmatprep.subr.mxu0 %v1026
    %1404 = vmatpush1.msra.mxu0 %v1025
    %1405 = vmatprep.subr.mxu0 %v1036
    %1406 = vmatpush1.msra.mxu0 %v1035
    %1407 = vmatprep.subr.mxu0 %v1046
    %1408 = vmatpush1.msra.mxu0 %v1045
    %1409 = vmatprep.subr.mxu0 %v1056
    %1410 = vmatpush1.msra.mxu0 %v1055
    %1411 = vmatprep.subr.mxu0 %v1066
    %1412 = vmatpush1.msra.mxu0 %v1065
    %1413 = vmatprep.subr.mxu0 %v1076
    %1414 = vmatpush1.msra.mxu0 %v1075
    %1415 = vmatprep.subr.mxu0 %v1086
    %1416 = vmatpush1.msra.mxu0 %v1085
    %1417 = vmatprep.subr.mxu0 %v1096
    %1418 = vmatpush1.msra.mxu0 %v1095
    %1419 = vmatprep.subr.mxu0 %v1106
    %1420 = vmatpush1.msra.mxu0 %v1105
    %1421 = vmatprep.subr.mxu0 %v1116
    %1422 = vmatpush1.msra.mxu0 %v1115
    %1423 = vmatprep.subr.mxu0 %v1126
    %1424 = vmatpush1.msra.mxu0 %v1125
    %1425 = vmatprep.subr.mxu0 %v1136
    %1426 = vmatpush1.msra.mxu0 %v1135
    %1427 = vmatprep.subr.mxu0 %v1146
    %1428 = vmatpush1.msra.mxu0 %v1145
    %1429 = vmatprep.subr.mxu0 %v1156
    %1430 = vmatpush1.msra.mxu0 %v1155
    %1431 = vmatprep.subr.mxu0 %v1166
    %1432 = vmatpush1.msra.mxu0 %v1165
    %1433 = vmatprep.subr.mxu0 %v1176
    %1434 = vmatpush1.msra.mxu0 %v1175
    %1435 = vmatprep.subr.mxu0 %v1186
    %1436 = vmatpush1.msra.mxu0 %v1185
    %1437 = vmatprep.subr.mxu0 %v1196
    %1438 = vmatpush1.msra.mxu0 %v1195
    %1439 = vmatprep.subr.mxu0 %v1206
    %1440 = vmatpush1.msra.mxu0 %v1205
    %1441 = vmatprep.subr.mxu0 %v1216
    %1442 = vmatpush1.msra.mxu0 %v1215
    %1443 = vmatprep.subr.mxu0 %v1226
    %1444 = vmatpush1.msra.mxu0 %v1225
    %1445 = vmatprep.subr.mxu0 %v1236
    %1446 = vmatpush1.msra.mxu0 %v1235
    %1447 = vmatprep.mubr.f32.mxu0 %v920
    %1448 = vmatmul.mubr.f32.gmra.mrb[0].mxu0 %v919
    %v1449 = vpop.f32.mrb[0].mxu0
    %v1450 = vadd.f32 0.0, %v1449
    %v1451 = vpop.f32.mrb[0].mxu0
    %v1452 = vadd.f32 0.0, %v1451
    %1453 = vdwg.mxu0
    %1454 = vmatprep.subr.mxu0 %v928
    %1455 = vmatpush1.msra.mxu0 %v927
    %1456 = vmatprep.subr.mxu0 %v938
    %1457 = vmatpush1.msra.mxu0 %v937
    %1458 = vmatprep.subr.mxu0 %v948
    %1459 = vmatpush1.msra.mxu0 %v947
    %1460 = vmatprep.subr.mxu0 %v958
    %1461 = vmatpush1.msra.mxu0 %v957
    %1462 = vmatprep.subr.mxu0 %v968
    %1463 = vmatpush1.msra.mxu0 %v967
    %1464 = vmatprep.subr.mxu0 %v978
    %1465 = vmatpush1.msra.mxu0 %v977
    %1466 = vmatprep.subr.mxu0 %v988
    %1467 = vmatpush1.msra.mxu0 %v987
    %1468 = vmatprep.subr.mxu0 %v998
    %1469 = vmatpush1.msra.mxu0 %v997
    %1470 = vmatprep.subr.mxu0 %v1008
    %1471 = vmatpush1.msra.mxu0 %v1007
    %1472 = vmatprep.subr.mxu0 %v1018
    %1473 = vmatpush1.msra.mxu0 %v1017
    %1474 = vmatprep.subr.mxu0 %v1028
    %1475 = vmatpush1.msra.mxu0 %v1027
    %1476 = vmatprep.subr.mxu0 %v1038
    %1477 = vmatpush1.msra.mxu0 %v1037
    %1478 = vmatprep.subr.mxu0 %v1048
    %1479 = vmatpush1.msra.mxu0 %v1047
    %1480 = vmatprep.subr.mxu0 %v1058
    %1481 = vmatpush1.msra.mxu0 %v1057
    %1482 = vmatprep.subr.mxu0 %v1068
    %1483 = vmatpush1.msra.mxu0 %v1067
    %1484 = vmatprep.subr.mxu0 %v1078
    %1485 = vmatpush1.msra.mxu0 %v1077
    %1486 = vmatprep.subr.mxu0 %v1088
    %1487 = vmatpush1.msra.mxu0 %v1087
    %1488 = vmatprep.subr.mxu0 %v1098
    %1489 = vmatpush1.msra.mxu0 %v1097
    %1490 = vmatprep.subr.mxu0 %v1108
    %1491 = vmatpush1.msra.mxu0 %v1107
    %1492 = vmatprep.subr.mxu0 %v1118
    %1493 = vmatpush1.msra.mxu0 %v1117
    %1494 = vmatprep.subr.mxu0 %v1128
    %1495 = vmatpush1.msra.mxu0 %v1127
    %1496 = vmatprep.subr.mxu0 %v1138
    %1497 = vmatpush1.msra.mxu0 %v1137
    %1498 = vmatprep.subr.mxu0 %v1148
    %1499 = vmatpush1.msra.mxu0 %v1147
    %1500 = vmatprep.subr.mxu0 %v1158
    %1501 = vmatpush1.msra.mxu0 %v1157
    %1502 = vmatprep.subr.mxu0 %v1168
    %1503 = vmatpush1.msra.mxu0 %v1167
    %1504 = vmatprep.subr.mxu0 %v1178
    %1505 = vmatpush1.msra.mxu0 %v1177
    %1506 = vmatprep.subr.mxu0 %v1188
    %1507 = vmatpush1.msra.mxu0 %v1187
    %1508 = vmatprep.subr.mxu0 %v1198
    %1509 = vmatpush1.msra.mxu0 %v1197
    %1510 = vmatprep.subr.mxu0 %v1208
    %1511 = vmatpush1.msra.mxu0 %v1207
    %1512 = vmatprep.subr.mxu0 %v1218
    %1513 = vmatpush1.msra.mxu0 %v1217
    %1514 = vmatprep.subr.mxu0 %v1228
    %1515 = vmatpush1.msra.mxu0 %v1227
    %1516 = vmatprep.subr.mxu0 %v1238
    %1517 = vmatpush1.msra.mxu0 %v1237
    %1518 = vmatprep.mubr.f32.mxu0 %v920
    %1519 = vmatmul.mubr.f32.gmra.mrb[0].mxu0 %v919
    %v1520 = vpop.f32.mrb[0].mxu0
    %v1521 = vadd.f32 0.0, %v1520
    %v1522 = vpop.f32.mrb[0].mxu0
    %v1523 = vadd.f32 0.0, %v1522
    %1524 = vdwg.mxu0
    %1525 = vmatprep.subr.mxu0 %v930
    %1526 = vmatpush1.msra.mxu0 %v929
    %1527 = vmatprep.subr.mxu0 %v940
    %1528 = vmatpush1.msra.mxu0 %v939
    %1529 = vmatprep.subr.mxu0 %v950
    %1530 = vmatpush1.msra.mxu0 %v949
    %1531 = vmatprep.subr.mxu0 %v960
    %1532 = vmatpush1.msra.mxu0 %v959
    %1533 = vmatprep.subr.mxu0 %v970
    %1534 = vmatpush1.msra.mxu0 %v969
    %1535 = vmatprep.subr.mxu0 %v980
    %1536 = vmatpush1.msra.mxu0 %v979
    %1537 = vmatprep.subr.mxu0 %v990
    %1538 = vmatpush1.msra.mxu0 %v989
    %1539 = vmatprep.subr.mxu0 %v1000
    %1540 = vmatpush1.msra.mxu0 %v999
    %1541 = vmatprep.subr.mxu0 %v1010
    %1542 = vmatpush1.msra.mxu0 %v1009
    %1543 = vmatprep.subr.mxu0 %v1020
    %1544 = vmatpush1.msra.mxu0 %v1019
    %1545 = vmatprep.subr.mxu0 %v1030
    %1546 = vmatpush1.msra.mxu0 %v1029
    %1547 = vmatprep.subr.mxu0 %v1040
    %1548 = vmatpush1.msra.mxu0 %v1039
    %1549 = vmatprep.subr.mxu0 %v1050
    %1550 = vmatpush1.msra.mxu0 %v1049
    %1551 = vmatprep.subr.mxu0 %v1060
    %1552 = vmatpush1.msra.mxu0 %v1059
    %1553 = vmatprep.subr.mxu0 %v1070
    %1554 = vmatpush1.msra.mxu0 %v1069
    %1555 = vmatprep.subr.mxu0 %v1080
    %1556 = vmatpush1.msra.mxu0 %v1079
    %1557 = vmatprep.subr.mxu0 %v1090
    %1558 = vmatpush1.msra.mxu0 %v1089
    %1559 = vmatprep.subr.mxu0 %v1100
    %1560 = vmatpush1.msra.mxu0 %v1099
    %1561 = vmatprep.subr.mxu0 %v1110
    %1562 = vmatpush1.msra.mxu0 %v1109
    %1563 = vmatprep.subr.mxu0 %v1120
    %1564 = vmatpush1.msra.mxu0 %v1119
    %1565 = vmatprep.subr.mxu0 %v1130
    %1566 = vmatpush1.msra.mxu0 %v1129
    %1567 = vmatprep.subr.mxu0 %v1140
    %1568 = vmatpush1.msra.mxu0 %v1139
    %1569 = vmatprep.subr.mxu0 %v1150
    %1570 = vmatpush1.msra.mxu0 %v1149
    %1571 = vmatprep.subr.mxu0 %v1160
    %1572 = vmatpush1.msra.mxu0 %v1159
    %1573 = vmatprep.subr.mxu0 %v1170
    %1574 = vmatpush1.msra.mxu0 %v1169
    %1575 = vmatprep.subr.mxu0 %v1180
    %1576 = vmatpush1.msra.mxu0 %v1179
    %1577 = vmatprep.subr.mxu0 %v1190
    %1578 = vmatpush1.msra.mxu0 %v1189
    %1579 = vmatprep.subr.mxu0 %v1200
    %1580 = vmatpush1.msra.mxu0 %v1199
    %1581 = vmatprep.subr.mxu0 %v1210
    %1582 = vmatpush1.msra.mxu0 %v1209
    %1583 = vmatprep.subr.mxu0 %v1220
    %1584 = vmatpush1.msra.mxu0 %v1219
    %1585 = vmatprep.subr.mxu0 %v1230
    %1586 = vmatpush1.msra.mxu0 %v1229
    %1587 = vmatprep.subr.mxu0 %v1240
    %1588 = vmatpush1.msra.mxu0 %v1239
    %1589 = vmatprep.mubr.f32.mxu0 %v920
    %1590 = vmatmul.mubr.f32.gmra.mrb[0].mxu0 %v919
    %v1591 = vpop.f32.mrb[0].mxu0
    %v1592 = vadd.f32 0.0, %v1591
    %v1593 = vpop.f32.mrb[0].mxu0
    %v1594 = vadd.f32 0.0, %v1593
    %1595 = vdwg.mxu0
    %v1596 = vld [vmem:[#allocation11] sm:$0xff]
    %v1597 = vld [vmem:[#allocation11 + $0x8] sm:$0xff]
    %v1598 = vld [vmem:[#allocation11 + $0x10] sm:$0xff]
    %v1599 = vld [vmem:[#allocation11 + $0x18] sm:$0xff]
    %v1600 = vld [vmem:[#allocation11 + $0x20] sm:$0xff]
    %v1601 = vld [vmem:[#allocation11 + $0x28] sm:$0xff]
    %v1602 = vld [vmem:[#allocation11 + $0x30] sm:$0xff]
    %v1603 = vld [vmem:[#allocation11 + $0x38] sm:$0xff]
    %v1604 = vld [vmem:[#allocation11 + $0x40] sm:$0xff]
    %v1605 = vld [vmem:[#allocation11 + $0x48] sm:$0xff]
    %v1606 = vld [vmem:[#allocation11 + $0x50] sm:$0xff]
    %v1607 = vld [vmem:[#allocation11 + $0x58] sm:$0xff]
    %v1608 = vld [vmem:[#allocation11 + $0x60] sm:$0xff]
    %v1609 = vld [vmem:[#allocation11 + $0x68] sm:$0xff]
    %v1610 = vld [vmem:[#allocation11 + $0x70] sm:$0xff]
    %v1611 = vld [vmem:[#allocation11 + $0x78] sm:$0xff]
    %v1612 = vld [vmem:[#allocation11 + $0x80] sm:$0xff]
    %v1613 = vld [vmem:[#allocation11 + $0x88] sm:$0xff]
    %v1614 = vld [vmem:[#allocation11 + $0x90] sm:$0xff]
    %v1615 = vld [vmem:[#allocation11 + $0x98] sm:$0xff]
    %v1616 = vld [vmem:[#allocation11 + $0xa0] sm:$0xff]
    %v1617 = vld [vmem:[#allocation11 + $0xa8] sm:$0xff]
    %v1618 = vld [vmem:[#allocation11 + $0xb0] sm:$0xff]
    %v1619 = vld [vmem:[#allocation11 + $0xb8] sm:$0xff]
    %v1620 = vld [vmem:[#allocation11 + $0xc0] sm:$0xff]
    %v1621 = vld [vmem:[#allocation11 + $0xc8] sm:$0xff]
    %v1622 = vld [vmem:[#allocation11 + $0xd0] sm:$0xff]
    %v1623 = vld [vmem:[#allocation11 + $0xd8] sm:$0xff]
    %v1624 = vld [vmem:[#allocation11 + $0xe0] sm:$0xff]
    %v1625 = vld [vmem:[#allocation11 + $0xe8] sm:$0xff]
    %v1626 = vld [vmem:[#allocation11 + $0xf0] sm:$0xff]
    %v1627 = vld [vmem:[#allocation11 + $0xf8] sm:$0xff]
    %v1628 = vld [vmem:[#allocation11 + $0x100] sm:$0xff]
    %v1629 = vld [vmem:[#allocation11 + $0x108] sm:$0xff]
    %v1630 = vld [vmem:[#allocation11 + $0x110] sm:$0xff]
    %v1631 = vld [vmem:[#allocation11 + $0x118] sm:$0xff]
    %v1632 = vld [vmem:[#allocation11 + $0x120] sm:$0xff]
    %v1633 = vld [vmem:[#allocation11 + $0x128] sm:$0xff]
    %v1634 = vld [vmem:[#allocation11 + $0x130] sm:$0xff]
    %v1635 = vld [vmem:[#allocation11 + $0x138] sm:$0xff]
    %v1636 = vld [vmem:[#allocation11 + $0x140] sm:$0xff]
    %v1637 = vld [vmem:[#allocation11 + $0x148] sm:$0xff]
    %v1638 = vld [vmem:[#allocation11 + $0x150] sm:$0xff]
    %v1639 = vld [vmem:[#allocation11 + $0x158] sm:$0xff]
    %v1640 = vld [vmem:[#allocation11 + $0x160] sm:$0xff]
    %v1641 = vld [vmem:[#allocation11 + $0x168] sm:$0xff]
    %v1642 = vld [vmem:[#allocation11 + $0x170] sm:$0xff]
    %v1643 = vld [vmem:[#allocation11 + $0x178] sm:$0xff]
    %v1644 = vld [vmem:[#allocation11 + $0x180] sm:$0xff]
    %v1645 = vld [vmem:[#allocation11 + $0x188] sm:$0xff]
    %v1646 = vld [vmem:[#allocation11 + $0x190] sm:$0xff]
    %v1647 = vld [vmem:[#allocation11 + $0x198] sm:$0xff]
    %v1648 = vld [vmem:[#allocation11 + $0x1a0] sm:$0xff]
    %v1649 = vld [vmem:[#allocation11 + $0x1a8] sm:$0xff]
    %v1650 = vld [vmem:[#allocation11 + $0x1b0] sm:$0xff]
    %v1651 = vld [vmem:[#allocation11 + $0x1b8] sm:$0xff]
    %v1652 = vld [vmem:[#allocation11 + $0x1c0] sm:$0xff]
    %v1653 = vld [vmem:[#allocation11 + $0x1c8] sm:$0xff]
    %v1654 = vld [vmem:[#allocation11 + $0x1d0] sm:$0xff]
    %v1655 = vld [vmem:[#allocation11 + $0x1d8] sm:$0xff]
    %v1656 = vld [vmem:[#allocation11 + $0x1e0] sm:$0xff]
    %v1657 = vld [vmem:[#allocation11 + $0x1e8] sm:$0xff]
    %v1658 = vld [vmem:[#allocation11 + $0x1f0] sm:$0xff]
    %v1659 = vld [vmem:[#allocation11 + $0x1f8] sm:$0xff]
    %v1660 = vld [vmem:[#allocation11 + $0x200] sm:$0xff]
    %v1661 = vld [vmem:[#allocation11 + $0x208] sm:$0xff]
    %v1662 = vld [vmem:[#allocation11 + $0x210] sm:$0xff]
    %v1663 = vld [vmem:[#allocation11 + $0x218] sm:$0xff]
    %v1664 = vld [vmem:[#allocation11 + $0x220] sm:$0xff]
    %v1665 = vld [vmem:[#allocation11 + $0x228] sm:$0xff]
    %v1666 = vld [vmem:[#allocation11 + $0x230] sm:$0xff]
    %v1667 = vld [vmem:[#allocation11 + $0x238] sm:$0xff]
    %v1668 = vld [vmem:[#allocation11 + $0x240] sm:$0xff]
    %v1669 = vld [vmem:[#allocation11 + $0x248] sm:$0xff]
    %v1670 = vld [vmem:[#allocation11 + $0x250] sm:$0xff]
    %v1671 = vld [vmem:[#allocation11 + $0x258] sm:$0xff]
    %v1672 = vld [vmem:[#allocation11 + $0x260] sm:$0xff]
    %v1673 = vld [vmem:[#allocation11 + $0x268] sm:$0xff]
    %v1674 = vld [vmem:[#allocation11 + $0x270] sm:$0xff]
    %v1675 = vld [vmem:[#allocation11 + $0x278] sm:$0xff]
    %v1676 = vld [vmem:[#allocation11 + $0x280] sm:$0xff]
    %v1677 = vld [vmem:[#allocation11 + $0x288] sm:$0xff]
    %v1678 = vld [vmem:[#allocation11 + $0x290] sm:$0xff]
    %v1679 = vld [vmem:[#allocation11 + $0x298] sm:$0xff]
    %v1680 = vld [vmem:[#allocation11 + $0x2a0] sm:$0xff]
    %v1681 = vld [vmem:[#allocation11 + $0x2a8] sm:$0xff]
    %v1682 = vld [vmem:[#allocation11 + $0x2b0] sm:$0xff]
    %v1683 = vld [vmem:[#allocation11 + $0x2b8] sm:$0xff]
    %v1684 = vld [vmem:[#allocation11 + $0x2c0] sm:$0xff]
    %v1685 = vld [vmem:[#allocation11 + $0x2c8] sm:$0xff]
    %v1686 = vld [vmem:[#allocation11 + $0x2d0] sm:$0xff]
    %v1687 = vld [vmem:[#allocation11 + $0x2d8] sm:$0xff]
    %v1688 = vld [vmem:[#allocation11 + $0x2e0] sm:$0xff]
    %v1689 = vld [vmem:[#allocation11 + $0x2e8] sm:$0xff]
    %v1690 = vld [vmem:[#allocation11 + $0x2f0] sm:$0xff]
    %v1691 = vld [vmem:[#allocation11 + $0x2f8] sm:$0xff]
    %v1692 = vld [vmem:[#allocation11 + $0x300] sm:$0xff]
    %v1693 = vld [vmem:[#allocation11 + $0x308] sm:$0xff]
    %v1694 = vld [vmem:[#allocation11 + $0x310] sm:$0xff]
    %v1695 = vld [vmem:[#allocation11 + $0x318] sm:$0xff]
    %v1696 = vld [vmem:[#allocation11 + $0x320] sm:$0xff]
    %v1697 = vld [vmem:[#allocation11 + $0x328] sm:$0xff]
    %v1698 = vld [vmem:[#allocation11 + $0x330] sm:$0xff]
    %v1699 = vld [vmem:[#allocation11 + $0x338] sm:$0xff]
    %v1700 = vld [vmem:[#allocation11 + $0x340] sm:$0xff]
    %v1701 = vld [vmem:[#allocation11 + $0x348] sm:$0xff]
    %v1702 = vld [vmem:[#allocation11 + $0x350] sm:$0xff]
    %v1703 = vld [vmem:[#allocation11 + $0x358] sm:$0xff]
    %v1704 = vld [vmem:[#allocation11 + $0x360] sm:$0xff]
    %v1705 = vld [vmem:[#allocation11 + $0x368] sm:$0xff]
    %v1706 = vld [vmem:[#allocation11 + $0x370] sm:$0xff]
    %v1707 = vld [vmem:[#allocation11 + $0x378] sm:$0xff]
    %v1708 = vld [vmem:[#allocation11 + $0x380] sm:$0xff]
    %v1709 = vld [vmem:[#allocation11 + $0x388] sm:$0xff]
    %v1710 = vld [vmem:[#allocation11 + $0x390] sm:$0xff]
    %v1711 = vld [vmem:[#allocation11 + $0x398] sm:$0xff]
    %v1712 = vld [vmem:[#allocation11 + $0x3a0] sm:$0xff]
    %v1713 = vld [vmem:[#allocation11 + $0x3a8] sm:$0xff]
    %v1714 = vld [vmem:[#allocation11 + $0x3b0] sm:$0xff]
    %v1715 = vld [vmem:[#allocation11 + $0x3b8] sm:$0xff]
    %v1716 = vld [vmem:[#allocation11 + $0x3c0] sm:$0xff]
    %v1717 = vld [vmem:[#allocation11 + $0x3c8] sm:$0xff]
    %v1718 = vld [vmem:[#allocation11 + $0x3d0] sm:$0xff]
    %v1719 = vld [vmem:[#allocation11 + $0x3d8] sm:$0xff]
    %v1720 = vld [vmem:[#allocation11 + $0x3e0] sm:$0xff]
    %v1721 = vld [vmem:[#allocation11 + $0x3e8] sm:$0xff]
    %v1722 = vld [vmem:[#allocation11 + $0x3f0] sm:$0xff]
    %v1723 = vld [vmem:[#allocation11 + $0x3f8] sm:$0xff]
    %v1724 = vld [vmem:[#allocation11 + $0x400] sm:$0xff]
    %v1725 = vld [vmem:[#allocation11 + $0x408] sm:$0xff]
    %v1726 = vld [vmem:[#allocation11 + $0x410] sm:$0xff]
    %v1727 = vld [vmem:[#allocation11 + $0x418] sm:$0xff]
    %v1728 = vld [vmem:[#allocation11 + $0x420] sm:$0xff]
    %v1729 = vld [vmem:[#allocation11 + $0x428] sm:$0xff]
    %v1730 = vld [vmem:[#allocation11 + $0x430] sm:$0xff]
    %v1731 = vld [vmem:[#allocation11 + $0x438] sm:$0xff]
    %v1732 = vld [vmem:[#allocation11 + $0x440] sm:$0xff]
    %v1733 = vld [vmem:[#allocation11 + $0x448] sm:$0xff]
    %v1734 = vld [vmem:[#allocation11 + $0x450] sm:$0xff]
    %v1735 = vld [vmem:[#allocation11 + $0x458] sm:$0xff]
    %v1736 = vld [vmem:[#allocation11 + $0x460] sm:$0xff]
    %v1737 = vld [vmem:[#allocation11 + $0x468] sm:$0xff]
    %v1738 = vld [vmem:[#allocation11 + $0x470] sm:$0xff]
    %v1739 = vld [vmem:[#allocation11 + $0x478] sm:$0xff]
    %v1740 = vld [vmem:[#allocation11 + $0x480] sm:$0xff]
    %v1741 = vld [vmem:[#allocation11 + $0x488] sm:$0xff]
    %v1742 = vld [vmem:[#allocation11 + $0x490] sm:$0xff]
    %v1743 = vld [vmem:[#allocation11 + $0x498] sm:$0xff]
    %v1744 = vld [vmem:[#allocation11 + $0x4a0] sm:$0xff]
    %v1745 = vld [vmem:[#allocation11 + $0x4a8] sm:$0xff]
    %v1746 = vld [vmem:[#allocation11 + $0x4b0] sm:$0xff]
    %v1747 = vld [vmem:[#allocation11 + $0x4b8] sm:$0xff]
    %v1748 = vld [vmem:[#allocation11 + $0x4c0] sm:$0xff]
    %v1749 = vld [vmem:[#allocation11 + $0x4c8] sm:$0xff]
    %v1750 = vld [vmem:[#allocation11 + $0x4d0] sm:$0xff]
    %v1751 = vld [vmem:[#allocation11 + $0x4d8] sm:$0xff]
    %v1752 = vld [vmem:[#allocation11 + $0x4e0] sm:$0xff]
    %v1753 = vld [vmem:[#allocation11 + $0x4e8] sm:$0xff]
    %v1754 = vld [vmem:[#allocation11 + $0x4f0] sm:$0xff]
    %v1755 = vld [vmem:[#allocation11 + $0x4f8] sm:$0xff]
    %v1756 = vld [vmem:[#allocation11 + $0x500] sm:$0xff]
    %v1757 = vld [vmem:[#allocation11 + $0x508] sm:$0xff]
    %v1758 = vld [vmem:[#allocation11 + $0x510] sm:$0xff]
    %v1759 = vld [vmem:[#allocation11 + $0x518] sm:$0xff]
    %v1760 = vld [vmem:[#allocation11 + $0x520] sm:$0xff]
    %v1761 = vld [vmem:[#allocation11 + $0x528] sm:$0xff]
    %v1762 = vld [vmem:[#allocation11 + $0x530] sm:$0xff]
    %v1763 = vld [vmem:[#allocation11 + $0x538] sm:$0xff]
    %v1764 = vld [vmem:[#allocation11 + $0x540] sm:$0xff]
    %v1765 = vld [vmem:[#allocation11 + $0x548] sm:$0xff]
    %v1766 = vld [vmem:[#allocation11 + $0x550] sm:$0xff]
    %v1767 = vld [vmem:[#allocation11 + $0x558] sm:$0xff]
    %v1768 = vld [vmem:[#allocation11 + $0x560] sm:$0xff]
    %v1769 = vld [vmem:[#allocation11 + $0x568] sm:$0xff]
    %v1770 = vld [vmem:[#allocation11 + $0x570] sm:$0xff]
    %v1771 = vld [vmem:[#allocation11 + $0x578] sm:$0xff]
    %v1772 = vld [vmem:[#allocation11 + $0x580] sm:$0xff]
    %v1773 = vld [vmem:[#allocation11 + $0x588] sm:$0xff]
    %v1774 = vld [vmem:[#allocation11 + $0x590] sm:$0xff]
    %v1775 = vld [vmem:[#allocation11 + $0x598] sm:$0xff]
    %v1776 = vld [vmem:[#allocation11 + $0x5a0] sm:$0xff]
    %v1777 = vld [vmem:[#allocation11 + $0x5a8] sm:$0xff]
    %v1778 = vld [vmem:[#allocation11 + $0x5b0] sm:$0xff]
    %v1779 = vld [vmem:[#allocation11 + $0x5b8] sm:$0xff]
    %v1780 = vld [vmem:[#allocation11 + $0x5c0] sm:$0xff]
    %v1781 = vld [vmem:[#allocation11 + $0x5c8] sm:$0xff]
    %v1782 = vld [vmem:[#allocation11 + $0x5d0] sm:$0xff]
    %v1783 = vld [vmem:[#allocation11 + $0x5d8] sm:$0xff]
    %v1784 = vld [vmem:[#allocation11 + $0x5e0] sm:$0xff]
    %v1785 = vld [vmem:[#allocation11 + $0x5e8] sm:$0xff]
    %v1786 = vld [vmem:[#allocation11 + $0x5f0] sm:$0xff]
    %v1787 = vld [vmem:[#allocation11 + $0x5f8] sm:$0xff]
    %v1788 = vld [vmem:[#allocation11 + $0x600] sm:$0xff]
    %v1789 = vld [vmem:[#allocation11 + $0x608] sm:$0xff]
    %v1790 = vld [vmem:[#allocation11 + $0x610] sm:$0xff]
    %v1791 = vld [vmem:[#allocation11 + $0x618] sm:$0xff]
    %v1792 = vld [vmem:[#allocation11 + $0x620] sm:$0xff]
    %v1793 = vld [vmem:[#allocation11 + $0x628] sm:$0xff]
    %v1794 = vld [vmem:[#allocation11 + $0x630] sm:$0xff]
    %v1795 = vld [vmem:[#allocation11 + $0x638] sm:$0xff]
    %v1796 = vld [vmem:[#allocation11 + $0x640] sm:$0xff]
    %v1797 = vld [vmem:[#allocation11 + $0x648] sm:$0xff]
    %v1798 = vld [vmem:[#allocation11 + $0x650] sm:$0xff]
    %v1799 = vld [vmem:[#allocation11 + $0x658] sm:$0xff]
    %v1800 = vld [vmem:[#allocation11 + $0x660] sm:$0xff]
    %v1801 = vld [vmem:[#allocation11 + $0x668] sm:$0xff]
    %v1802 = vld [vmem:[#allocation11 + $0x670] sm:$0xff]
    %v1803 = vld [vmem:[#allocation11 + $0x678] sm:$0xff]
    %v1804 = vld [vmem:[#allocation11 + $0x680] sm:$0xff]
    %v1805 = vld [vmem:[#allocation11 + $0x688] sm:$0xff]
    %v1806 = vld [vmem:[#allocation11 + $0x690] sm:$0xff]
    %v1807 = vld [vmem:[#allocation11 + $0x698] sm:$0xff]
    %v1808 = vld [vmem:[#allocation11 + $0x6a0] sm:$0xff]
    %v1809 = vld [vmem:[#allocation11 + $0x6a8] sm:$0xff]
    %v1810 = vld [vmem:[#allocation11 + $0x6b0] sm:$0xff]
    %v1811 = vld [vmem:[#allocation11 + $0x6b8] sm:$0xff]
    %v1812 = vld [vmem:[#allocation11 + $0x6c0] sm:$0xff]
    %v1813 = vld [vmem:[#allocation11 + $0x6c8] sm:$0xff]
    %v1814 = vld [vmem:[#allocation11 + $0x6d0] sm:$0xff]
    %v1815 = vld [vmem:[#allocation11 + $0x6d8] sm:$0xff]
    %v1816 = vld [vmem:[#allocation11 + $0x6e0] sm:$0xff]
    %v1817 = vld [vmem:[#allocation11 + $0x6e8] sm:$0xff]
    %v1818 = vld [vmem:[#allocation11 + $0x6f0] sm:$0xff]
    %v1819 = vld [vmem:[#allocation11 + $0x6f8] sm:$0xff]
    %v1820 = vld [vmem:[#allocation11 + $0x700] sm:$0xff]
    %v1821 = vld [vmem:[#allocation11 + $0x708] sm:$0xff]
    %v1822 = vld [vmem:[#allocation11 + $0x710] sm:$0xff]
    %v1823 = vld [vmem:[#allocation11 + $0x718] sm:$0xff]
    %v1824 = vld [vmem:[#allocation11 + $0x720] sm:$0xff]
    %v1825 = vld [vmem:[#allocation11 + $0x728] sm:$0xff]
    %v1826 = vld [vmem:[#allocation11 + $0x730] sm:$0xff]
    %v1827 = vld [vmem:[#allocation11 + $0x738] sm:$0xff]
    %v1828 = vld [vmem:[#allocation11 + $0x740] sm:$0xff]
    %v1829 = vld [vmem:[#allocation11 + $0x748] sm:$0xff]
    %v1830 = vld [vmem:[#allocation11 + $0x750] sm:$0xff]
    %v1831 = vld [vmem:[#allocation11 + $0x758] sm:$0xff]
    %v1832 = vld [vmem:[#allocation11 + $0x760] sm:$0xff]
    %v1833 = vld [vmem:[#allocation11 + $0x768] sm:$0xff]
    %v1834 = vld [vmem:[#allocation11 + $0x770] sm:$0xff]
    %v1835 = vld [vmem:[#allocation11 + $0x778] sm:$0xff]
    %v1836 = vld [vmem:[#allocation11 + $0x780] sm:$0xff]
    %v1837 = vld [vmem:[#allocation11 + $0x788] sm:$0xff]
    %v1838 = vld [vmem:[#allocation11 + $0x790] sm:$0xff]
    %v1839 = vld [vmem:[#allocation11 + $0x798] sm:$0xff]
    %v1840 = vld [vmem:[#allocation11 + $0x7a0] sm:$0xff]
    %v1841 = vld [vmem:[#allocation11 + $0x7a8] sm:$0xff]
    %v1842 = vld [vmem:[#allocation11 + $0x7b0] sm:$0xff]
    %v1843 = vld [vmem:[#allocation11 + $0x7b8] sm:$0xff]
    %v1844 = vld [vmem:[#allocation11 + $0x7c0] sm:$0xff]
    %v1845 = vld [vmem:[#allocation11 + $0x7c8] sm:$0xff]
    %v1846 = vld [vmem:[#allocation11 + $0x7d0] sm:$0xff]
    %v1847 = vld [vmem:[#allocation11 + $0x7d8] sm:$0xff]
    %v1848 = vld [vmem:[#allocation11 + $0x7e0] sm:$0xff]
    %v1849 = vld [vmem:[#allocation11 + $0x7e8] sm:$0xff]
    %v1850 = vld [vmem:[#allocation11 + $0x7f0] sm:$0xff]
    %v1851 = vld [vmem:[#allocation11 + $0x7f8] sm:$0xff]
    %v1852 = vld [vmem:[#allocation11 + $0x800] sm:$0xff]
    %v1853 = vld [vmem:[#allocation11 + $0x808] sm:$0xff]
    %v1854 = vld [vmem:[#allocation11 + $0x810] sm:$0xff]
    %v1855 = vld [vmem:[#allocation11 + $0x818] sm:$0xff]
    %v1856 = vld [vmem:[#allocation11 + $0x820] sm:$0xff]
    %v1857 = vld [vmem:[#allocation11 + $0x828] sm:$0xff]
    %v1858 = vld [vmem:[#allocation11 + $0x830] sm:$0xff]
    %v1859 = vld [vmem:[#allocation11 + $0x838] sm:$0xff]
    %v1860 = vld [vmem:[#allocation11 + $0x840] sm:$0xff]
    %v1861 = vld [vmem:[#allocation11 + $0x848] sm:$0xff]
    %v1862 = vld [vmem:[#allocation11 + $0x850] sm:$0xff]
    %v1863 = vld [vmem:[#allocation11 + $0x858] sm:$0xff]
    %v1864 = vld [vmem:[#allocation11 + $0x860] sm:$0xff]
    %v1865 = vld [vmem:[#allocation11 + $0x868] sm:$0xff]
    %v1866 = vld [vmem:[#allocation11 + $0x870] sm:$0xff]
    %v1867 = vld [vmem:[#allocation11 + $0x878] sm:$0xff]
    %v1868 = vld [vmem:[#allocation11 + $0x880] sm:$0xff]
    %v1869 = vld [vmem:[#allocation11 + $0x888] sm:$0xff]
    %v1870 = vld [vmem:[#allocation11 + $0x890] sm:$0xff]
    %v1871 = vld [vmem:[#allocation11 + $0x898] sm:$0xff]
    %v1872 = vld [vmem:[#allocation11 + $0x8a0] sm:$0xff]
    %v1873 = vld [vmem:[#allocation11 + $0x8a8] sm:$0xff]
    %v1874 = vld [vmem:[#allocation11 + $0x8b0] sm:$0xff]
    %v1875 = vld [vmem:[#allocation11 + $0x8b8] sm:$0xff]
    %v1876 = vld [vmem:[#allocation11 + $0x8c0] sm:$0xff]
    %v1877 = vld [vmem:[#allocation11 + $0x8c8] sm:$0xff]
    %v1878 = vld [vmem:[#allocation11 + $0x8d0] sm:$0xff]
    %v1879 = vld [vmem:[#allocation11 + $0x8d8] sm:$0xff]
    %v1880 = vld [vmem:[#allocation11 + $0x8e0] sm:$0xff]
    %v1881 = vld [vmem:[#allocation11 + $0x8e8] sm:$0xff]
    %v1882 = vld [vmem:[#allocation11 + $0x8f0] sm:$0xff]
    %v1883 = vld [vmem:[#allocation11 + $0x8f8] sm:$0xff]
    %v1884 = vld [vmem:[#allocation11 + $0x900] sm:$0xff]
    %v1885 = vld [vmem:[#allocation11 + $0x908] sm:$0xff]
    %v1886 = vld [vmem:[#allocation11 + $0x910] sm:$0xff]
    %v1887 = vld [vmem:[#allocation11 + $0x918] sm:$0xff]
    %v1888 = vld [vmem:[#allocation11 + $0x920] sm:$0xff]
    %v1889 = vld [vmem:[#allocation11 + $0x928] sm:$0xff]
    %v1890 = vld [vmem:[#allocation11 + $0x930] sm:$0xff]
    %v1891 = vld [vmem:[#allocation11 + $0x938] sm:$0xff]
    %v1892 = vld [vmem:[#allocation11 + $0x940] sm:$0xff]
    %v1893 = vld [vmem:[#allocation11 + $0x948] sm:$0xff]
    %v1894 = vld [vmem:[#allocation11 + $0x950] sm:$0xff]
    %v1895 = vld [vmem:[#allocation11 + $0x958] sm:$0xff]
    %v1896 = vld [vmem:[#allocation11 + $0x960] sm:$0xff]
    %v1897 = vld [vmem:[#allocation11 + $0x968] sm:$0xff]
    %v1898 = vld [vmem:[#allocation11 + $0x970] sm:$0xff]
    %v1899 = vld [vmem:[#allocation11 + $0x978] sm:$0xff]
    %v1900 = vld [vmem:[#allocation11 + $0x980] sm:$0xff]
    %v1901 = vld [vmem:[#allocation11 + $0x988] sm:$0xff]
    %v1902 = vld [vmem:[#allocation11 + $0x990] sm:$0xff]
    %v1903 = vld [vmem:[#allocation11 + $0x998] sm:$0xff]
    %v1904 = vld [vmem:[#allocation11 + $0x9a0] sm:$0xff]
    %v1905 = vld [vmem:[#allocation11 + $0x9a8] sm:$0xff]
    %v1906 = vld [vmem:[#allocation11 + $0x9b0] sm:$0xff]
    %v1907 = vld [vmem:[#allocation11 + $0x9b8] sm:$0xff]
    %v1908 = vld [vmem:[#allocation11 + $0x9c0] sm:$0xff]
    %v1909 = vld [vmem:[#allocation11 + $0x9c8] sm:$0xff]
    %v1910 = vld [vmem:[#allocation11 + $0x9d0] sm:$0xff]
    %v1911 = vld [vmem:[#allocation11 + $0x9d8] sm:$0xff]
    %v1912 = vld [vmem:[#allocation11 + $0x9e0] sm:$0xff]
    %v1913 = vld [vmem:[#allocation11 + $0x9e8] sm:$0xff]
    %v1914 = vld [vmem:[#allocation11 + $0x9f0] sm:$0xff]
    %v1915 = vld [vmem:[#allocation11 + $0x9f8] sm:$0xff]
    %1916 = vmatprep.subr.mxu0 %v1597
    %1917 = vmatpush1.msra.mxu0 %v1596
    %1918 = vmatprep.subr.mxu0 %v1607
    %1919 = vmatpush1.msra.mxu0 %v1606
    %1920 = vmatprep.subr.mxu0 %v1617
    %1921 = vmatpush1.msra.mxu0 %v1616
    %1922 = vmatprep.subr.mxu0 %v1627
    %1923 = vmatpush1.msra.mxu0 %v1626
    %1924 = vmatprep.subr.mxu0 %v1637
    %1925 = vmatpush1.msra.mxu0 %v1636
    %1926 = vmatprep.subr.mxu0 %v1647
    %1927 = vmatpush1.msra.mxu0 %v1646
    %1928 = vmatprep.subr.mxu0 %v1657
    %1929 = vmatpush1.msra.mxu0 %v1656
    %1930 = vmatprep.subr.mxu0 %v1667
    %1931 = vmatpush1.msra.mxu0 %v1666
    %1932 = vmatprep.subr.mxu0 %v1677
    %1933 = vmatpush1.msra.mxu0 %v1676
    %1934 = vmatprep.subr.mxu0 %v1687
    %1935 = vmatpush1.msra.mxu0 %v1686
    %1936 = vmatprep.subr.mxu0 %v1697
    %1937 = vmatpush1.msra.mxu0 %v1696
    %1938 = vmatprep.subr.mxu0 %v1707
    %1939 = vmatpush1.msra.mxu0 %v1706
    %1940 = vmatprep.subr.mxu0 %v1717
    %1941 = vmatpush1.msra.mxu0 %v1716
    %1942 = vmatprep.subr.mxu0 %v1727
    %1943 = vmatpush1.msra.mxu0 %v1726
    %1944 = vmatprep.subr.mxu0 %v1737
    %1945 = vmatpush1.msra.mxu0 %v1736
    %1946 = vmatprep.subr.mxu0 %v1747
    %1947 = vmatpush1.msra.mxu0 %v1746
    %1948 = vmatprep.subr.mxu0 %v1757
    %1949 = vmatpush1.msra.mxu0 %v1756
    %1950 = vmatprep.subr.mxu0 %v1767
    %1951 = vmatpush1.msra.mxu0 %v1766
    %1952 = vmatprep.subr.mxu0 %v1777
    %1953 = vmatpush1.msra.mxu0 %v1776
    %1954 = vmatprep.subr.mxu0 %v1787
    %1955 = vmatpush1.msra.mxu0 %v1786
    %1956 = vmatprep.subr.mxu0 %v1797
    %1957 = vmatpush1.msra.mxu0 %v1796
    %1958 = vmatprep.subr.mxu0 %v1807
    %1959 = vmatpush1.msra.mxu0 %v1806
    %1960 = vmatprep.subr.mxu0 %v1817
    %1961 = vmatpush1.msra.mxu0 %v1816
    %1962 = vmatprep.subr.mxu0 %v1827
    %1963 = vmatpush1.msra.mxu0 %v1826
    %1964 = vmatprep.subr.mxu0 %v1837
    %1965 = vmatpush1.msra.mxu0 %v1836
    %1966 = vmatprep.subr.mxu0 %v1847
    %1967 = vmatpush1.msra.mxu0 %v1846
    %1968 = vmatprep.subr.mxu0 %v1857
    %1969 = vmatpush1.msra.mxu0 %v1856
    %1970 = vmatprep.subr.mxu0 %v1867
    %1971 = vmatpush1.msra.mxu0 %v1866
    %1972 = vmatprep.subr.mxu0 %v1877
    %1973 = vmatpush1.msra.mxu0 %v1876
    %1974 = vmatprep.subr.mxu0 %v1887
    %1975 = vmatpush1.msra.mxu0 %v1886
    %1976 = vmatprep.subr.mxu0 %v1897
    %1977 = vmatpush1.msra.mxu0 %v1896
    %1978 = vmatprep.subr.mxu0 %v1907
    %1979 = vmatpush1.msra.mxu0 %v1906
    %1980 = vmatprep.mubr.f32.mxu0 %v920
    %1981 = vmatmul.mubr.f32.gmra.mrb[0].mxu0 %v919
    %v1982 = vpop.f32.mrb[0].mxu0
    %v1983 = vadd.f32 0.0, %v1982
    %v1984 = vpop.f32.mrb[0].mxu0
    %v1985 = vadd.f32 0.0, %v1984
    %1986 = vdwg.mxu0
    %1987 = vmatprep.subr.mxu0 %v1599
    %1988 = vmatpush1.msra.mxu0 %v1598
    %1989 = vmatprep.subr.mxu0 %v1609
    %1990 = vmatpush1.msra.mxu0 %v1608
    %1991 = vmatprep.subr.mxu0 %v1619
    %1992 = vmatpush1.msra.mxu0 %v1618
    %1993 = vmatprep.subr.mxu0 %v1629
    %1994 = vmatpush1.msra.mxu0 %v1628
    %1995 = vmatprep.subr.mxu0 %v1639
    %1996 = vmatpush1.msra.mxu0 %v1638
    %1997 = vmatprep.subr.mxu0 %v1649
    %1998 = vmatpush1.msra.mxu0 %v1648
    %1999 = vmatprep.subr.mxu0 %v1659
    %2000 = vmatpush1.msra.mxu0 %v1658
    %2001 = vmatprep.subr.mxu0 %v1669
    %2002 = vmatpush1.msra.mxu0 %v1668
    %2003 = vmatprep.subr.mxu0 %v1679
    %2004 = vmatpush1.msra.mxu0 %v1678
    %2005 = vmatprep.subr.mxu0 %v1689
    %2006 = vmatpush1.msra.mxu0 %v1688
    %2007 = vmatprep.subr.mxu0 %v1699
    %2008 = vmatpush1.msra.mxu0 %v1698
    %2009 = vmatprep.subr.mxu0 %v1709
    %2010 = vmatpush1.msra.mxu0 %v1708
    %2011 = vmatprep.subr.mxu0 %v1719
    %2012 = vmatpush1.msra.mxu0 %v1718
    %2013 = vmatprep.subr.mxu0 %v1729
    %2014 = vmatpush1.msra.mxu0 %v1728
    %2015 = vmatprep.subr.mxu0 %v1739
    %2016 = vmatpush1.msra.mxu0 %v1738
    %2017 = vmatprep.subr.mxu0 %v1749
    %2018 = vmatpush1.msra.mxu0 %v1748
    %2019 = vmatprep.subr.mxu0 %v1759
    %2020 = vmatpush1.msra.mxu0 %v1758
    %2021 = vmatprep.subr.mxu0 %v1769
    %2022 = vmatpush1.msra.mxu0 %v1768
    %2023 = vmatprep.subr.mxu0 %v1779
    %2024 = vmatpush1.msra.mxu0 %v1778
    %2025 = vmatprep.subr.mxu0 %v1789
    %2026 = vmatpush1.msra.mxu0 %v1788
    %2027 = vmatprep.subr.mxu0 %v1799
    %2028 = vmatpush1.msra.mxu0 %v1798
    %2029 = vmatprep.subr.mxu0 %v1809
    %2030 = vmatpush1.msra.mxu0 %v1808
    %2031 = vmatprep.subr.mxu0 %v1819
    %2032 = vmatpush1.msra.mxu0 %v1818
    %2033 = vmatprep.subr.mxu0 %v1829
    %2034 = vmatpush1.msra.mxu0 %v1828
    %2035 = vmatprep.subr.mxu0 %v1839
    %2036 = vmatpush1.msra.mxu0 %v1838
    %2037 = vmatprep.subr.mxu0 %v1849
    %2038 = vmatpush1.msra.mxu0 %v1848
    %2039 = vmatprep.subr.mxu0 %v1859
    %2040 = vmatpush1.msra.mxu0 %v1858
    %2041 = vmatprep.subr.mxu0 %v1869
    %2042 = vmatpush1.msra.mxu0 %v1868
    %2043 = vmatprep.subr.mxu0 %v1879
    %2044 = vmatpush1.msra.mxu0 %v1878
    %2045 = vmatprep.subr.mxu0 %v1889
    %2046 = vmatpush1.msra.mxu0 %v1888
    %2047 = vmatprep.subr.mxu0 %v1899
    %2048 = vmatpush1.msra.mxu0 %v1898
    %2049 = vmatprep.subr.mxu0 %v1909
    %2050 = vmatpush1.msra.mxu0 %v1908
    %2051 = vmatprep.mubr.f32.mxu0 %v920
    %2052 = vmatmul.mubr.f32.gmra.mrb[0].mxu0 %v919
    %v2053 = vpop.f32.mrb[0].mxu0
    %v2054 = vadd.f32 0.0, %v2053
    %v2055 = vpop.f32.mrb[0].mxu0
    %v2056 = vadd.f32 0.0, %v2055
    %2057 = vdwg.mxu0
    %2058 = vmatprep.subr.mxu0 %v1601
    %2059 = vmatpush1.msra.mxu0 %v1600
    %2060 = vmatprep.subr.mxu0 %v1611
    %2061 = vmatpush1.msra.mxu0 %v1610
    %2062 = vmatprep.subr.mxu0 %v1621
    %2063 = vmatpush1.msra.mxu0 %v1620
    %2064 = vmatprep.subr.mxu0 %v1631
    %2065 = vmatpush1.msra.mxu0 %v1630
    %2066 = vmatprep.subr.mxu0 %v1641
    %2067 = vmatpush1.msra.mxu0 %v1640
    %2068 = vmatprep.subr.mxu0 %v1651
    %2069 = vmatpush1.msra.mxu0 %v1650
    %2070 = vmatprep.subr.mxu0 %v1661
    %2071 = vmatpush1.msra.mxu0 %v1660
    %2072 = vmatprep.subr.mxu0 %v1671
    %2073 = vmatpush1.msra.mxu0 %v1670
    %2074 = vmatprep.subr.mxu0 %v1681
    %2075 = vmatpush1.msra.mxu0 %v1680
    %2076 = vmatprep.subr.mxu0 %v1691
    %2077 = vmatpush1.msra.mxu0 %v1690
    %2078 = vmatprep.subr.mxu0 %v1701
    %2079 = vmatpush1.msra.mxu0 %v1700
    %2080 = vmatprep.subr.mxu0 %v1711
    %2081 = vmatpush1.msra.mxu0 %v1710
    %2082 = vmatprep.subr.mxu0 %v1721
    %2083 = vmatpush1.msra.mxu0 %v1720
    %2084 = vmatprep.subr.mxu0 %v1731
    %2085 = vmatpush1.msra.mxu0 %v1730
    %2086 = vmatprep.subr.mxu0 %v1741
    %2087 = vmatpush1.msra.mxu0 %v1740
    %2088 = vmatprep.subr.mxu0 %v1751
    %2089 = vmatpush1.msra.mxu0 %v1750
    %2090 = vmatprep.subr.mxu0 %v1761
    %2091 = vmatpush1.msra.mxu0 %v1760
    %2092 = vmatprep.subr.mxu0 %v1771
    %2093 = vmatpush1.msra.mxu0 %v1770
    %2094 = vmatprep.subr.mxu0 %v1781
    %2095 = vmatpush1.msra.mxu0 %v1780
    %2096 = vmatprep.subr.mxu0 %v1791
    %2097 = vmatpush1.msra.mxu0 %v1790
    %2098 = vmatprep.subr.mxu0 %v1801
    %2099 = vmatpush1.msra.mxu0 %v1800
    %2100 = vmatprep.subr.mxu0 %v1811
    %2101 = vmatpush1.msra.mxu0 %v1810
    %2102 = vmatprep.subr.mxu0 %v1821
    %2103 = vmatpush1.msra.mxu0 %v1820
    %2104 = vmatprep.subr.mxu0 %v1831
    %2105 = vmatpush1.msra.mxu0 %v1830
    %2106 = vmatprep.subr.mxu0 %v1841
    %2107 = vmatpush1.msra.mxu0 %v1840
    %2108 = vmatprep.subr.mxu0 %v1851
    %2109 = vmatpush1.msra.mxu0 %v1850
    %2110 = vmatprep.subr.mxu0 %v1861
    %2111 = vmatpush1.msra.mxu0 %v1860
    %2112 = vmatprep.subr.mxu0 %v1871
    %2113 = vmatpush1.msra.mxu0 %v1870
    %2114 = vmatprep.subr.mxu0 %v1881
    %2115 = vmatpush1.msra.mxu0 %v1880
    %2116 = vmatprep.subr.mxu0 %v1891
    %2117 = vmatpush1.msra.mxu0 %v1890
    %2118 = vmatprep.subr.mxu0 %v1901
    %2119 = vmatpush1.msra.mxu0 %v1900
    %2120 = vmatprep.subr.mxu0 %v1911
    %2121 = vmatpush1.msra.mxu0 %v1910
    %2122 = vmatprep.mubr.f32.mxu0 %v920
    %2123 = vmatmul.mubr.f32.gmra.mrb[0].mxu0 %v919
    %v2124 = vpop.f32.mrb[0].mxu0
    %v2125 = vadd.f32 0.0, %v2124
    %v2126 = vpop.f32.mrb[0].mxu0
    %v2127 = vadd.f32 0.0, %v2126
    %2128 = vdwg.mxu0
    %2129 = vmatprep.subr.mxu0 %v1603
    %2130 = vmatpush1.msra.mxu0 %v1602
    %2131 = vmatprep.subr.mxu0 %v1613
    %2132 = vmatpush1.msra.mxu0 %v1612
    %2133 = vmatprep.subr.mxu0 %v1623
    %2134 = vmatpush1.msra.mxu0 %v1622
    %2135 = vmatprep.subr.mxu0 %v1633
    %2136 = vmatpush1.msra.mxu0 %v1632
    %2137 = vmatprep.subr.mxu0 %v1643
    %2138 = vmatpush1.msra.mxu0 %v1642
    %2139 = vmatprep.subr.mxu0 %v1653
    %2140 = vmatpush1.msra.mxu0 %v1652
    %2141 = vmatprep.subr.mxu0 %v1663
    %2142 = vmatpush1.msra.mxu0 %v1662
    %2143 = vmatprep.subr.mxu0 %v1673
    %2144 = vmatpush1.msra.mxu0 %v1672
    %2145 = vmatprep.subr.mxu0 %v1683
    %2146 = vmatpush1.msra.mxu0 %v1682
    %2147 = vmatprep.subr.mxu0 %v1693
    %2148 = vmatpush1.msra.mxu0 %v1692
    %2149 = vmatprep.subr.mxu0 %v1703
    %2150 = vmatpush1.msra.mxu0 %v1702
    %2151 = vmatprep.subr.mxu0 %v1713
    %2152 = vmatpush1.msra.mxu0 %v1712
    %2153 = vmatprep.subr.mxu0 %v1723
    %2154 = vmatpush1.msra.mxu0 %v1722
    %2155 = vmatprep.subr.mxu0 %v1733
    %2156 = vmatpush1.msra.mxu0 %v1732
    %2157 = vmatprep.subr.mxu0 %v1743
    %2158 = vmatpush1.msra.mxu0 %v1742
    %2159 = vmatprep.subr.mxu0 %v1753
    %2160 = vmatpush1.msra.mxu0 %v1752
    %2161 = vmatprep.subr.mxu0 %v1763
    %2162 = vmatpush1.msra.mxu0 %v1762
    %2163 = vmatprep.subr.mxu0 %v1773
    %2164 = vmatpush1.msra.mxu0 %v1772
    %2165 = vmatprep.subr.mxu0 %v1783
    %2166 = vmatpush1.msra.mxu0 %v1782
    %2167 = vmatprep.subr.mxu0 %v1793
    %2168 = vmatpush1.msra.mxu0 %v1792
    %2169 = vmatprep.subr.mxu0 %v1803
    %2170 = vmatpush1.msra.mxu0 %v1802
    %2171 = vmatprep.subr.mxu0 %v1813
    %2172 = vmatpush1.msra.mxu0 %v1812
    %2173 = vmatprep.subr.mxu0 %v1823
    %2174 = vmatpush1.msra.mxu0 %v1822
    %2175 = vmatprep.subr.mxu0 %v1833
    %2176 = vmatpush1.msra.mxu0 %v1832
    %2177 = vmatprep.subr.mxu0 %v1843
    %2178 = vmatpush1.msra.mxu0 %v1842
    %2179 = vmatprep.subr.mxu0 %v1853
    %2180 = vmatpush1.msra.mxu0 %v1852
    %2181 = vmatprep.subr.mxu0 %v1863
    %2182 = vmatpush1.msra.mxu0 %v1862
    %2183 = vmatprep.subr.mxu0 %v1873
    %2184 = vmatpush1.msra.mxu0 %v1872
    %2185 = vmatprep.subr.mxu0 %v1883
    %2186 = vmatpush1.msra.mxu0 %v1882
    %2187 = vmatprep.subr.mxu0 %v1893
    %2188 = vmatpush1.msra.mxu0 %v1892
    %2189 = vmatprep.subr.mxu0 %v1903
    %2190 = vmatpush1.msra.mxu0 %v1902
    %2191 = vmatprep.subr.mxu0 %v1913
    %2192 = vmatpush1.msra.mxu0 %v1912
    %2193 = vmatprep.mubr.f32.mxu0 %v920
    %2194 = vmatmul.mubr.f32.gmra.mrb[0].mxu0 %v919
    %v2195 = vpop.f32.mrb[0].mxu0
    %v2196 = vadd.f32 0.0, %v2195
    %v2197 = vpop.f32.mrb[0].mxu0
    %v2198 = vadd.f32 0.0, %v2197
    %2199 = vdwg.mxu0
    %2200 = vmatprep.subr.mxu0 %v1605
    %2201 = vmatpush1.msra.mxu0 %v1604
    %2202 = vmatprep.subr.mxu0 %v1615
    %2203 = vmatpush1.msra.mxu0 %v1614
    %2204 = vmatprep.subr.mxu0 %v1625
    %2205 = vmatpush1.msra.mxu0 %v1624
    %2206 = vmatprep.subr.mxu0 %v1635
    %2207 = vmatpush1.msra.mxu0 %v1634
    %2208 = vmatprep.subr.mxu0 %v1645
    %2209 = vmatpush1.msra.mxu0 %v1644
    %2210 = vmatprep.subr.mxu0 %v1655
    %2211 = vmatpush1.msra.mxu0 %v1654
    %2212 = vmatprep.subr.mxu0 %v1665
    %2213 = vmatpush1.msra.mxu0 %v1664
    %2214 = vmatprep.subr.mxu0 %v1675
    %2215 = vmatpush1.msra.mxu0 %v1674
    %2216 = vmatprep.subr.mxu0 %v1685
    %2217 = vmatpush1.msra.mxu0 %v1684
    %2218 = vmatprep.subr.mxu0 %v1695
    %2219 = vmatpush1.msra.mxu0 %v1694
    %2220 = vmatprep.subr.mxu0 %v1705
    %2221 = vmatpush1.msra.mxu0 %v1704
    %2222 = vmatprep.subr.mxu0 %v1715
    %2223 = vmatpush1.msra.mxu0 %v1714
    %2224 = vmatprep.subr.mxu0 %v1725
    %2225 = vmatpush1.msra.mxu0 %v1724
    %2226 = vmatprep.subr.mxu0 %v1735
    %2227 = vmatpush1.msra.mxu0 %v1734
    %2228 = vmatprep.subr.mxu0 %v1745
    %2229 = vmatpush1.msra.mxu0 %v1744
    %2230 = vmatprep.subr.mxu0 %v1755
    %2231 = vmatpush1.msra.mxu0 %v1754
    %2232 = vmatprep.subr.mxu0 %v1765
    %2233 = vmatpush1.msra.mxu0 %v1764
    %2234 = vmatprep.subr.mxu0 %v1775
    %2235 = vmatpush1.msra.mxu0 %v1774
    %2236 = vmatprep.subr.mxu0 %v1785
    %2237 = vmatpush1.msra.mxu0 %v1784
    %2238 = vmatprep.subr.mxu0 %v1795
    %2239 = vmatpush1.msra.mxu0 %v1794
    %2240 = vmatprep.subr.mxu0 %v1805
    %2241 = vmatpush1.msra.mxu0 %v1804
    %2242 = vmatprep.subr.mxu0 %v1815
    %2243 = vmatpush1.msra.mxu0 %v1814
    %2244 = vmatprep.subr.mxu0 %v1825
    %2245 = vmatpush1.msra.mxu0 %v1824
    %2246 = vmatprep.subr.mxu0 %v1835
    %2247 = vmatpush1.msra.mxu0 %v1834
    %2248 = vmatprep.subr.mxu0 %v1845
    %2249 = vmatpush1.msra.mxu0 %v1844
    %2250 = vmatprep.subr.mxu0 %v1855
    %2251 = vmatpush1.msra.mxu0 %v1854
    %2252 = vmatprep.subr.mxu0 %v1865
    %2253 = vmatpush1.msra.mxu0 %v1864
    %2254 = vmatprep.subr.mxu0 %v1875
    %2255 = vmatpush1.msra.mxu0 %v1874
    %2256 = vmatprep.subr.mxu0 %v1885
    %2257 = vmatpush1.msra.mxu0 %v1884
    %2258 = vmatprep.subr.mxu0 %v1895
    %2259 = vmatpush1.msra.mxu0 %v1894
    %2260 = vmatprep.subr.mxu0 %v1905
    %2261 = vmatpush1.msra.mxu0 %v1904
    %2262 = vmatprep.subr.mxu0 %v1915
    %2263 = vmatpush1.msra.mxu0 %v1914
    %2264 = vmatprep.mubr.f32.mxu0 %v920
    %2265 = vmatmul.mubr.f32.gmra.mrb[0].mxu0 %v919
    %v2266 = vpop.f32.mrb[0].mxu0
    %v2267 = vadd.f32 0.0, %v2266
    %v2268 = vpop.f32.mrb[0].mxu0
    %v2269 = vadd.f32 0.0, %v2268
    %2270 = vdwg.mxu0
    %v2271 = vmul.f32 %v1308, %v1308
    %v2272 = vmul.f32 %v1310, %v1310
    %v2273 = vmul.f32 %v1983, %v1983
    %v2274 = vmul.f32 %v1985, %v1985
    %v2275 = vadd.f32 %v2271, %v2273
    %v2276 = vadd.f32 %v2272, %v2274
    %v2277 = vld [vmem:[%s7] sm:$0xff]
    %v2278 = vld [vmem:[%s7 + $0x8] sm:$0xff]
    %v2279 = vld [vmem:[%s7 + $0x10] sm:$0xff]
    %v2280 = vld [vmem:[%s7 + $0x18] sm:$0xff]
    %v2281 = vld [vmem:[%s7 + $0x20] sm:$0xff]
    %v2282 = vld [vmem:[%s7 + $0x28] sm:$0xff]
    %v2283 = vld [vmem:[%s7 + $0x30] sm:$0xff]
    %v2284 = vld [vmem:[%s7 + $0x38] sm:$0xff]
    %v2285 = vld [vmem:[%s7 + $0x40] sm:$0xff]
    %v2286 = vld [vmem:[%s7 + $0x48] sm:$0xff]
    %v2287 = vld [vmem:[%s7 + $0x50] sm:$0xff]
    %v2288 = vld [vmem:[%s7 + $0x58] sm:$0xff]
    %v2289 = vld [vmem:[%s7 + $0x60] sm:$0xff]
    %v2290 = vld [vmem:[%s7 + $0x68] sm:$0xff]
    %v2291 = vld [vmem:[%s7 + $0x70] sm:$0xff]
    %v2292 = vld [vmem:[%s7 + $0x78] sm:$0xff]
    %v2293 = vld [vmem:[%s7 + $0x80] sm:$0xff]
    %v2294 = vld [vmem:[%s7 + $0x88] sm:$0xff]
    %v2295 = vld [vmem:[%s7 + $0x90] sm:$0xff]
    %v2296 = vld [vmem:[%s7 + $0x98] sm:$0xff]
    %v2297 = vld [vmem:[%s7 + $0xa0] sm:$0xff]
    %v2298 = vld [vmem:[%s7 + $0xa8] sm:$0xff]
    %v2299 = vld [vmem:[%s7 + $0xb0] sm:$0xff]
    %v2300 = vld [vmem:[%s7 + $0xb8] sm:$0xff]
    %v2301 = vld [vmem:[%s7 + $0xc0] sm:$0xff]
    %v2302 = vld [vmem:[%s7 + $0xc8] sm:$0xff]
    %v2303 = vld [vmem:[%s7 + $0xd0] sm:$0xff]
    %v2304 = vld [vmem:[%s7 + $0xd8] sm:$0xff]
    %v2305 = vld [vmem:[%s7 + $0xe0] sm:$0xff]
    %v2306 = vld [vmem:[%s7 + $0xe8] sm:$0xff]
    %v2307 = vld [vmem:[%s7 + $0xf0] sm:$0xff]
    %v2308 = vld [vmem:[%s7 + $0xf8] sm:$0xff]
    %2309 = vmatprep.subr.mxu0 0.0
    %2310 = vmatpush1.msra.mxu0 %v2277
    %2311 = vmatprep.subr.mxu0 0.0
    %2312 = vmatpush1.msra.mxu0 %v2278
    %2313 = vmatprep.subr.mxu0 0.0
    %2314 = vmatpush1.msra.mxu0 %v2279
    %2315 = vmatprep.subr.mxu0 0.0
    %2316 = vmatpush1.msra.mxu0 %v2280
    %2317 = vmatprep.subr.mxu0 0.0
    %2318 = vmatpush1.msra.mxu0 %v2281
    %2319 = vmatprep.subr.mxu0 0.0
    %2320 = vmatpush1.msra.mxu0 %v2282
    %2321 = vmatprep.subr.mxu0 0.0
    %2322 = vmatpush1.msra.mxu0 %v2283
    %2323 = vmatprep.subr.mxu0 0.0
    %2324 = vmatpush1.msra.mxu0 %v2284
    %2325 = vmatprep.subr.mxu0 0.0
    %2326 = vmatpush1.msra.mxu0 %v2285
    %2327 = vmatprep.subr.mxu0 0.0
    %2328 = vmatpush1.msra.mxu0 %v2286
    %2329 = vmatprep.subr.mxu0 0.0
    %2330 = vmatpush1.msra.mxu0 %v2287
    %2331 = vmatprep.subr.mxu0 0.0
    %2332 = vmatpush1.msra.mxu0 %v2288
    %2333 = vmatprep.subr.mxu0 0.0
    %2334 = vmatpush1.msra.mxu0 %v2289
    %2335 = vmatprep.subr.mxu0 0.0
    %2336 = vmatpush1.msra.mxu0 %v2290
    %2337 = vmatprep.subr.mxu0 0.0
    %2338 = vmatpush1.msra.mxu0 %v2291
    %2339 = vmatprep.subr.mxu0 0.0
    %2340 = vmatpush1.msra.mxu0 %v2292
    %2341 = vmatprep.subr.mxu0 0.0
    %2342 = vmatpush1.msra.mxu0 %v2293
    %2343 = vmatprep.subr.mxu0 0.0
    %2344 = vmatpush1.msra.mxu0 %v2294
    %2345 = vmatprep.subr.mxu0 0.0
    %2346 = vmatpush1.msra.mxu0 %v2295
    %2347 = vmatprep.subr.mxu0 0.0
    %2348 = vmatpush1.msra.mxu0 %v2296
    %2349 = vmatprep.subr.mxu0 0.0
    %2350 = vmatpush1.msra.mxu0 %v2297
    %2351 = vmatprep.subr.mxu0 0.0
    %2352 = vmatpush1.msra.mxu0 %v2298
    %2353 = vmatprep.subr.mxu0 0.0
    %2354 = vmatpush1.msra.mxu0 %v2299
    %2355 = vmatprep.subr.mxu0 0.0
    %2356 = vmatpush1.msra.mxu0 %v2300
    %2357 = vmatprep.subr.mxu0 0.0
    %2358 = vmatpush1.msra.mxu0 %v2301
    %2359 = vmatprep.subr.mxu0 0.0
    %2360 = vmatpush1.msra.mxu0 %v2302
    %2361 = vmatprep.subr.mxu0 0.0
    %2362 = vmatpush1.msra.mxu0 %v2303
    %2363 = vmatprep.subr.mxu0 0.0
    %2364 = vmatpush1.msra.mxu0 %v2304
    %2365 = vmatprep.subr.mxu0 0.0
    %2366 = vmatpush1.msra.mxu0 %v2305
    %2367 = vmatprep.subr.mxu0 0.0
    %2368 = vmatpush1.msra.mxu0 %v2306
    %2369 = vmatprep.subr.mxu0 0.0
    %2370 = vmatpush1.msra.mxu0 %v2307
    %2371 = vmatprep.subr.mxu0 0.0
    %2372 = vmatpush1.msra.mxu0 %v2308
    %2373 = vmatprep.mubr.f32.mxu0 %v2276
    %2374 = vmatmul.mubr.f32.gmra.mrb[0].mxu0 %v2275
    %v2375 = vpop.f32.mrb[0].mxu0
    %v2376 = vadd.f32 0.0, %v2375
    %v2377 = vpop.f32.mrb[0].mxu0
    %2378 = vdwg.mxu0
    %v2379 = vmul.f32 %v1308, %v1379
    %v2380 = vmul.f32 %v1310, %v1381
    %v2381 = vmul.f32 %v1983, %v2054
    %v2382 = vmul.f32 %v1985, %v2056
    %v2383 = vadd.f32 %v2379, %v2381
    %v2384 = vadd.f32 %v2380, %v2382
    %v2385 = vadd.f32 %v2383, %v2384
    %2386 = vadd.xlane.f32.xlu0 %v2385
    %v2387 = vpop.xlane.xlu0 %2386
    %v2388 = vmul.f32 %v1308, %v1450
    %v2389 = vmul.f32 %v1310, %v1452
    %v2390 = vmul.f32 %v1983, %v2125
    %v2391 = vmul.f32 %v1985, %v2127
    %v2392 = vadd.f32 %v2388, %v2390
    %v2393 = vadd.f32 %v2389, %v2391
    %v2394 = vadd.f32 %v2392, %v2393
    %2395 = vadd.xlane.f32.xlu0 %v2394
    %v2396 = vpop.xlane.xlu0 %2395
    %v2397 = vmul.f32 %v1308, %v1521
    %v2398 = vmul.f32 %v1310, %v1523
    %v2399 = vmul.f32 %v1983, %v2196
    %v2400 = vmul.f32 %v1985, %v2198
    %v2401 = vadd.f32 %v2397, %v2399
    %v2402 = vadd.f32 %v2398, %v2400
    %v2403 = vadd.f32 %v2401, %v2402
    %2404 = vadd.xlane.f32.xlu0 %v2403
    %v2405 = vpop.xlane.xlu0 %2404
    %v2406 = vmul.f32 %v1308, %v1592
    %v2407 = vmul.f32 %v1310, %v1594
    %v2408 = vmul.f32 %v1983, %v2267
    %v2409 = vmul.f32 %v1985, %v2269
    %v2410 = vadd.f32 %v2406, %v2408
    %v2411 = vadd.f32 %v2407, %v2409
    %v2412 = vadd.f32 %v2410, %v2411
    %2413 = vadd.xlane.f32.xlu0 %v2412
    %v2414 = vpop.xlane.xlu0 %2413
    %vm2415 = vcmask 7168
    %v2416 = vsel %vm2415, %v2387, %v2396
    %vm2417 = vcmask 15360
    %v2418 = vsel %vm2417, %v2416, %v2405
    %vm2419 = vcmask 23552
    %v2420 = vsel %vm2419, %v2418, %v2414
    %v2421 = vmul.f32 %v2376, %v2376
    %v2422 = vmul.f32 %v2420, %v2420
    %v2423 = vadd.f32 %v2421, %v2422
    %v2424 = vrsqrt.pop %v2423
    %v2425 = vmul.f32 %v2423, %v2424
    %vm2426 = vcmp.eq.f32.partialorder %v2423, inf
    %v2427 = vsel %vm2426, %v2423, %v2425
    %vm2428 = vcmp.eq.f32.partialorder %v2423, 0.0
    %v2429 = vand.u32 %v2423, 2147483648
    %v2430 = vsel %vm2428, %v2429, %v2427
    %v2431 = vld [vmem:[#allocation14] sm:$0xff]
    %v2432 = vld [vmem:[#allocation14 + $0x8] sm:$0xff]
    %v2433 = vsel %vm906, %v776, 0
    %2435 = vmatprep.subr.mxu0 0.0
    %2436 = vmatpush1.msra.mxu0 %v2431
    %2437 = vmatprep.subr.mxu0 0.0
    %2438 = vmatpush1.msra.mxu0 %v2432
    %2439 = vmatprep.subr.mxu0 0.0
    %2440 = vmatpush1.msra.mxu0 0.0
    %2441 = vmatprep.subr.mxu0 0.0
    %2442 = vmatpush1.msra.mxu0 0.0
    %2443 = vmatprep.subr.mxu0 0.0
    %2444 = vmatpush1.msra.mxu0 0.0
    %2445 = vmatprep.subr.mxu0 0.0
    %2446 = vmatpush1.msra.mxu0 0.0
    %2447 = vmatprep.subr.mxu0 0.0
    %2448 = vmatpush1.msra.mxu0 0.0
    %2449 = vmatprep.subr.mxu0 0.0
    %2450 = vmatpush1.msra.mxu0 0.0
    %2451 = vmatprep.subr.mxu0 0.0
    %2452 = vmatpush1.msra.mxu0 0.0
    %2453 = vmatprep.subr.mxu0 0.0
    %2454 = vmatpush1.msra.mxu0 0.0
    %2455 = vmatprep.subr.mxu0 0.0
    %2456 = vmatpush1.msra.mxu0 0.0
    %2457 = vmatprep.subr.mxu0 0.0
    %2458 = vmatpush1.msra.mxu0 0.0
    %2459 = vmatprep.subr.mxu0 0.0
    %2460 = vmatpush1.msra.mxu0 0.0
    %2461 = vmatprep.subr.mxu0 0.0
    %2462 = vmatpush1.msra.mxu0 0.0
    %2463 = vmatprep.subr.mxu0 0.0
    %2464 = vmatpush1.msra.mxu0 0.0
    %2465 = vmatprep.subr.mxu0 0.0
    %2466 = vmatpush1.msra.mxu0 0.0
    %2467 = vmatprep.subr.mxu0 0.0
    %2468 = vmatpush1.msra.mxu0 0.0
    %2469 = vmatprep.subr.mxu0 0.0
    %2470 = vmatpush1.msra.mxu0 0.0
    %2471 = vmatprep.subr.mxu0 0.0
    %2472 = vmatpush1.msra.mxu0 0.0
    %2473 = vmatprep.subr.mxu0 0.0
    %2474 = vmatpush1.msra.mxu0 0.0
    %2475 = vmatprep.subr.mxu0 0.0
    %2476 = vmatpush1.msra.mxu0 0.0
    %2477 = vmatprep.subr.mxu0 0.0
    %2478 = vmatpush1.msra.mxu0 0.0
    %2479 = vmatprep.subr.mxu0 0.0
    %2480 = vmatpush1.msra.mxu0 0.0
    %2481 = vmatprep.subr.mxu0 0.0
    %2482 = vmatpush1.msra.mxu0 0.0
    %2483 = vmatprep.subr.mxu0 0.0
    %2484 = vmatpush1.msra.mxu0 0.0
    %2485 = vmatprep.subr.mxu0 0.0
    %2486 = vmatpush1.msra.mxu0 0.0
    %2487 = vmatprep.subr.mxu0 0.0
    %2488 = vmatpush1.msra.mxu0 0.0
    %2489 = vmatprep.subr.mxu0 0.0
    %2490 = vmatpush1.msra.mxu0 0.0
    %2491 = vmatprep.subr.mxu0 0.0
    %2492 = vmatpush1.msra.mxu0 0.0
    %2493 = vmatprep.subr.mxu0 0.0
    %2494 = vmatpush1.msra.mxu0 0.0
    %2495 = vmatprep.subr.mxu0 0.0
    %2496 = vmatpush1.msra.mxu0 0.0
    %2497 = vmatprep.subr.mxu0 0.0
    %2498 = vmatpush1.msra.mxu0 0.0
    %2499 = vmatprep.mubr.f32.mxu0 0.0
    %2500 = vmatmul.mubr.f32.gmra.mrb[0].mxu0 %v2433
    %v2501 = vpop.f32.mrb[0].mxu0
    %v2502 = vadd.f32 0.0, %v2501
    %v2503 = vpop.f32.mrb[0].mxu0
    %2504 = vdwg.mxu0
    %v2505 = vtanh.pop %v2430
    %v2506 = vld [vmem:[#allocation17] sm:$0x1]
    %v2508 = vlaneseq
    %v2509 = vshrl.u32 %v2508, 7
    %v2510 = vsub.s32 0, %v2509
    %v2511 = vrot.slane %v2506, %v2510
    %v2513 = vmul.f32 %v2505, %v2511
    %v2514 = vmul.f32 %v2513, 0.5
    %v2515 = vand.u32 2147483647, %v2514
    %vm2516 = vcmp.le.f32.partialorder %v2515, 0.7853982
    %vm2517 = vcmp.lt.s32.totalorder %v2514, 0
    %v2518 = vand.u32 %v2514, 2139095040
    %v2519 = vshrl.u32 %v2518, 23
    %v2520 = vsub.s32 %v2519, 127
    %v2521 = vand.u32 2147483647, %v2514
    %v2522 = vand.u32 %v2521, 8388607
    %v2523 = vor.u32 %v2522, 8388608
    %v2524 = vsub.s32 0, %v2523
    %v2525 = vadd.s32 %v2520, 1
    %vm2526 = vcmp.gt.s32.totalorder %v2525, 0
    %v2527 = vsel %vm2526, %v2525, 0
    %v2528 = vshrl.u32 %v2527, 5
    %v2529 = vand.u32 %v2527, 31
    %v2530 = vsub.s32 32, %v2529
    %v2531 = vshrl.u32 683565275, %v2530
    %v2532 = vshll.u32 683565275, %v2529
    %v2533 = vshrl.u32 2475754826, %v2530
    %v2534 = vor.u32 %v2532, %v2533
    %v2535 = vshll.u32 2475754826, %v2529
    %v2536 = vshrl.u32 2131351028, %v2530
    %v2537 = vor.u32 %v2535, %v2536
    %v2538 = vshll.u32 2131351028, %v2529
    %v2539 = vshrl.u32 2102212464, %v2530
    %v2540 = vor.u32 %v2538, %v2539
    %v2541 = vshll.u32 2102212464, %v2529
    %v2542 = vshrl.u32 920167782, %v2530
    %v2543 = vor.u32 %v2541, %v2542
    %v2544 = vshll.u32 920167782, %v2529
    %v2545 = vshrl.u32 1326507024, %v2530
    %v2546 = vor.u32 %v2544, %v2545
    %vm2547 = vcmp.lt.s32.totalorder %v2528, 1
    %vm2548 = vcmp.lt.s32.totalorder %v2528, 2
    %vm2549 = vcmp.lt.s32.totalorder %v2528, 3
    %vm2550 = vcmp.lt.s32.totalorder %v2528, 4
    %v2551 = vsel %vm2547, %v2531, %v2534
    %v2552 = vsel %vm2550, %v2540, 2102212464
    %v2553 = vsel %vm2549, %v2537, %v2552
    %v2554 = vsel %vm2548, %v2551, %v2553
    %v2555 = vsel %vm2547, %v2534, %v2537
    %v2556 = vsel %vm2550, %v2543, 920167782
    %v2557 = vsel %vm2549, %v2540, %v2556
    %v2558 = vsel %vm2548, %v2555, %v2557
    %v2559 = vsel %vm2547, %v2537, %v2540
    %v2560 = vsel %vm2550, %v2546, 1326507024
    %v2561 = vsel %vm2549, %v2543, %v2560
    %v2562 = vsel %vm2548, %v2559, %v2561
    %v2563 = vshll.u32 %v2523, 8
    %v2564 = vmul.u32.u64.compose %v2563, %v2562
    %v2565 = vextract.low.u32 %v2564
    %v2566 = vextract.high.u32 %v2564
    %v2567 = vmul.u32.u64.compose %v2563, %v2558
    %v2568 = vextract.low.u32 %v2567
    %v2569 = vextract.high.u32 %v2567
    %v2570 = vmul.u32 %v2563, %v2554
    %v2571 = vadd.s32 %v2566, %v2568
    %vm2572 = vc.u32 %v2566, %v2568
    %v2573 = vadd.s32 %v2569, 1
    %v2574 = vsel %vm2572, %v2573, %v2569
    %v2575 = vadd.s32 %v2570, %v2574
    %v2576 = vadd.s32 %v2575, 536870912
    %v2577 = vshrl.u32 %v2576, 30
    %v2578 = vshll.u32 %v2577, 30
    %v2579 = vsub.s32 %v2575, %v2578
    %vm2580 = vcmp.lt.s32.totalorder %v2579, 0
    %v2581 = vsub.s32 0, %v2579
    %v2582 = vsel %vm2580, %v2581, %v2579
    %v2583 = vclz %v2582
    %v2584 = vsub.s32 %v2583, 2
    %vm2585 = vcmp.gt.s32.totalorder 0, %v2584
    %v2586 = vsel %vm2585, 0, %v2584
    %v2587 = vsub.s32 32, %v2586
    %v2588 = vshll.u32 %v2579, %v2586
    %v2589 = vshrl.u32 %v2571, %v2587
    %v2590 = vor.u32 %v2588, %v2589
    %v2591 = vsub.s32 4294967266, %v2586
    %v2592 = vadd.s32 %v2591, 127
    %v2593 = vshll.u32 %v2592, 23
    %v2594 = vor.u32 4788187, %v2593
    %v2595 = vand.u32 2147483647, %v2594
    %v2597 = vcvt.s32.f32 %v2590
    %v2598 = vmul.f32 %v2597, %v2595
    %v2599 = vxor.u32 %v2598, 2147483648
    %v2600 = vsel %vm2517, %v2599, %v2598
    %v2601 = vsub.s32 4, %v2577
    %v2602 = vsel %vm2517, %v2601, %v2577
    %v2603 = vsel %vm2516, %v2514, %v2600
    %v2604 = vsel %vm2516, 0, %v2602
    %v2605 = vcosq.f32.pop %v2603
    %v2606 = vsinq.f32.pop %v2603
    %vm2607 = vweird.f32 %v2514
    %v2608 = vand.u32 %v2604, 3
    %vm2609 = vcmp.lt.s32.totalorder %v2608, 2
    %vm2610 = vcmp.eq.s32.totalorder %v2608, 0
    %v2611 = vxor.u32 %v2606, 2147483648
    %v2612 = vsel %vm2610, %v2605, %v2611
    %vm2613 = vcmp.eq.s32.totalorder %v2608, 2
    %v2614 = vxor.u32 %v2605, 2147483648
    %v2615 = vsel %vm2613, %v2614, %v2606
    %v2616 = vsel %vm2609, %v2612, %v2615
    %v2617 = vsel %vm2607, nan, %v2616
    %v2618 = vand.u32 2147483647, %v2514
    %vm2619 = vcmp.le.f32.partialorder %v2618, 0.7853982
    %vm2620 = vcmp.lt.s32.totalorder %v2514, 0
    %v2621 = vand.u32 %v2514, 2139095040
    %v2622 = vshrl.u32 %v2621, 23
    %v2623 = vsub.s32 %v2622, 127
    %v2624 = vand.u32 2147483647, %v2514
    %v2625 = vand.u32 %v2624, 8388607
    %v2626 = vor.u32 %v2625, 8388608
    %v2627 = vsub.s32 0, %v2626
    %v2628 = vadd.s32 %v2623, 1
    %vm2629 = vcmp.gt.s32.totalorder %v2628, 0
    %v2630 = vsel %vm2629, %v2628, 0
    %v2631 = vshrl.u32 %v2630, 5
    %v2632 = vand.u32 %v2630, 31
    %v2633 = vsub.s32 32, %v2632
    %v2634 = vshrl.u32 683565275, %v2633
    %v2635 = vshll.u32 683565275, %v2632
    %v2636 = vshrl.u32 2475754826, %v2633
    %v2637 = vor.u32 %v2635, %v2636
    %v2638 = vshll.u32 2475754826, %v2632
    %v2639 = vshrl.u32 2131351028, %v2633
    %v2640 = vor.u32 %v2638, %v2639
    %v2641 = vshll.u32 2131351028, %v2632
    %v2642 = vshrl.u32 2102212464, %v2633
    %v2643 = vor.u32 %v2641, %v2642
    %v2644 = vshll.u32 2102212464, %v2632
    %v2645 = vshrl.u32 920167782, %v2633
    %v2646 = vor.u32 %v2644, %v2645
    %v2647 = vshll.u32 920167782, %v2632
    %v2648 = vshrl.u32 1326507024, %v2633
    %v2649 = vor.u32 %v2647, %v2648
    %vm2650 = vcmp.lt.s32.totalorder %v2631, 1
    %vm2651 = vcmp.lt.s32.totalorder %v2631, 2
    %vm2652 = vcmp.lt.s32.totalorder %v2631, 3
    %vm2653 = vcmp.lt.s32.totalorder %v2631, 4
    %v2654 = vsel %vm2650, %v2634, %v2637
    %v2655 = vsel %vm2653, %v2643, 2102212464
    %v2656 = vsel %vm2652, %v2640, %v2655
    %v2657 = vsel %vm2651, %v2654, %v2656
    %v2658 = vsel %vm2650, %v2637, %v2640
    %v2659 = vsel %vm2653, %v2646, 920167782
    %v2660 = vsel %vm2652, %v2643, %v2659
    %v2661 = vsel %vm2651, %v2658, %v2660
    %v2662 = vsel %vm2650, %v2640, %v2643
    %v2663 = vsel %vm2653, %v2649, 1326507024
    %v2664 = vsel %vm2652, %v2646, %v2663
    %v2665 = vsel %vm2651, %v2662, %v2664
    %v2666 = vshll.u32 %v2626, 8
    %v2667 = vmul.u32.u64.compose %v2666, %v2665
    %v2668 = vextract.low.u32 %v2667
    %v2669 = vextract.high.u32 %v2667
    %v2670 = vmul.u32.u64.compose %v2666, %v2661
    %v2671 = vextract.low.u32 %v2670
    %v2672 = vextract.high.u32 %v2670
    %v2673 = vmul.u32 %v2666, %v2657
    %v2674 = vadd.s32 %v2669, %v2671
    %vm2675 = vc.u32 %v2669, %v2671
    %v2676 = vadd.s32 %v2672, 1
    %v2677 = vsel %vm2675, %v2676, %v2672
    %v2678 = vadd.s32 %v2673, %v2677
    %v2679 = vadd.s32 %v2678, 536870912
    %v2680 = vshrl.u32 %v2679, 30
    %v2681 = vshll.u32 %v2680, 30
    %v2682 = vsub.s32 %v2678, %v2681
    %vm2683 = vcmp.lt.s32.totalorder %v2682, 0
    %v2684 = vsub.s32 0, %v2682
    %v2685 = vsel %vm2683, %v2684, %v2682
    %v2686 = vclz %v2685
    %v2687 = vsub.s32 %v2686, 2
    %vm2688 = vcmp.gt.s32.totalorder 0, %v2687
    %v2689 = vsel %vm2688, 0, %v2687
    %v2690 = vsub.s32 32, %v2689
    %v2691 = vshll.u32 %v2682, %v2689
    %v2692 = vshrl.u32 %v2674, %v2690
    %v2693 = vor.u32 %v2691, %v2692
    %v2694 = vsub.s32 4294967266, %v2689
    %v2695 = vadd.s32 %v2694, 127
    %v2696 = vshll.u32 %v2695, 23
    %v2697 = vor.u32 4788187, %v2696
    %v2698 = vand.u32 2147483647, %v2697
    %v2700 = vcvt.s32.f32 %v2693
    %v2701 = vmul.f32 %v2700, %v2698
    %v2702 = vxor.u32 %v2701, 2147483648
    %v2703 = vsel %vm2620, %v2702, %v2701
    %v2704 = vsub.s32 4, %v2680
    %v2705 = vsel %vm2620, %v2704, %v2680
    %v2706 = vsel %vm2619, %v2514, %v2703
    %v2707 = vsel %vm2619, 0, %v2705
    %v2708 = vcosq.f32.pop %v2706
    %v2709 = vsinq.f32.pop %v2706
    %vm2710 = vweird.f32 %v2514
    %v2711 = vadd.s32 %v2707, 3
    %v2712 = vand.u32 %v2711, 3
    %vm2713 = vcmp.lt.s32.totalorder %v2712, 2
    %vm2714 = vcmp.eq.s32.totalorder %v2712, 0
    %v2715 = vxor.u32 %v2709, 2147483648
    %v2716 = vsel %vm2714, %v2708, %v2715
    %vm2717 = vcmp.eq.s32.totalorder %v2712, 2
    %v2718 = vxor.u32 %v2708, 2147483648
    %v2719 = vsel %vm2717, %v2718, %v2709
    %v2720 = vsel %vm2713, %v2716, %v2719
    %v2721 = vsel %vm2710, nan, %v2720
    %v2722 = vld [vmem:[#allocation16] sm:$0xff]
    %v2723 = vld [vmem:[#allocation16 + $0x8] sm:$0xff]
    %v2724 = vld [vmem:[#allocation16 + $0x10] sm:$0xff]
    %v2725 = vld [vmem:[#allocation16 + $0x18] sm:$0xff]
    %v2727 = vsel %vm212, %v2502, 0
    %2729 = vmatprep.subr.mxu0 0.0
    %2730 = vmatpush1.msra.mxu0 %v2722
    %2731 = vmatprep.subr.mxu0 0.0
    %2732 = vmatpush1.msra.mxu0 %v2723
    %2733 = vmatprep.subr.mxu0 0.0
    %2734 = vmatpush1.msra.mxu0 %v2724
    %2735 = vmatprep.subr.mxu0 0.0
    %2736 = vmatpush1.msra.mxu0 %v2725
    %2737 = vmatprep.subr.mxu0 0.0
    %2738 = vmatpush1.msra.mxu0 0.0
    %2739 = vmatprep.subr.mxu0 0.0
    %2740 = vmatpush1.msra.mxu0 0.0
    %2741 = vmatprep.subr.mxu0 0.0
    %2742 = vmatpush1.msra.mxu0 0.0
    %2743 = vmatprep.subr.mxu0 0.0
    %2744 = vmatpush1.msra.mxu0 0.0
    %2745 = vmatprep.subr.mxu0 0.0
    %2746 = vmatpush1.msra.mxu0 0.0
    %2747 = vmatprep.subr.mxu0 0.0
    %2748 = vmatpush1.msra.mxu0 0.0
    %2749 = vmatprep.subr.mxu0 0.0
    %2750 = vmatpush1.msra.mxu0 0.0
    %2751 = vmatprep.subr.mxu0 0.0
    %2752 = vmatpush1.msra.mxu0 0.0
    %2753 = vmatprep.subr.mxu0 0.0
    %2754 = vmatpush1.msra.mxu0 0.0
    %2755 = vmatprep.subr.mxu0 0.0
    %2756 = vmatpush1.msra.mxu0 0.0
    %2757 = vmatprep.subr.mxu0 0.0
    %2758 = vmatpush1.msra.mxu0 0.0
    %2759 = vmatprep.subr.mxu0 0.0
    %2760 = vmatpush1.msra.mxu0 0.0
    %2761 = vmatprep.subr.mxu0 0.0
    %2762 = vmatpush1.msra.mxu0 0.0
    %2763 = vmatprep.subr.mxu0 0.0
    %2764 = vmatpush1.msra.mxu0 0.0
    %2765 = vmatprep.subr.mxu0 0.0
    %2766 = vmatpush1.msra.mxu0 0.0
    %2767 = vmatprep.subr.mxu0 0.0
    %2768 = vmatpush1.msra.mxu0 0.0
    %2769 = vmatprep.subr.mxu0 0.0
    %2770 = vmatpush1.msra.mxu0 0.0
    %2771 = vmatprep.subr.mxu0 0.0
    %2772 = vmatpush1.msra.mxu0 0.0
    %2773 = vmatprep.subr.mxu0 0.0
    %2774 = vmatpush1.msra.mxu0 0.0
    %2775 = vmatprep.subr.mxu0 0.0
    %2776 = vmatpush1.msra.mxu0 0.0
    %2777 = vmatprep.subr.mxu0 0.0
    %2778 = vmatpush1.msra.mxu0 0.0
    %2779 = vmatprep.subr.mxu0 0.0
    %2780 = vmatpush1.msra.mxu0 0.0
    %2781 = vmatprep.subr.mxu0 0.0
    %2782 = vmatpush1.msra.mxu0 0.0
    %2783 = vmatprep.subr.mxu0 0.0
    %2784 = vmatpush1.msra.mxu0 0.0
    %2785 = vmatprep.subr.mxu0 0.0
    %2786 = vmatpush1.msra.mxu0 0.0
    %2787 = vmatprep.subr.mxu0 0.0
    %2788 = vmatpush1.msra.mxu0 0.0
    %2789 = vmatprep.subr.mxu0 0.0
    %2790 = vmatpush1.msra.mxu0 0.0
    %2791 = vmatprep.subr.mxu0 0.0
    %2792 = vmatpush1.msra.mxu0 0.0
    %2793 = vmatprep.mubr.f32.mxu0 0.0
    %2794 = vmatmul.mubr.f32.gmra.mrb[0].mxu0 %v2727
    %v2795 = vpop.f32.mrb[0].mxu0
    %v2796 = vadd.f32 0.0, %v2795
    %v2797 = vpop.f32.mrb[0].mxu0
    %2798 = vdwg.mxu0
    %2800 = vset.pattern.permute.xlu0 0
    %2801 = vperm.xlu0 %2800, %v2617
    %v2802 = vpop.permute.xlu0 %2801
    %v2804 = vmul.f32 %v2802, %v2502
    %2806 = vset.pattern.permute.xlu0 0
    %2807 = vperm.xlu0 %2806, %v2721
    %v2808 = vpop.permute.xlu0 %2807
    %v2810 = vmul.f32 %v2808, %v2796
    %v2811 = vadd.f32 %v2804, %v2810
    %s2812 = scalar_lea.vmem [#allocation16], 32
    %v2813 = vld [vmem:[%s2812] sm:$0xff]
    %v2814 = vld [vmem:[%s2812 + $0x8] sm:$0xff]
    %v2815 = vld [vmem:[%s2812 + $0x10] sm:$0xff]
    %v2816 = vld [vmem:[%s2812 + $0x18] sm:$0xff]
    %v2818 = vsel %vm212, %v2811, 0
    %2820 = vmatprep.subr.mxu0 0.0
    %2821 = vmatpush1.msra.mxu0 %v2813
    %2822 = vmatprep.subr.mxu0 0.0
    %2823 = vmatpush1.msra.mxu0 %v2814
    %2824 = vmatprep.subr.mxu0 0.0
    %2825 = vmatpush1.msra.mxu0 %v2815
    %2826 = vmatprep.subr.mxu0 0.0
    %2827 = vmatpush1.msra.mxu0 %v2816
    %2828 = vmatprep.subr.mxu0 0.0
    %2829 = vmatpush1.msra.mxu0 0.0
    %2830 = vmatprep.subr.mxu0 0.0
    %2831 = vmatpush1.msra.mxu0 0.0
    %2832 = vmatprep.subr.mxu0 0.0
    %2833 = vmatpush1.msra.mxu0 0.0
    %2834 = vmatprep.subr.mxu0 0.0
    %2835 = vmatpush1.msra.mxu0 0.0
    %2836 = vmatprep.subr.mxu0 0.0
    %2837 = vmatpush1.msra.mxu0 0.0
    %2838 = vmatprep.subr.mxu0 0.0
    %2839 = vmatpush1.msra.mxu0 0.0
    %2840 = vmatprep.subr.mxu0 0.0
    %2841 = vmatpush1.msra.mxu0 0.0
    %2842 = vmatprep.subr.mxu0 0.0
    %2843 = vmatpush1.msra.mxu0 0.0
    %2844 = vmatprep.subr.mxu0 0.0
    %2845 = vmatpush1.msra.mxu0 0.0
    %2846 = vmatprep.subr.mxu0 0.0
    %2847 = vmatpush1.msra.mxu0 0.0
    %2848 = vmatprep.subr.mxu0 0.0
    %2849 = vmatpush1.msra.mxu0 0.0
    %2850 = vmatprep.subr.mxu0 0.0
    %2851 = vmatpush1.msra.mxu0 0.0
    %2852 = vmatprep.subr.mxu0 0.0
    %2853 = vmatpush1.msra.mxu0 0.0
    %2854 = vmatprep.subr.mxu0 0.0
    %2855 = vmatpush1.msra.mxu0 0.0
    %2856 = vmatprep.subr.mxu0 0.0
    %2857 = vmatpush1.msra.mxu0 0.0
    %2858 = vmatprep.subr.mxu0 0.0
    %2859 = vmatpush1.msra.mxu0 0.0
    %2860 = vmatprep.subr.mxu0 0.0
    %2861 = vmatpush1.msra.mxu0 0.0
    %2862 = vmatprep.subr.mxu0 0.0
    %2863 = vmatpush1.msra.mxu0 0.0
    %2864 = vmatprep.subr.mxu0 0.0
    %2865 = vmatpush1.msra.mxu0 0.0
    %2866 = vmatprep.subr.mxu0 0.0
    %2867 = vmatpush1.msra.mxu0 0.0
    %2868 = vmatprep.subr.mxu0 0.0
    %2869 = vmatpush1.msra.mxu0 0.0
    %2870 = vmatprep.subr.mxu0 0.0
    %2871 = vmatpush1.msra.mxu0 0.0
    %2872 = vmatprep.subr.mxu0 0.0
    %2873 = vmatpush1.msra.mxu0 0.0
    %2874 = vmatprep.subr.mxu0 0.0
    %2875 = vmatpush1.msra.mxu0 0.0
    %2876 = vmatprep.subr.mxu0 0.0
    %2877 = vmatpush1.msra.mxu0 0.0
    %2878 = vmatprep.subr.mxu0 0.0
    %2879 = vmatpush1.msra.mxu0 0.0
    %2880 = vmatprep.subr.mxu0 0.0
    %2881 = vmatpush1.msra.mxu0 0.0
    %2882 = vmatprep.subr.mxu0 0.0
    %2883 = vmatpush1.msra.mxu0 0.0
    %2884 = vmatprep.mubr.f32.mxu0 0.0
    %2885 = vmatmul.mubr.f32.gmra.mrb[0].mxu0 %v2818
    %v2886 = vpop.f32.mrb[0].mxu0
    %v2887 = vadd.f32 0.0, %v2886
    %v2888 = vpop.f32.mrb[0].mxu0
    %2889 = vdwg.mxu0
    %2890 = vset.pattern.permute.xlu0 1
    %2891 = vperm.xlu0 %2890, %v2617
    %v2892 = vpop.permute.xlu0 %2891
    %v2894 = vmul.f32 %v2892, %v2811
    %2895 = vset.pattern.permute.xlu0 1
    %2896 = vperm.xlu0 %2895, %v2721
    %v2897 = vpop.permute.xlu0 %2896
    %v2899 = vmul.f32 %v2897, %v2887
    %v2900 = vadd.f32 %v2894, %v2899
    %s2901 = scalar_lea.vmem [#allocation16], 64
    %v2902 = vld [vmem:[%s2901] sm:$0xff]
    %v2903 = vld [vmem:[%s2901 + $0x8] sm:$0xff]
    %v2904 = vld [vmem:[%s2901 + $0x10] sm:$0xff]
    %v2905 = vld [vmem:[%s2901 + $0x18] sm:$0xff]
    %v2907 = vsel %vm212, %v2900, 0
    %2909 = vmatprep.subr.mxu0 0.0
    %2910 = vmatpush1.msra.mxu0 %v2902
    %2911 = vmatprep.subr.mxu0 0.0
    %2912 = vmatpush1.msra.mxu0 %v2903
    %2913 = vmatprep.subr.mxu0 0.0
    %2914 = vmatpush1.msra.mxu0 %v2904
    %2915 = vmatprep.subr.mxu0 0.0
    %2916 = vmatpush1.msra.mxu0 %v2905
    %2917 = vmatprep.subr.mxu0 0.0
    %2918 = vmatpush1.msra.mxu0 0.0
    %2919 = vmatprep.subr.mxu0 0.0
    %2920 = vmatpush1.msra.mxu0 0.0
    %2921 = vmatprep.subr.mxu0 0.0
    %2922 = vmatpush1.msra.mxu0 0.0
    %2923 = vmatprep.subr.mxu0 0.0
    %2924 = vmatpush1.msra.mxu0 0.0
    %2925 = vmatprep.subr.mxu0 0.0
    %2926 = vmatpush1.msra.mxu0 0.0
    %2927 = vmatprep.subr.mxu0 0.0
    %2928 = vmatpush1.msra.mxu0 0.0
    %2929 = vmatprep.subr.mxu0 0.0
    %2930 = vmatpush1.msra.mxu0 0.0
    %2931 = vmatprep.subr.mxu0 0.0
    %2932 = vmatpush1.msra.mxu0 0.0
    %2933 = vmatprep.subr.mxu0 0.0
    %2934 = vmatpush1.msra.mxu0 0.0
    %2935 = vmatprep.subr.mxu0 0.0
    %2936 = vmatpush1.msra.mxu0 0.0
    %2937 = vmatprep.subr.mxu0 0.0
    %2938 = vmatpush1.msra.mxu0 0.0
    %2939 = vmatprep.subr.mxu0 0.0
    %2940 = vmatpush1.msra.mxu0 0.0
    %2941 = vmatprep.subr.mxu0 0.0
    %2942 = vmatpush1.msra.mxu0 0.0
    %2943 = vmatprep.subr.mxu0 0.0
    %2944 = vmatpush1.msra.mxu0 0.0
    %2945 = vmatprep.subr.mxu0 0.0
    %2946 = vmatpush1.msra.mxu0 0.0
    %2947 = vmatprep.subr.mxu0 0.0
    %2948 = vmatpush1.msra.mxu0 0.0
    %2949 = vmatprep.subr.mxu0 0.0
    %2950 = vmatpush1.msra.mxu0 0.0
    %2951 = vmatprep.subr.mxu0 0.0
    %2952 = vmatpush1.msra.mxu0 0.0
    %2953 = vmatprep.subr.mxu0 0.0
    %2954 = vmatpush1.msra.mxu0 0.0
    %2955 = vmatprep.subr.mxu0 0.0
    %2956 = vmatpush1.msra.mxu0 0.0
    %2957 = vmatprep.subr.mxu0 0.0
    %2958 = vmatpush1.msra.mxu0 0.0
    %2959 = vmatprep.subr.mxu0 0.0
    %2960 = vmatpush1.msra.mxu0 0.0
    %2961 = vmatprep.subr.mxu0 0.0
    %2962 = vmatpush1.msra.mxu0 0.0
    %2963 = vmatprep.subr.mxu0 0.0
    %2964 = vmatpush1.msra.mxu0 0.0
    %2965 = vmatprep.subr.mxu0 0.0
    %2966 = vmatpush1.msra.mxu0 0.0
    %2967 = vmatprep.subr.mxu0 0.0
    %2968 = vmatpush1.msra.mxu0 0.0
    %2969 = vmatprep.subr.mxu0 0.0
    %2970 = vmatpush1.msra.mxu0 0.0
    %2971 = vmatprep.subr.mxu0 0.0
    %2972 = vmatpush1.msra.mxu0 0.0
    %2973 = vmatprep.mubr.f32.mxu0 0.0
    %2974 = vmatmul.mubr.f32.gmra.mrb[0].mxu0 %v2907
    %v2975 = vpop.f32.mrb[0].mxu0
    %v2976 = vadd.f32 0.0, %v2975
    %v2977 = vpop.f32.mrb[0].mxu0
    %2978 = vdwg.mxu0
    %2979 = vset.pattern.permute.xlu0 2
    %2980 = vperm.xlu0 %2979, %v2617
    %v2981 = vpop.permute.xlu0 %2980
    %v2983 = vmul.f32 %v2981, %v2900
    %2984 = vset.pattern.permute.xlu0 2
    %2985 = vperm.xlu0 %2984, %v2721
    %v2986 = vpop.permute.xlu0 %2985
    %v2988 = vmul.f32 %v2986, %v2976
    %v2989 = vadd.f32 %v2983, %v2988
    %s2990 = scalar_lea.vmem [#allocation16], 96
    %v2991 = vld [vmem:[%s2990] sm:$0xff]
    %v2992 = vld [vmem:[%s2990 + $0x8] sm:$0xff]
    %v2993 = vld [vmem:[%s2990 + $0x10] sm:$0xff]
    %v2994 = vld [vmem:[%s2990 + $0x18] sm:$0xff]
    %v2996 = vsel %vm212, %v2989, 0
    %2998 = vmatprep.subr.mxu0 0.0
    %2999 = vmatpush1.msra.mxu0 %v2991
    %3000 = vmatprep.subr.mxu0 0.0
    %3001 = vmatpush1.msra.mxu0 %v2992
    %3002 = vmatprep.subr.mxu0 0.0
    %3003 = vmatpush1.msra.mxu0 %v2993
    %3004 = vmatprep.subr.mxu0 0.0
    %3005 = vmatpush1.msra.mxu0 %v2994
    %3006 = vmatprep.subr.mxu0 0.0
    %3007 = vmatpush1.msra.mxu0 0.0
    %3008 = vmatprep.subr.mxu0 0.0
    %3009 = vmatpush1.msra.mxu0 0.0
    %3010 = vmatprep.subr.mxu0 0.0
    %3011 = vmatpush1.msra.mxu0 0.0
    %3012 = vmatprep.subr.mxu0 0.0
    %3013 = vmatpush1.msra.mxu0 0.0
    %3014 = vmatprep.subr.mxu0 0.0
    %3015 = vmatpush1.msra.mxu0 0.0
    %3016 = vmatprep.subr.mxu0 0.0
    %3017 = vmatpush1.msra.mxu0 0.0
    %3018 = vmatprep.subr.mxu0 0.0
    %3019 = vmatpush1.msra.mxu0 0.0
    %3020 = vmatprep.subr.mxu0 0.0
    %3021 = vmatpush1.msra.mxu0 0.0
    %3022 = vmatprep.subr.mxu0 0.0
    %3023 = vmatpush1.msra.mxu0 0.0
    %3024 = vmatprep.subr.mxu0 0.0
    %3025 = vmatpush1.msra.mxu0 0.0
    %3026 = vmatprep.subr.mxu0 0.0
    %3027 = vmatpush1.msra.mxu0 0.0
    %3028 = vmatprep.subr.mxu0 0.0
    %3029 = vmatpush1.msra.mxu0 0.0
    %3030 = vmatprep.subr.mxu0 0.0
    %3031 = vmatpush1.msra.mxu0 0.0
    %3032 = vmatprep.subr.mxu0 0.0
    %3033 = vmatpush1.msra.mxu0 0.0
    %3034 = vmatprep.subr.mxu0 0.0
    %3035 = vmatpush1.msra.mxu0 0.0
    %3036 = vmatprep.subr.mxu0 0.0
    %3037 = vmatpush1.msra.mxu0 0.0
    %3038 = vmatprep.subr.mxu0 0.0
    %3039 = vmatpush1.msra.mxu0 0.0
    %3040 = vmatprep.subr.mxu0 0.0
    %3041 = vmatpush1.msra.mxu0 0.0
    %3042 = vmatprep.subr.mxu0 0.0
    %3043 = vmatpush1.msra.mxu0 0.0
    %3044 = vmatprep.subr.mxu0 0.0
    %3045 = vmatpush1.msra.mxu0 0.0
    %3046 = vmatprep.subr.mxu0 0.0
    %3047 = vmatpush1.msra.mxu0 0.0
    %3048 = vmatprep.subr.mxu0 0.0
    %3049 = vmatpush1.msra.mxu0 0.0
    %3050 = vmatprep.subr.mxu0 0.0
    %3051 = vmatpush1.msra.mxu0 0.0
    %3052 = vmatprep.subr.mxu0 0.0
    %3053 = vmatpush1.msra.mxu0 0.0
    %3054 = vmatprep.subr.mxu0 0.0
    %3055 = vmatpush1.msra.mxu0 0.0
    %3056 = vmatprep.subr.mxu0 0.0
    %3057 = vmatpush1.msra.mxu0 0.0
    %3058 = vmatprep.subr.mxu0 0.0
    %3059 = vmatpush1.msra.mxu0 0.0
    %3060 = vmatprep.subr.mxu0 0.0
    %3061 = vmatpush1.msra.mxu0 0.0
    %3062 = vmatprep.mubr.f32.mxu0 0.0
    %3063 = vmatmul.mubr.f32.gmra.mrb[0].mxu0 %v2996
    %v3064 = vpop.f32.mrb[0].mxu0
    %v3065 = vadd.f32 0.0, %v3064
    %v3066 = vpop.f32.mrb[0].mxu0
    %3067 = vdwg.mxu0
    %3068 = vset.pattern.permute.xlu0 3
    %3069 = vperm.xlu0 %3068, %v2617
    %v3070 = vpop.permute.xlu0 %3069
    %v3072 = vmul.f32 %v3070, %v2989
    %3073 = vset.pattern.permute.xlu0 3
    %3074 = vperm.xlu0 %3073, %v2721
    %v3075 = vpop.permute.xlu0 %3074
    %v3077 = vmul.f32 %v3075, %v3065
    %v3078 = vadd.f32 %v3072, %v3077
    %v3079 = vld [vmem:[#allocation19] sm:$0xff]
    %v3080 = vld [vmem:[#allocation19 + $0x8] sm:$0xff]
    %v3081 = vld [vmem:[#allocation19 + $0x10] sm:$0xff]
    %v3082 = vld [vmem:[#allocation19 + $0x18] sm:$0xff]
    %v3083 = vld [vmem:[#allocation19 + $0x20] sm:$0xff]
    %v3084 = vld [vmem:[#allocation19 + $0x28] sm:$0xff]
    %v3085 = vld [vmem:[#allocation19 + $0x30] sm:$0xff]
    %v3086 = vld [vmem:[#allocation19 + $0x38] sm:$0xff]
    %v3088 = vsel %vm212, %v3078, 0
    %3090 = vmatprep.subr.mxu0 %v3080
    %3091 = vmatpush1.msra.mxu0 %v3079
    %3092 = vmatprep.subr.mxu0 %v3082
    %3093 = vmatpush1.msra.mxu0 %v3081
    %3094 = vmatprep.subr.mxu0 %v3084
    %3095 = vmatpush1.msra.mxu0 %v3083
    %3096 = vmatprep.subr.mxu0 %v3086
    %3097 = vmatpush1.msra.mxu0 %v3085
    %3098 = vmatprep.subr.mxu0 0.0
    %3099 = vmatpush1.msra.mxu0 0.0
    %3100 = vmatprep.subr.mxu0 0.0
    %3101 = vmatpush1.msra.mxu0 0.0
    %3102 = vmatprep.subr.mxu0 0.0
    %3103 = vmatpush1.msra.mxu0 0.0
    %3104 = vmatprep.subr.mxu0 0.0
    %3105 = vmatpush1.msra.mxu0 0.0
    %3106 = vmatprep.subr.mxu0 0.0
    %3107 = vmatpush1.msra.mxu0 0.0
    %3108 = vmatprep.subr.mxu0 0.0
    %3109 = vmatpush1.msra.mxu0 0.0
    %3110 = vmatprep.subr.mxu0 0.0
    %3111 = vmatpush1.msra.mxu0 0.0
    %3112 = vmatprep.subr.mxu0 0.0
    %3113 = vmatpush1.msra.mxu0 0.0
    %3114 = vmatprep.subr.mxu0 0.0
    %3115 = vmatpush1.msra.mxu0 0.0
    %3116 = vmatprep.subr.mxu0 0.0
    %3117 = vmatpush1.msra.mxu0 0.0
    %3118 = vmatprep.subr.mxu0 0.0
    %3119 = vmatpush1.msra.mxu0 0.0
    %3120 = vmatprep.subr.mxu0 0.0
    %3121 = vmatpush1.msra.mxu0 0.0
    %3122 = vmatprep.subr.mxu0 0.0
    %3123 = vmatpush1.msra.mxu0 0.0
    %3124 = vmatprep.subr.mxu0 0.0
    %3125 = vmatpush1.msra.mxu0 0.0
    %3126 = vmatprep.subr.mxu0 0.0
    %3127 = vmatpush1.msra.mxu0 0.0
    %3128 = vmatprep.subr.mxu0 0.0
    %3129 = vmatpush1.msra.mxu0 0.0
    %3130 = vmatprep.subr.mxu0 0.0
    %3131 = vmatpush1.msra.mxu0 0.0
    %3132 = vmatprep.subr.mxu0 0.0
    %3133 = vmatpush1.msra.mxu0 0.0
    %3134 = vmatprep.subr.mxu0 0.0
    %3135 = vmatpush1.msra.mxu0 0.0
    %3136 = vmatprep.subr.mxu0 0.0
    %3137 = vmatpush1.msra.mxu0 0.0
    %3138 = vmatprep.subr.mxu0 0.0
    %3139 = vmatpush1.msra.mxu0 0.0
    %3140 = vmatprep.subr.mxu0 0.0
    %3141 = vmatpush1.msra.mxu0 0.0
    %3142 = vmatprep.subr.mxu0 0.0
    %3143 = vmatpush1.msra.mxu0 0.0
    %3144 = vmatprep.subr.mxu0 0.0
    %3145 = vmatpush1.msra.mxu0 0.0
    %3146 = vmatprep.subr.mxu0 0.0
    %3147 = vmatpush1.msra.mxu0 0.0
    %3148 = vmatprep.subr.mxu0 0.0
    %3149 = vmatpush1.msra.mxu0 0.0
    %3150 = vmatprep.subr.mxu0 0.0
    %3151 = vmatpush1.msra.mxu0 0.0
    %3152 = vmatprep.subr.mxu0 0.0
    %3153 = vmatpush1.msra.mxu0 0.0
    %3154 = vmatprep.mubr.f32.mxu0 0.0
    %3155 = vmatmul.mubr.f32.gmra.mrb[0].mxu0 %v3088
    %v3156 = vpop.f32.mrb[0].mxu0
    %v3157 = vadd.f32 0.0, %v3156
    %v3158 = vpop.f32.mrb[0].mxu0
    %v3159 = vadd.f32 0.0, %v3158
    %3160 = vdwg.mxu0
    %3161 = vrot.lane.b32.xlu0 %v3078, 32
    %v3162 = vpop.permute.xlu0 %3161
    %3164 = vrot.lane.b32.xlu0 %v3078, 64
    %v3165 = vpop.permute.xlu0 %3164
    %3167 = vrot.lane.b32.xlu0 %v3078, 96
    %v3168 = vpop.permute.xlu0 %3167
    %v3170 = vsel %vm212, %v3078, %v3162
    %v3171 = vsel %vm911, %v3170, %v3165
    %v3172 = vsel %vm915, %v3171, %v3168
    %v3173 = vmul.f32 %v3172, %v3157
    %v3174 = vmul.f32 %v3172, %v3159
    %v3175 = vld [vmem:[#allocation20] sm:$0xff]
    %v3176 = vld [vmem:[#allocation20 + $0x8] sm:$0xff]
    %v3177 = vld [vmem:[#allocation20 + $0x10] sm:$0xff]
    %v3178 = vld [vmem:[#allocation20 + $0x18] sm:$0xff]
    %v3179 = vld [vmem:[#allocation20 + $0x20] sm:$0xff]
    %v3180 = vld [vmem:[#allocation20 + $0x28] sm:$0xff]
    %v3181 = vld [vmem:[#allocation20 + $0x30] sm:$0xff]
    %v3182 = vld [vmem:[#allocation20 + $0x38] sm:$0xff]
    %v3183 = vld [vmem:[#allocation20 + $0x40] sm:$0xff]
    %v3184 = vld [vmem:[#allocation20 + $0x48] sm:$0xff]
    %v3185 = vld [vmem:[#allocation20 + $0x50] sm:$0xff]
    %v3186 = vld [vmem:[#allocation20 + $0x58] sm:$0xff]
    %v3187 = vld [vmem:[#allocation20 + $0x60] sm:$0xff]
    %v3188 = vld [vmem:[#allocation20 + $0x68] sm:$0xff]
    %v3189 = vld [vmem:[#allocation20 + $0x70] sm:$0xff]
    %v3190 = vld [vmem:[#allocation20 + $0x78] sm:$0xff]
    %v3191 = vld [vmem:[#allocation20 + $0x80] sm:$0xff]
    %v3192 = vld [vmem:[#allocation20 + $0x88] sm:$0xff]
    %v3193 = vld [vmem:[#allocation20 + $0x90] sm:$0xff]
    %v3194 = vld [vmem:[#allocation20 + $0x98] sm:$0xff]
    %v3195 = vld [vmem:[#allocation20 + $0xa0] sm:$0xff]
    %v3196 = vld [vmem:[#allocation20 + $0xa8] sm:$0xff]
    %v3197 = vld [vmem:[#allocation20 + $0xb0] sm:$0xff]
    %v3198 = vld [vmem:[#allocation20 + $0xb8] sm:$0xff]
    %v3199 = vld [vmem:[#allocation20 + $0xc0] sm:$0xff]
    %v3200 = vld [vmem:[#allocation20 + $0xc8] sm:$0xff]
    %v3201 = vld [vmem:[#allocation20 + $0xd0] sm:$0xff]
    %v3202 = vld [vmem:[#allocation20 + $0xd8] sm:$0xff]
    %v3203 = vld [vmem:[#allocation20 + $0xe0] sm:$0xff]
    %v3204 = vld [vmem:[#allocation20 + $0xe8] sm:$0xff]
    %v3205 = vld [vmem:[#allocation20 + $0xf0] sm:$0xff]
    %v3206 = vld [vmem:[#allocation20 + $0xf8] sm:$0xff]
    %3207 = vmatprep.subr.mxu0 0.0
    %3208 = vmatpush1.msra.mxu0 %v3175
    %3209 = vmatprep.subr.mxu0 0.0
    %3210 = vmatpush1.msra.mxu0 %v3176
    %3211 = vmatprep.subr.mxu0 0.0
    %3212 = vmatpush1.msra.mxu0 %v3177
    %3213 = vmatprep.subr.mxu0 0.0
    %3214 = vmatpush1.msra.mxu0 %v3178
    %3215 = vmatprep.subr.mxu0 0.0
    %3216 = vmatpush1.msra.mxu0 %v3179
    %3217 = vmatprep.subr.mxu0 0.0
    %3218 = vmatpush1.msra.mxu0 %v3180
    %3219 = vmatprep.subr.mxu0 0.0
    %3220 = vmatpush1.msra.mxu0 %v3181
    %3221 = vmatprep.subr.mxu0 0.0
    %3222 = vmatpush1.msra.mxu0 %v3182
    %3223 = vmatprep.subr.mxu0 0.0
    %3224 = vmatpush1.msra.mxu0 %v3183
    %3225 = vmatprep.subr.mxu0 0.0
    %3226 = vmatpush1.msra.mxu0 %v3184
    %3227 = vmatprep.subr.mxu0 0.0
    %3228 = vmatpush1.msra.mxu0 %v3185
    %3229 = vmatprep.subr.mxu0 0.0
    %3230 = vmatpush1.msra.mxu0 %v3186
    %3231 = vmatprep.subr.mxu0 0.0
    %3232 = vmatpush1.msra.mxu0 %v3187
    %3233 = vmatprep.subr.mxu0 0.0
    %3234 = vmatpush1.msra.mxu0 %v3188
    %3235 = vmatprep.subr.mxu0 0.0
    %3236 = vmatpush1.msra.mxu0 %v3189
    %3237 = vmatprep.subr.mxu0 0.0
    %3238 = vmatpush1.msra.mxu0 %v3190
    %3239 = vmatprep.subr.mxu0 0.0
    %3240 = vmatpush1.msra.mxu0 %v3191
    %3241 = vmatprep.subr.mxu0 0.0
    %3242 = vmatpush1.msra.mxu0 %v3192
    %3243 = vmatprep.subr.mxu0 0.0
    %3244 = vmatpush1.msra.mxu0 %v3193
    %3245 = vmatprep.subr.mxu0 0.0
    %3246 = vmatpush1.msra.mxu0 %v3194
    %3247 = vmatprep.subr.mxu0 0.0
    %3248 = vmatpush1.msra.mxu0 %v3195
    %3249 = vmatprep.subr.mxu0 0.0
    %3250 = vmatpush1.msra.mxu0 %v3196
    %3251 = vmatprep.subr.mxu0 0.0
    %3252 = vmatpush1.msra.mxu0 %v3197
    %3253 = vmatprep.subr.mxu0 0.0
    %3254 = vmatpush1.msra.mxu0 %v3198
    %3255 = vmatprep.subr.mxu0 0.0
    %3256 = vmatpush1.msra.mxu0 %v3199
    %3257 = vmatprep.subr.mxu0 0.0
    %3258 = vmatpush1.msra.mxu0 %v3200
    %3259 = vmatprep.subr.mxu0 0.0
    %3260 = vmatpush1.msra.mxu0 %v3201
    %3261 = vmatprep.subr.mxu0 0.0
    %3262 = vmatpush1.msra.mxu0 %v3202
    %3263 = vmatprep.subr.mxu0 0.0
    %3264 = vmatpush1.msra.mxu0 %v3203
    %3265 = vmatprep.subr.mxu0 0.0
    %3266 = vmatpush1.msra.mxu0 %v3204
    %3267 = vmatprep.subr.mxu0 0.0
    %3268 = vmatpush1.msra.mxu0 %v3205
    %3269 = vmatprep.subr.mxu0 0.0
    %3270 = vmatpush1.msra.mxu0 %v3206
    %3271 = vmatprep.mubr.f32.mxu0 %v3174
    %3272 = vmatmul.mubr.f32.gmra.mrb[0].mxu0 %v3173
    %v3273 = vpop.f32.mrb[0].mxu0
    %v3274 = vadd.f32 0.0, %v3273
    %v3275 = vpop.f32.mrb[0].mxu0
    %3276 = vdwg.mxu0
    %3277 = vst [vmem:[#allocation22] sm:$0xff] %v3274
    // Predicated region
    $region106: #{tpu_custom_call.1} parent=1 // pred_check
      _
    $region107: #{tpu_custom_call.1} parent=1 // pred_check_branch
      %3279 = sbr.rel (0) target = $region109
    $region108: #{tpu_custom_call.1} parent=1 // pred_region
      %s3281 = ssub.s32 128, 128
      %3282 = vsyncadd [#allocation4], %s3281
      %s3284 = sshll.u32 [#allocation22], 4
      %s3285 = int_to_ptr.vmem [resolvable:$true] %s3284
      %3287 = dma.vmem_to_hbm [thread:$0]  %s3285, 128, %s14, [#allocation4]
    $region109: #{tpu_custom_call.1} parent=1 // pred_fallthru
      _
    // Predicated region
    $region110: #{tpu_custom_call.1} parent=1 // pred_check
      _
    $region111: #{tpu_custom_call.1} parent=1 // pred_check_branch
      %3289 = sbr.rel (0) target = $region113
    $region112: #{tpu_custom_call.1} parent=1 // pred_region
      %3290 = dma.done [#allocation4], 128
    $region113: #{tpu_custom_call.1} parent=1 // pred_fallthru
      _
    %3291 = vsyncpa [#allocation3], 1
    %3292 = vsyncpa [#allocation6], 1
    %3293 = vsyncpa [#allocation9], 1
    %3294 = vsyncpa [#allocation12], 1
    %3295 = vsyncpa [#allocation15], 1
    %3296 = vsyncpa [#allocation18], 1
    %3297 = vsyncpa [#allocation21], 1
    %3298 = vsyncpa [#allocation4], 1

</llo_original>
